<compile_context>
chip_gen: v7x
topology: tpu7x:2x2x1
jax: 0.10.0
libtpu: 0.0.40
codegen_flags: <defaults>
</compile_context>

<pallas_src>
import functools
import math

import numpy as np

import jax
import jax.numpy as jnp
from jax.experimental import pallas as pl
from jax.experimental.pallas import tpu as pltpu


def _round_up(x, m):
    return ((x + m - 1) // m) * m


def _p6p7_kernel(xph_ref, mask_ref, w6_ref, b6_ref, w7_ref, b7_ref,
                 p6_ref, p7_ref, p6s_ref, p6ph_ref, *,
                 Wp2, Mp6, W6p, A, Mp7, Lh, Ls, C, MBLK):
    """One batch element: P6 = conv3x3/s2(x), P7 = conv3x3/s2(P6), fused.

    xph_ref : (1, 4, L1, Cin)  bf16 flattened stride-2 phases of padded input
    mask_ref: (Mp6, 1) f32     1.0 on real P6 columns, 0.0 on junk columns
    w*_ref  : (3, 3, K, C) bf16 (HWIO),  b*_ref: (1, C) f32
    p6_ref  : (1, Mp6, C)  P6 rows (row i*Wp2 + j; cols j>=Wo6 are junk)
    p7_ref  : (1, Mp7, C)  P7 rows (row u*W6p + v; cols v>=Wo7 are junk)
    p6s_ref : (Ls, C) f32  staged P6 aliased as the flat padded-P6 for P7
    p6ph_ref: (2, Lh, C) bf16 even/odd-parity deinterleave of p6s
    """
    # Zero the halo (top/bottom padding) regions of the staged P6 every step:
    # cheap, and keeps the "parallel" batch axis safe on multi-core parts.
    p6s_ref[pl.ds(0, A), :] = jnp.zeros((A, C), jnp.float32)
    tail = Ls - A - Mp6
    p6s_ref[pl.ds(A + Mp6, tail), :] = jnp.zeros((tail, C), jnp.float32)

    # ---------------- P6: 3x3 / stride-2 conv over host-built phases --------
    # Flat-phase layout: every tap is a contiguous (mb, Cin) row slice -> MXU.
    for m0 in range(0, Mp6, MBLK):
        mb = min(MBLK, Mp6 - m0)
        acc = None                                     # loop-carried, in vregs
        for kh in range(3):
            for kw in range(3):
                ph = 2 * (kh % 2) + (kw % 2)           # stride-2 phase
                off = (kh // 2) * Wp2 + (kw // 2) + m0  # contiguous row offset
                t = jnp.dot(xph_ref[0, ph, pl.ds(off, mb), :], w6_ref[kh, kw],
                            preferred_element_type=jnp.float32)
                acc = t if acc is None else acc + t
        p6c = acc + b6_ref[...]                        # bias in the epilogue
        p6_ref[0, pl.ds(m0, mb), :] = p6c.astype(p6_ref.dtype)
        # stage for P7: masked junk columns become the zero W-padding of P6
        p6s_ref[pl.ds(A + m0, mb), :] = p6c * mask_ref[pl.ds(m0, mb), :]

    # ------- split staged P6 rows by parity (the only strided accesses) -----
    p6ph_ref[0] = p6s_ref[pl.ds(0, Lh, stride=2), :].astype(p6ph_ref.dtype)
    p6ph_ref[1] = p6s_ref[pl.ds(1, Lh, stride=2), :].astype(p6ph_ref.dtype)

    # ---------------- P7: 3x3 / stride-2 conv on the resident P6 ------------
    acc = None
    for kh in range(3):
        for kw in range(3):
            off = kh * W6p + kw + (A - W6p - 1)        # flat padded-P6 offset
            par = off % 2
            t = jnp.dot(p6ph_ref[par, pl.ds(off // 2, Mp7), :], w7_ref[kh, kw],
                        preferred_element_type=jnp.float32)
            acc = t if acc is None else acc + t
    p7_ref[0] = (acc + b7_ref[...]).astype(p7_ref.dtype)


def last_level_p6_p7_pallas(x_nhwc, w6_hwio, b6, w7_hwio, b7):
    """Fused P6/P7 (two 3x3 stride-2 pad-1 convs). NHWC in, NHWC out."""
    N, H, W, Cin = x_nhwc.shape
    Cout = w6_hwio.shape[-1]
    # output sizing identical to nn.Conv2d(3, stride=2, padding=1)
    Ho6, Wo6 = (H + 1) // 2, (W + 1) // 2
    Ho7, Wo7 = (Ho6 + 1) // 2, (Wo6 + 1) // 2

    Cin_p = _round_up(Cin, 128)
    Cout_p = _round_up(Cout, 128)

    # P6 flat-phase geometry.  Wp2 >= Wo6 + 2 guarantees the aliased left-pad
    # column of the staged P6 lands on a (masked) junk column; multiple of 8
    # keeps the {0, Wp2} tap offsets sublane-aligned.
    Hp2 = Ho6 + 1
    Wp2 = _round_up(Wo6 + 2, 8)
    Mp6 = Ho6 * Wp2
    L1 = _round_up(Hp2 * Wp2 + 1, 8)

    # Staged-P6 geometry: padded P6 flattened row-major with row pitch W6p=Wp2,
    # real data starting at the 8-aligned offset A (=> p6pad[r,c] = p6s[r*W6p+c+A-W6p-1]).
    W6p = Wp2
    A = W6p + 8
    Mp7 = Ho7 * W6p                      # P7 rows incl. junk columns
    Lh = _round_up((Ho7 + 1) * W6p + 4, 8)
    Ls = 2 * Lh

    # ---- host-side layout plumbing (pad + space-to-depth + flatten) --------
    xb = x_nhwc.astype(jnp.bfloat16)
    xp = jnp.pad(xb, ((0, 0), (1, 2 * Hp2 - H - 1), (1, 2 * Wp2 - W - 1),
                      (0, Cin_p - Cin)))
    phases = (xp.reshape(N, Hp2, 2, Wp2, 2, Cin_p)
                .transpose(0, 2, 4, 1, 3, 5)           # (N, a, b, u, v, C)
                .reshape(N, 4, Hp2 * Wp2, Cin_p))
    phases = jnp.pad(phases, ((0, 0), (0, 0), (0, L1 - Hp2 * Wp2), (0, 0)))

    col = np.arange(Mp6, dtype=np.int32) % Wp2
    mask6 = jnp.asarray((col < Wo6).astype(np.float32).reshape(Mp6, 1))

    w6p = jnp.pad(w6_hwio.astype(jnp.bfloat16),
                  ((0, 0), (0, 0), (0, Cin_p - Cin), (0, Cout_p - Cout)))
    w7p = jnp.pad(w7_hwio.astype(jnp.bfloat16),
                  ((0, 0), (0, 0), (0, Cout_p - Cout), (0, Cout_p - Cout)))
    b6p = jnp.pad(b6.astype(jnp.float32), (0, Cout_p - Cout)).reshape(1, Cout_p)
    b7p = jnp.pad(b7.astype(jnp.float32), (0, Cout_p - Cout)).reshape(1, Cout_p)

    kernel = functools.partial(
        _p6p7_kernel, Wp2=Wp2, Mp6=Mp6, W6p=W6p, A=A, Mp7=Mp7, Lh=Lh, Ls=Ls,
        C=Cout_p, MBLK=128)

    out_dtype = x_nhwc.dtype
    p6f, p7f = pl.pallas_call(
        kernel,
        out_shape=(jax.ShapeDtypeStruct((N, Mp6, Cout_p), out_dtype),
                   jax.ShapeDtypeStruct((N, Mp7, Cout_p), out_dtype)),
        grid=(N,),
        in_specs=[
            pl.BlockSpec((1, 4, L1, Cin_p), lambda n: (n, 0, 0, 0)),
            pl.BlockSpec((Mp6, 1), lambda n: (0, 0)),
            pl.BlockSpec((3, 3, Cin_p, Cout_p), lambda n: (0, 0, 0, 0)),
            pl.BlockSpec((1, Cout_p), lambda n: (0, 0)),
            pl.BlockSpec((3, 3, Cout_p, Cout_p), lambda n: (0, 0, 0, 0)),
            pl.BlockSpec((1, Cout_p), lambda n: (0, 0)),
        ],
        out_specs=[
            pl.BlockSpec((1, Mp6, Cout_p), lambda n: (n, 0, 0)),
            pl.BlockSpec((1, Mp7, Cout_p), lambda n: (n, 0, 0)),
        ],
        scratch_shapes=[pltpu.VMEM((Ls, Cout_p), jnp.float32),
                        pltpu.VMEM((2, Lh, Cout_p), jnp.bfloat16)],
        compiler_params=pltpu.CompilerParams(
            dimension_semantics=("parallel",),
            vmem_limit_bytes=48 * 1024 * 1024),
    )(phases, mask6, w6p, b6p, w7p, b7p)

    # drop junk columns / padded channels (fuses with surrounding layout ops)
    p6 = p6f.reshape(N, Ho6, Wp2, Cout_p)[:, :, :Wo6, :Cout]
    p7 = p7f.reshape(N, Ho7, W6p, Cout_p)[:, :, :Wo7, :Cout]
    return p6, p7


_INIT_METHODS = ['random_init', 'kaiming_init', 'xavier_init', 'normal_init']


class LastLevelP6P7:
    """JAX/Pallas port of models/fpn.py::LastLevelP6_P7 (forward semantics)."""

    def __init__(self, in_channels, out_channels, init_method=None, key=None):
        assert init_method is not None, "init_method needs to be set."
        assert init_method in _INIT_METHODS, "init_method is wrong."
        key = jax.random.PRNGKey(0) if key is None else key
        k = jax.random.split(key, 4)

        def _conv_params(kw_key, kb_key, cin, cout):
            fan_in = cin * 9
            if init_method == 'kaiming_init':          # kaiming (a=0, relu)
                std = math.sqrt(2.0 / fan_in)
                w = std * jax.random.normal(kw_key, (3, 3, cin, cout), jnp.float32)
                b = jnp.zeros((cout,), jnp.float32)
            elif init_method == 'xavier_init':         # xavier uniform, bias=0
                bound = math.sqrt(6.0 / (fan_in + cout * 9))
                w = jax.random.uniform(kw_key, (3, 3, cin, cout), jnp.float32, -bound, bound)
                b = jnp.zeros((cout,), jnp.float32)
            else:                                      # PyTorch default init
                bound = 1.0 / math.sqrt(fan_in)
                w = jax.random.uniform(kw_key, (3, 3, cin, cout), jnp.float32, -bound, bound)
                b = jax.random.uniform(kb_key, (cout,), jnp.float32, -bound, bound)
            # weights stored bf16 (MXU-native); bias stays f32 (f32 epilogue)
            return w.astype(jnp.bfloat16), b

        self.w6, self.b6 = _conv_params(k[0], k[1], in_channels, out_channels)
        self.w7, self.b7 = _conv_params(k[2], k[3], out_channels, out_channels)
        self.use_p5 = in_channels == out_channels

    def __call__(self, c5_nchw, p5_nchw):
        x = p5_nchw if self.use_p5 else c5_nchw
        x_nhwc = jnp.transpose(x, (0, 2, 3, 1))         # fuses into the phase copy
        p6, p7 = last_level_p6_p7_pallas(x_nhwc, self.w6, self.b6,
                                         self.w7, self.b7)
        # back to NCHW to match the PyTorch module's output convention
        return [jnp.transpose(p6, (0, 3, 1, 2)), jnp.transpose(p7, (0, 3, 1, 2))]


def _reference_conv_nchw(x_nchw, w_hwio_f32, bias):
    w_oihw = jnp.transpose(w_hwio_f32, (3, 2, 0, 1))
    y = jax.lax.conv_general_dilated(
        x_nchw, w_oihw, window_strides=(2, 2), padding=((1, 1), (1, 1)),
        dimension_numbers=('NCHW', 'OIHW', 'NCHW'))
    return y + bias[None, :, None, None]


if __name__ == "__main__":
    key = jax.random.PRNGKey(0)
    k_c5, k_p5, k_odd, k_mod = jax.random.split(key, 4)

    N, Cin, Cout, H, W = 2, 4, 8, 16, 16
    c5 = jax.random.normal(k_c5, (N, Cin, H, W), jnp.float32)
    p5 = jax.random.normal(k_p5, (N, Cout, H, W), jnp.float32)  # unused (use_p5=False)

    mod = LastLevelP6P7(Cin, Cout, init_method='random_init', key=k_mod)
    fwd = jax.jit(lambda a, b: mod(a, b))

    p6, p7 = fwd(c5, p5)
    p6 = jax.block_until_ready(p6)
    p7 = jax.block_until_ready(p7)
    assert p6.shape == (N, Cout, H // 2, W // 2)
    assert p7.shape == (N, Cout, H // 4, W // 4)

    # cross-check against XLA's conv (same bf16 quantization, f32 accumulation)
    w6f = mod.w6.astype(jnp.float32)
    w7f = mod.w7.astype(jnp.float32)
    c5q = c5.astype(jnp.bfloat16).astype(jnp.float32)
    ref_p6 = _reference_conv_nchw(c5q, w6f, mod.b6)
    ref_p7 = _reference_conv_nchw(ref_p6.astype(jnp.bfloat16).astype(jnp.float32),
                                  w7f, mod.b7)
    assert jnp.max(jnp.abs(p6 - ref_p6)) < 1e-2
    assert jnp.max(jnp.abs(p7 - ref_p7)) < 1e-2

    # odd spatial size (same output sizing as PyTorch Conv2d(3, stride=2, pad=1))
    c5o = jax.random.normal(k_odd, (1, Cin, 15, 15), jnp.float32)
    p5o = jnp.zeros((1, Cout, 15, 15), jnp.float32)
    p6o, p7o = fwd(c5o, p5o)
    p6o = jax.block_until_ready(p6o)
    p7o = jax.block_until_ready(p7o)
    assert p6o.shape == (1, Cout, 8, 8)
    assert p7o.shape == (1, Cout, 4, 4)
    ref_p6o = _reference_conv_nchw(c5o.astype(jnp.bfloat16).astype(jnp.float32),
                                   w6f, mod.b6)
    assert jnp.max(jnp.abs(p6o - ref_p6o)) < 1e-2

    print("KERNEL_OK")
</pallas_src>

<mosaic_0001>
module attributes {stable_mosaic.version = 11 : i64} {
  func.func @_p6p7_kernel(%arg0: i32, %arg1: memref<1x4x152x128xbf16, #tpu.memory_space<vmem>>, %arg2: memref<128x1xf32, #tpu.memory_space<vmem>>, %arg3: memref<3x3x128x128xbf16, #tpu.memory_space<vmem>>, %arg4: memref<1x128xf32, #tpu.memory_space<vmem>>, %arg5: memref<3x3x128x128xbf16, #tpu.memory_space<vmem>>, %arg6: memref<1x128xf32, #tpu.memory_space<vmem>>, %arg7: memref<1x128x128xf32, #tpu.memory_space<vmem>>, %arg8: memref<1x64x128xf32, #tpu.memory_space<vmem>>, %arg9: memref<176x128xf32, #tpu.memory_space<vmem>>, %arg10: memref<2x88x128xbf16, #tpu.memory_space<vmem>>) attributes {dimension_semantics = [#tpu.dimension_semantics<parallel>], iteration_bounds = array<i64: 2>, scalar_prefetch = 0 : i64, scratch_operands = 2 : i64, tpu.core_type = #tpu.core_type<tc>, window_params = [{transform_indices = @transform_0, window_bounds = array<i64: 1, 4, 152, 128>}, {pipeline_mode = #tpu.pipeline_mode<synchronous>, transform_indices = @transform_1, window_bounds = array<i64: 128, 1>}, {pipeline_mode = #tpu.pipeline_mode<synchronous>, transform_indices = @transform_2, window_bounds = array<i64: 3, 3, 128, 128>}, {pipeline_mode = #tpu.pipeline_mode<synchronous>, transform_indices = @transform_3, window_bounds = array<i64: 1, 128>}, {pipeline_mode = #tpu.pipeline_mode<synchronous>, transform_indices = @transform_4, window_bounds = array<i64: 3, 3, 128, 128>}, {pipeline_mode = #tpu.pipeline_mode<synchronous>, transform_indices = @transform_5, window_bounds = array<i64: 1, 128>}, {transform_indices = @transform_6, window_bounds = array<i64: 1, 128, 128>}, {transform_indices = @transform_7, window_bounds = array<i64: 1, 64, 128>}]} {
    %cst = arith.constant 0.000000e+00 : f32
    %0 = vector.broadcast %cst : f32 to vector<24x128xf32>
    %c0 = arith.constant 0 : index
    %c0_0 = arith.constant 0 : index
    %1 = vector.load %arg9[%c0, %c0_0] : memref<176x128xf32, #tpu.memory_space<vmem>>, vector<24x128xf32>
    tpu.vector_store %arg9[%c0, %c0_0], %0 {strides = array<i32>} : memref<176x128xf32, #tpu.memory_space<vmem>>, vector<24x128xf32>,
    %cst_1 = arith.constant 0.000000e+00 : f32
    %2 = vector.broadcast %cst_1 : f32 to vector<24x128xf32>
    %c152 = arith.constant 152 : index
    %c0_2 = arith.constant 0 : index
    %3 = vector.load %arg9[%c152, %c0_2] : memref<176x128xf32, #tpu.memory_space<vmem>>, vector<24x128xf32>
    tpu.vector_store %arg9[%c152, %c0_2], %2 {strides = array<i32>} : memref<176x128xf32, #tpu.memory_space<vmem>>, vector<24x128xf32>,
    %c0_3 = arith.constant 0 : index
    %c0_4 = arith.constant 0 : index
    %c0_5 = arith.constant 0 : index
    %c0_6 = arith.constant 0 : index
    %4 = vector.load %arg1[%c0_3, %c0_4, %c0_5, %c0_6] : memref<1x4x152x128xbf16, #tpu.memory_space<vmem>>, vector<1x1x128x128xbf16>
    %5 = vector.shape_cast %4 : vector<1x1x128x128xbf16> to vector<128x128xbf16>
    %c0_7 = arith.constant 0 : index
    %c0_8 = arith.constant 0 : index
    %c0_9 = arith.constant 0 : index
    %c0_10 = arith.constant 0 : index
    %6 = vector.load %arg3[%c0_7, %c0_8, %c0_9, %c0_10] : memref<3x3x128x128xbf16, #tpu.memory_space<vmem>>, vector<1x1x128x128xbf16>
    %7 = vector.shape_cast %6 : vector<1x1x128x128xbf16> to vector<128x128xbf16>
    %cst_11 = arith.constant dense<0.000000e+00> : vector<128x128xf32>
    %8 = tpu.matmul %5, %7, %cst_11 {dimension_numbers = #tpu.dot_dimension_numbers<[1], [0], [0], [1], [0, 0, 1, 1], [], []>} : vector<128x128xbf16>, vector<128x128xbf16>, vector<128x128xf32> -> vector<128x128xf32>
    %c0_12 = arith.constant 0 : index
    %c1 = arith.constant 1 : index
    %c0_13 = arith.constant 0 : index
    %c0_14 = arith.constant 0 : index
    %9 = vector.load %arg1[%c0_12, %c1, %c0_13, %c0_14] : memref<1x4x152x128xbf16, #tpu.memory_space<vmem>>, vector<1x1x128x128xbf16>
    %10 = vector.shape_cast %9 : vector<1x1x128x128xbf16> to vector<128x128xbf16>
    %c0_15 = arith.constant 0 : index
    %c1_16 = arith.constant 1 : index
    %c0_17 = arith.constant 0 : index
    %c0_18 = arith.constant 0 : index
    %11 = vector.load %arg3[%c0_15, %c1_16, %c0_17, %c0_18] : memref<3x3x128x128xbf16, #tpu.memory_space<vmem>>, vector<1x1x128x128xbf16>
    %12 = vector.shape_cast %11 : vector<1x1x128x128xbf16> to vector<128x128xbf16>
    %cst_19 = arith.constant dense<0.000000e+00> : vector<128x128xf32>
    %13 = tpu.matmul %10, %12, %cst_19 {dimension_numbers = #tpu.dot_dimension_numbers<[1], [0], [0], [1], [0, 0, 1, 1], [], []>} : vector<128x128xbf16>, vector<128x128xbf16>, vector<128x128xf32> -> vector<128x128xf32>
    %14 = arith.addf %8, %13 : vector<128x128xf32>
    %c0_20 = arith.constant 0 : index
    %c0_21 = arith.constant 0 : index
    %c1_22 = arith.constant 1 : index
    %c0_23 = arith.constant 0 : index
    %15 = vector.load %arg1[%c0_20, %c0_21, %c1_22, %c0_23] : memref<1x4x152x128xbf16, #tpu.memory_space<vmem>>, vector<1x1x128x128xbf16>
    %16 = vector.shape_cast %15 : vector<1x1x128x128xbf16> to vector<128x128xbf16>
    %c0_24 = arith.constant 0 : index
    %c2 = arith.constant 2 : index
    %c0_25 = arith.constant 0 : index
    %c0_26 = arith.constant 0 : index
    %17 = vector.load %arg3[%c0_24, %c2, %c0_25, %c0_26] : memref<3x3x128x128xbf16, #tpu.memory_space<vmem>>, vector<1x1x128x128xbf16>
    %18 = vector.shape_cast %17 : vector<1x1x128x128xbf16> to vector<128x128xbf16>
    %cst_27 = arith.constant dense<0.000000e+00> : vector<128x128xf32>
    %19 = tpu.matmul %16, %18, %cst_27 {dimension_numbers = #tpu.dot_dimension_numbers<[1], [0], [0], [1], [0, 0, 1, 1], [], []>} : vector<128x128xbf16>, vector<128x128xbf16>, vector<128x128xf32> -> vector<128x128xf32>
    %20 = arith.addf %14, %19 : vector<128x128xf32>
    %c0_28 = arith.constant 0 : index
    %c2_29 = arith.constant 2 : index
    %c0_30 = arith.constant 0 : index
    %c0_31 = arith.constant 0 : index
    %21 = vector.load %arg1[%c0_28, %c2_29, %c0_30, %c0_31] : memref<1x4x152x128xbf16, #tpu.memory_space<vmem>>, vector<1x1x128x128xbf16>
    %22 = vector.shape_cast %21 : vector<1x1x128x128xbf16> to vector<128x128xbf16>
    %c1_32 = arith.constant 1 : index
    %c0_33 = arith.constant 0 : index
    %c0_34 = arith.constant 0 : index
    %c0_35 = arith.constant 0 : index
    %23 = vector.load %arg3[%c1_32, %c0_33, %c0_34, %c0_35] : memref<3x3x128x128xbf16, #tpu.memory_space<vmem>>, vector<1x1x128x128xbf16>
    %24 = vector.shape_cast %23 : vector<1x1x128x128xbf16> to vector<128x128xbf16>
    %cst_36 = arith.constant dense<0.000000e+00> : vector<128x128xf32>
    %25 = tpu.matmul %22, %24, %cst_36 {dimension_numbers = #tpu.dot_dimension_numbers<[1], [0], [0], [1], [0, 0, 1, 1], [], []>} : vector<128x128xbf16>, vector<128x128xbf16>, vector<128x128xf32> -> vector<128x128xf32>
    %26 = arith.addf %20, %25 : vector<128x128xf32>
    %c0_37 = arith.constant 0 : index
    %c3 = arith.constant 3 : index
    %c0_38 = arith.constant 0 : index
    %c0_39 = arith.constant 0 : index
    %27 = vector.load %arg1[%c0_37, %c3, %c0_38, %c0_39] : memref<1x4x152x128xbf16, #tpu.memory_space<vmem>>, vector<1x1x128x128xbf16>
    %28 = vector.shape_cast %27 : vector<1x1x128x128xbf16> to vector<128x128xbf16>
    %c1_40 = arith.constant 1 : index
    %c1_41 = arith.constant 1 : index
    %c0_42 = arith.constant 0 : index
    %c0_43 = arith.constant 0 : index
    %29 = vector.load %arg3[%c1_40, %c1_41, %c0_42, %c0_43] : memref<3x3x128x128xbf16, #tpu.memory_space<vmem>>, vector<1x1x128x128xbf16>
    %30 = vector.shape_cast %29 : vector<1x1x128x128xbf16> to vector<128x128xbf16>
    %cst_44 = arith.constant dense<0.000000e+00> : vector<128x128xf32>
    %31 = tpu.matmul %28, %30, %cst_44 {dimension_numbers = #tpu.dot_dimension_numbers<[1], [0], [0], [1], [0, 0, 1, 1], [], []>} : vector<128x128xbf16>, vector<128x128xbf16>, vector<128x128xf32> -> vector<128x128xf32>
    %32 = arith.addf %26, %31 : vector<128x128xf32>
    %c0_45 = arith.constant 0 : index
    %c2_46 = arith.constant 2 : index
    %c1_47 = arith.constant 1 : index
    %c0_48 = arith.constant 0 : index
    %33 = vector.load %arg1[%c0_45, %c2_46, %c1_47, %c0_48] : memref<1x4x152x128xbf16, #tpu.memory_space<vmem>>, vector<1x1x128x128xbf16>
    %34 = vector.shape_cast %33 : vector<1x1x128x128xbf16> to vector<128x128xbf16>
    %c1_49 = arith.constant 1 : index
    %c2_50 = arith.constant 2 : index
    %c0_51 = arith.constant 0 : index
    %c0_52 = arith.constant 0 : index
    %35 = vector.load %arg3[%c1_49, %c2_50, %c0_51, %c0_52] : memref<3x3x128x128xbf16, #tpu.memory_space<vmem>>, vector<1x1x128x128xbf16>
    %36 = vector.shape_cast %35 : vector<1x1x128x128xbf16> to vector<128x128xbf16>
    %cst_53 = arith.constant dense<0.000000e+00> : vector<128x128xf32>
    %37 = tpu.matmul %34, %36, %cst_53 {dimension_numbers = #tpu.dot_dimension_numbers<[1], [0], [0], [1], [0, 0, 1, 1], [], []>} : vector<128x128xbf16>, vector<128x128xbf16>, vector<128x128xf32> -> vector<128x128xf32>
    %38 = arith.addf %32, %37 : vector<128x128xf32>
    %c0_54 = arith.constant 0 : index
    %c0_55 = arith.constant 0 : index
    %c16 = arith.constant 16 : index
    %c0_56 = arith.constant 0 : index
    %39 = vector.load %arg1[%c0_54, %c0_55, %c16, %c0_56] : memref<1x4x152x128xbf16, #tpu.memory_space<vmem>>, vector<1x1x128x128xbf16>
    %40 = vector.shape_cast %39 : vector<1x1x128x128xbf16> to vector<128x128xbf16>
    %c2_57 = arith.constant 2 : index
    %c0_58 = arith.constant 0 : index
    %c0_59 = arith.constant 0 : index
    %c0_60 = arith.constant 0 : index
    %41 = vector.load %arg3[%c2_57, %c0_58, %c0_59, %c0_60] : memref<3x3x128x128xbf16, #tpu.memory_space<vmem>>, vector<1x1x128x128xbf16>
    %42 = vector.shape_cast %41 : vector<1x1x128x128xbf16> to vector<128x128xbf16>
    %cst_61 = arith.constant dense<0.000000e+00> : vector<128x128xf32>
    %43 = tpu.matmul %40, %42, %cst_61 {dimension_numbers = #tpu.dot_dimension_numbers<[1], [0], [0], [1], [0, 0, 1, 1], [], []>} : vector<128x128xbf16>, vector<128x128xbf16>, vector<128x128xf32> -> vector<128x128xf32>
    %44 = arith.addf %38, %43 : vector<128x128xf32>
    %c0_62 = arith.constant 0 : index
    %c1_63 = arith.constant 1 : index
    %c16_64 = arith.constant 16 : index
    %c0_65 = arith.constant 0 : index
    %45 = vector.load %arg1[%c0_62, %c1_63, %c16_64, %c0_65] : memref<1x4x152x128xbf16, #tpu.memory_space<vmem>>, vector<1x1x128x128xbf16>
    %46 = vector.shape_cast %45 : vector<1x1x128x128xbf16> to vector<128x128xbf16>
    %c2_66 = arith.constant 2 : index
    %c1_67 = arith.constant 1 : index
    %c0_68 = arith.constant 0 : index
    %c0_69 = arith.constant 0 : index
    %47 = vector.load %arg3[%c2_66, %c1_67, %c0_68, %c0_69] : memref<3x3x128x128xbf16, #tpu.memory_space<vmem>>, vector<1x1x128x128xbf16>
    %48 = vector.shape_cast %47 : vector<1x1x128x128xbf16> to vector<128x128xbf16>
    %cst_70 = arith.constant dense<0.000000e+00> : vector<128x128xf32>
    %49 = tpu.matmul %46, %48, %cst_70 {dimension_numbers = #tpu.dot_dimension_numbers<[1], [0], [0], [1], [0, 0, 1, 1], [], []>} : vector<128x128xbf16>, vector<128x128xbf16>, vector<128x128xf32> -> vector<128x128xf32>
    %50 = arith.addf %44, %49 : vector<128x128xf32>
    %c0_71 = arith.constant 0 : index
    %c0_72 = arith.constant 0 : index
    %c17 = arith.constant 17 : index
    %c0_73 = arith.constant 0 : index
    %51 = vector.load %arg1[%c0_71, %c0_72, %c17, %c0_73] : memref<1x4x152x128xbf16, #tpu.memory_space<vmem>>, vector<1x1x128x128xbf16>
    %52 = vector.shape_cast %51 : vector<1x1x128x128xbf16> to vector<128x128xbf16>
    %c2_74 = arith.constant 2 : index
    %c2_75 = arith.constant 2 : index
    %c0_76 = arith.constant 0 : index
    %c0_77 = arith.constant 0 : index
    %53 = vector.load %arg3[%c2_74, %c2_75, %c0_76, %c0_77] : memref<3x3x128x128xbf16, #tpu.memory_space<vmem>>, vector<1x1x128x128xbf16>
    %54 = vector.shape_cast %53 : vector<1x1x128x128xbf16> to vector<128x128xbf16>
    %cst_78 = arith.constant dense<0.000000e+00> : vector<128x128xf32>
    %55 = tpu.matmul %52, %54, %cst_78 {dimension_numbers = #tpu.dot_dimension_numbers<[1], [0], [0], [1], [0, 0, 1, 1], [], []>} : vector<128x128xbf16>, vector<128x128xbf16>, vector<128x128xf32> -> vector<128x128xf32>
    %56 = arith.addf %50, %55 : vector<128x128xf32>
    %c0_79 = arith.constant 0 : index
    %c0_80 = arith.constant 0 : index
    %57 = vector.load %arg4[%c0_79, %c0_80] : memref<1x128xf32, #tpu.memory_space<vmem>>, vector<1x128xf32>
    %58 = vector.broadcast %57 : vector<1x128xf32> to vector<128x128xf32>
    %59 = arith.addf %56, %58 : vector<128x128xf32>
    %c0_81 = arith.constant 0 : index
    %c0_82 = arith.constant 0 : index
    %c0_83 = arith.constant 0 : index
    %60 = vector.load %arg7[%c0_81, %c0_82, %c0_83] : memref<1x128x128xf32, #tpu.memory_space<vmem>>, vector<1x128x128xf32>
    %61 = vector.shape_cast %60 : vector<1x128x128xf32> to vector<128x128xf32>
    %62 = vector.shape_cast %59 : vector<128x128xf32> to vector<1x128x128xf32>
    tpu.vector_store %arg7[%c0_81, %c0_82, %c0_83], %62 {strides = array<i32>} : memref<1x128x128xf32, #tpu.memory_space<vmem>>, vector<1x128x128xf32>,
    %c0_84 = arith.constant 0 : index
    %c0_85 = arith.constant 0 : index
    %63 = vector.load %arg2[%c0_84, %c0_85] : memref<128x1xf32, #tpu.memory_space<vmem>>, vector<128x1xf32>
    %64 = vector.broadcast %63 : vector<128x1xf32> to vector<128x128xf32>
    %65 = arith.mulf %59, %64 : vector<128x128xf32>
    %c24 = arith.constant 24 : index
    %c0_86 = arith.constant 0 : index
    %66 = vector.load %arg9[%c24, %c0_86] : memref<176x128xf32, #tpu.memory_space<vmem>>, vector<128x128xf32>
    tpu.vector_store %arg9[%c24, %c0_86], %65 {strides = array<i32>} : memref<176x128xf32, #tpu.memory_space<vmem>>, vector<128x128xf32>,
    %c0_87 = arith.constant 0 : index
    %c0_88 = arith.constant 0 : index
    %67 = tpu.strided_load %arg9[%c0_87, %c0_88] {strides = array<i32: 2, 1>} : memref<176x128xf32, #tpu.memory_space<vmem>>, vector<88x128xf32>
    %68 = arith.truncf %67 : vector<88x128xf32> to vector<88x128xbf16>
    %c0_89 = arith.constant 0 : index
    %c0_90 = arith.constant 0 : index
    %c0_91 = arith.constant 0 : index
    %69 = vector.load %arg10[%c0_89, %c0_90, %c0_91] : memref<2x88x128xbf16, #tpu.memory_space<vmem>>, vector<1x88x128xbf16>
    %70 = vector.shape_cast %69 : vector<1x88x128xbf16> to vector<88x128xbf16>
    %71 = vector.shape_cast %68 : vector<88x128xbf16> to vector<1x88x128xbf16>
    tpu.vector_store %arg10[%c0_89, %c0_90, %c0_91], %71 {strides = array<i32>} : memref<2x88x128xbf16, #tpu.memory_space<vmem>>, vector<1x88x128xbf16>,
    %c1_92 = arith.constant 1 : index
    %c0_93 = arith.constant 0 : index
    %72 = tpu.strided_load %arg9[%c1_92, %c0_93] {strides = array<i32: 2, 1>} : memref<176x128xf32, #tpu.memory_space<vmem>>, vector<88x128xf32>
    %73 = arith.truncf %72 : vector<88x128xf32> to vector<88x128xbf16>
    %c1_94 = arith.constant 1 : index
    %c0_95 = arith.constant 0 : index
    %c0_96 = arith.constant 0 : index
    %74 = vector.load %arg10[%c1_94, %c0_95, %c0_96] : memref<2x88x128xbf16, #tpu.memory_space<vmem>>, vector<1x88x128xbf16>
    %75 = vector.shape_cast %74 : vector<1x88x128xbf16> to vector<88x128xbf16>
    %76 = vector.shape_cast %73 : vector<88x128xbf16> to vector<1x88x128xbf16>
    tpu.vector_store %arg10[%c1_94, %c0_95, %c0_96], %76 {strides = array<i32>} : memref<2x88x128xbf16, #tpu.memory_space<vmem>>, vector<1x88x128xbf16>,
    %c1_97 = arith.constant 1 : index
    %c3_98 = arith.constant 3 : index
    %c0_99 = arith.constant 0 : index
    %77 = vector.load %arg10[%c1_97, %c3_98, %c0_99] : memref<2x88x128xbf16, #tpu.memory_space<vmem>>, vector<1x64x128xbf16>
    %78 = vector.shape_cast %77 : vector<1x64x128xbf16> to vector<64x128xbf16>
    %c0_100 = arith.constant 0 : index
    %c0_101 = arith.constant 0 : index
    %c0_102 = arith.constant 0 : index
    %c0_103 = arith.constant 0 : index
    %79 = vector.load %arg5[%c0_100, %c0_101, %c0_102, %c0_103] : memref<3x3x128x128xbf16, #tpu.memory_space<vmem>>, vector<1x1x128x128xbf16>
    %80 = vector.shape_cast %79 : vector<1x1x128x128xbf16> to vector<128x128xbf16>
    %cst_104 = arith.constant dense<0.000000e+00> : vector<64x128xf32>
    %81 = tpu.matmul %78, %80, %cst_104 {dimension_numbers = #tpu.dot_dimension_numbers<[1], [0], [0], [1], [0, 0, 1, 1], [], []>} : vector<64x128xbf16>, vector<128x128xbf16>, vector<64x128xf32> -> vector<64x128xf32>
    %c0_105 = arith.constant 0 : index
    %c4 = arith.constant 4 : index
    %c0_106 = arith.constant 0 : index
    %82 = vector.load %arg10[%c0_105, %c4, %c0_106] : memref<2x88x128xbf16, #tpu.memory_space<vmem>>, vector<1x64x128xbf16>
    %83 = vector.shape_cast %82 : vector<1x64x128xbf16> to vector<64x128xbf16>
    %c0_107 = arith.constant 0 : index
    %c1_108 = arith.constant 1 : index
    %c0_109 = arith.constant 0 : index
    %c0_110 = arith.constant 0 : index
    %84 = vector.load %arg5[%c0_107, %c1_108, %c0_109, %c0_110] : memref<3x3x128x128xbf16, #tpu.memory_space<vmem>>, vector<1x1x128x128xbf16>
    %85 = vector.shape_cast %84 : vector<1x1x128x128xbf16> to vector<128x128xbf16>
    %cst_111 = arith.constant dense<0.000000e+00> : vector<64x128xf32>
    %86 = tpu.matmul %83, %85, %cst_111 {dimension_numbers = #tpu.dot_dimension_numbers<[1], [0], [0], [1], [0, 0, 1, 1], [], []>} : vector<64x128xbf16>, vector<128x128xbf16>, vector<64x128xf32> -> vector<64x128xf32>
    %87 = arith.addf %81, %86 : vector<64x128xf32>
    %c1_112 = arith.constant 1 : index
    %c4_113 = arith.constant 4 : index
    %c0_114 = arith.constant 0 : index
    %88 = vector.load %arg10[%c1_112, %c4_113, %c0_114] : memref<2x88x128xbf16, #tpu.memory_space<vmem>>, vector<1x64x128xbf16>
    %89 = vector.shape_cast %88 : vector<1x64x128xbf16> to vector<64x128xbf16>
    %c0_115 = arith.constant 0 : index
    %c2_116 = arith.constant 2 : index
    %c0_117 = arith.constant 0 : index
    %c0_118 = arith.constant 0 : index
    %90 = vector.load %arg5[%c0_115, %c2_116, %c0_117, %c0_118] : memref<3x3x128x128xbf16, #tpu.memory_space<vmem>>, vector<1x1x128x128xbf16>
    %91 = vector.shape_cast %90 : vector<1x1x128x128xbf16> to vector<128x128xbf16>
    %cst_119 = arith.constant dense<0.000000e+00> : vector<64x128xf32>
    %92 = tpu.matmul %89, %91, %cst_119 {dimension_numbers = #tpu.dot_dimension_numbers<[1], [0], [0], [1], [0, 0, 1, 1], [], []>} : vector<64x128xbf16>, vector<128x128xbf16>, vector<64x128xf32> -> vector<64x128xf32>
    %93 = arith.addf %87, %92 : vector<64x128xf32>
    %c1_120 = arith.constant 1 : index
    %c11 = arith.constant 11 : index
    %c0_121 = arith.constant 0 : index
    %94 = vector.load %arg10[%c1_120, %c11, %c0_121] : memref<2x88x128xbf16, #tpu.memory_space<vmem>>, vector<1x64x128xbf16>
    %95 = vector.shape_cast %94 : vector<1x64x128xbf16> to vector<64x128xbf16>
    %c1_122 = arith.constant 1 : index
    %c0_123 = arith.constant 0 : index
    %c0_124 = arith.constant 0 : index
    %c0_125 = arith.constant 0 : index
    %96 = vector.load %arg5[%c1_122, %c0_123, %c0_124, %c0_125] : memref<3x3x128x128xbf16, #tpu.memory_space<vmem>>, vector<1x1x128x128xbf16>
    %97 = vector.shape_cast %96 : vector<1x1x128x128xbf16> to vector<128x128xbf16>
    %cst_126 = arith.constant dense<0.000000e+00> : vector<64x128xf32>
    %98 = tpu.matmul %95, %97, %cst_126 {dimension_numbers = #tpu.dot_dimension_numbers<[1], [0], [0], [1], [0, 0, 1, 1], [], []>} : vector<64x128xbf16>, vector<128x128xbf16>, vector<64x128xf32> -> vector<64x128xf32>
    %99 = arith.addf %93, %98 : vector<64x128xf32>
    %c0_127 = arith.constant 0 : index
    %c12 = arith.constant 12 : index
    %c0_128 = arith.constant 0 : index
    %100 = vector.load %arg10[%c0_127, %c12, %c0_128] : memref<2x88x128xbf16, #tpu.memory_space<vmem>>, vector<1x64x128xbf16>
    %101 = vector.shape_cast %100 : vector<1x64x128xbf16> to vector<64x128xbf16>
    %c1_129 = arith.constant 1 : index
    %c1_130 = arith.constant 1 : index
    %c0_131 = arith.constant 0 : index
    %c0_132 = arith.constant 0 : index
    %102 = vector.load %arg5[%c1_129, %c1_130, %c0_131, %c0_132] : memref<3x3x128x128xbf16, #tpu.memory_space<vmem>>, vector<1x1x128x128xbf16>
    %103 = vector.shape_cast %102 : vector<1x1x128x128xbf16> to vector<128x128xbf16>
    %cst_133 = arith.constant dense<0.000000e+00> : vector<64x128xf32>
    %104 = tpu.matmul %101, %103, %cst_133 {dimension_numbers = #tpu.dot_dimension_numbers<[1], [0], [0], [1], [0, 0, 1, 1], [], []>} : vector<64x128xbf16>, vector<128x128xbf16>, vector<64x128xf32> -> vector<64x128xf32>
    %105 = arith.addf %99, %104 : vector<64x128xf32>
    %c1_134 = arith.constant 1 : index
    %c12_135 = arith.constant 12 : index
    %c0_136 = arith.constant 0 : index
    %106 = vector.load %arg10[%c1_134, %c12_135, %c0_136] : memref<2x88x128xbf16, #tpu.memory_space<vmem>>, vector<1x64x128xbf16>
    %107 = vector.shape_cast %106 : vector<1x64x128xbf16> to vector<64x128xbf16>
    %c1_137 = arith.constant 1 : index
    %c2_138 = arith.constant 2 : index
    %c0_139 = arith.constant 0 : index
    %c0_140 = arith.constant 0 : index
    %108 = vector.load %arg5[%c1_137, %c2_138, %c0_139, %c0_140] : memref<3x3x128x128xbf16, #tpu.memory_space<vmem>>, vector<1x1x128x128xbf16>
    %109 = vector.shape_cast %108 : vector<1x1x128x128xbf16> to vector<128x128xbf16>
    %cst_141 = arith.constant dense<0.000000e+00> : vector<64x128xf32>
    %110 = tpu.matmul %107, %109, %cst_141 {dimension_numbers = #tpu.dot_dimension_numbers<[1], [0], [0], [1], [0, 0, 1, 1], [], []>} : vector<64x128xbf16>, vector<128x128xbf16>, vector<64x128xf32> -> vector<64x128xf32>
    %111 = arith.addf %105, %110 : vector<64x128xf32>
    %c1_142 = arith.constant 1 : index
    %c19 = arith.constant 19 : index
    %c0_143 = arith.constant 0 : index
    %112 = vector.load %arg10[%c1_142, %c19, %c0_143] : memref<2x88x128xbf16, #tpu.memory_space<vmem>>, vector<1x64x128xbf16>
    %113 = vector.shape_cast %112 : vector<1x64x128xbf16> to vector<64x128xbf16>
    %c2_144 = arith.constant 2 : index
    %c0_145 = arith.constant 0 : index
    %c0_146 = arith.constant 0 : index
    %c0_147 = arith.constant 0 : index
    %114 = vector.load %arg5[%c2_144, %c0_145, %c0_146, %c0_147] : memref<3x3x128x128xbf16, #tpu.memory_space<vmem>>, vector<1x1x128x128xbf16>
    %115 = vector.shape_cast %114 : vector<1x1x128x128xbf16> to vector<128x128xbf16>
    %cst_148 = arith.constant dense<0.000000e+00> : vector<64x128xf32>
    %116 = tpu.matmul %113, %115, %cst_148 {dimension_numbers = #tpu.dot_dimension_numbers<[1], [0], [0], [1], [0, 0, 1, 1], [], []>} : vector<64x128xbf16>, vector<128x128xbf16>, vector<64x128xf32> -> vector<64x128xf32>
    %117 = arith.addf %111, %116 : vector<64x128xf32>
    %c0_149 = arith.constant 0 : index
    %c20 = arith.constant 20 : index
    %c0_150 = arith.constant 0 : index
    %118 = vector.load %arg10[%c0_149, %c20, %c0_150] : memref<2x88x128xbf16, #tpu.memory_space<vmem>>, vector<1x64x128xbf16>
    %119 = vector.shape_cast %118 : vector<1x64x128xbf16> to vector<64x128xbf16>
    %c2_151 = arith.constant 2 : index
    %c1_152 = arith.constant 1 : index
    %c0_153 = arith.constant 0 : index
    %c0_154 = arith.constant 0 : index
    %120 = vector.load %arg5[%c2_151, %c1_152, %c0_153, %c0_154] : memref<3x3x128x128xbf16, #tpu.memory_space<vmem>>, vector<1x1x128x128xbf16>
    %121 = vector.shape_cast %120 : vector<1x1x128x128xbf16> to vector<128x128xbf16>
    %cst_155 = arith.constant dense<0.000000e+00> : vector<64x128xf32>
    %122 = tpu.matmul %119, %121, %cst_155 {dimension_numbers = #tpu.dot_dimension_numbers<[1], [0], [0], [1], [0, 0, 1, 1], [], []>} : vector<64x128xbf16>, vector<128x128xbf16>, vector<64x128xf32> -> vector<64x128xf32>
    %123 = arith.addf %117, %122 : vector<64x128xf32>
    %c1_156 = arith.constant 1 : index
    %c20_157 = arith.constant 20 : index
    %c0_158 = arith.constant 0 : index
    %124 = vector.load %arg10[%c1_156, %c20_157, %c0_158] : memref<2x88x128xbf16, #tpu.memory_space<vmem>>, vector<1x64x128xbf16>
    %125 = vector.shape_cast %124 : vector<1x64x128xbf16> to vector<64x128xbf16>
    %c2_159 = arith.constant 2 : index
    %c2_160 = arith.constant 2 : index
    %c0_161 = arith.constant 0 : index
    %c0_162 = arith.constant 0 : index
    %126 = vector.load %arg5[%c2_159, %c2_160, %c0_161, %c0_162] : memref<3x3x128x128xbf16, #tpu.memory_space<vmem>>, vector<1x1x128x128xbf16>
    %127 = vector.shape_cast %126 : vector<1x1x128x128xbf16> to vector<128x128xbf16>
    %cst_163 = arith.constant dense<0.000000e+00> : vector<64x128xf32>
    %128 = tpu.matmul %125, %127, %cst_163 {dimension_numbers = #tpu.dot_dimension_numbers<[1], [0], [0], [1], [0, 0, 1, 1], [], []>} : vector<64x128xbf16>, vector<128x128xbf16>, vector<64x128xf32> -> vector<64x128xf32>
    %129 = arith.addf %123, %128 : vector<64x128xf32>
    %c0_164 = arith.constant 0 : index
    %c0_165 = arith.constant 0 : index
    %130 = vector.load %arg6[%c0_164, %c0_165] : memref<1x128xf32, #tpu.memory_space<vmem>>, vector<1x128xf32>
    %131 = vector.broadcast %130 : vector<1x128xf32> to vector<64x128xf32>
    %132 = arith.addf %129, %131 : vector<64x128xf32>
    %c0_166 = arith.constant 0 : index
    %c0_167 = arith.constant 0 : index
    %c0_168 = arith.constant 0 : index
    %133 = vector.load %arg8[%c0_166, %c0_167, %c0_168] : memref<1x64x128xf32, #tpu.memory_space<vmem>>, vector<1x64x128xf32>
    %134 = vector.shape_cast %133 : vector<1x64x128xf32> to vector<64x128xf32>
    %135 = vector.shape_cast %132 : vector<64x128xf32> to vector<1x64x128xf32>
    tpu.vector_store %arg8[%c0_166, %c0_167, %c0_168], %135 {strides = array<i32>} : memref<1x64x128xf32, #tpu.memory_space<vmem>>, vector<1x64x128xf32>,
    return
  }
  func.func @transform_0(%arg0: i32) -> (i32, i32, i32, i32) {
    %c0_i32 = arith.constant 0 : i32
    %c0_i32_0 = arith.constant 0 : i32
    %c0_i32_1 = arith.constant 0 : i32
    %c0_i32_2 = arith.constant 0 : i32
    return %arg0, %c0_i32, %c0_i32_0, %c0_i32_1 : i32, i32, i32, i32
  }
  func.func @transform_1(%arg0: i32) -> (i32, i32) {
    %c0_i32 = arith.constant 0 : i32
    %c0_i32_0 = arith.constant 0 : i32
    %c0_i32_1 = arith.constant 0 : i32
    return %c0_i32, %c0_i32_0 : i32, i32
  }
  func.func @transform_2(%arg0: i32) -> (i32, i32, i32, i32) {
    %c0_i32 = arith.constant 0 : i32
    %c0_i32_0 = arith.constant 0 : i32
    %c0_i32_1 = arith.constant 0 : i32
    %c0_i32_2 = arith.constant 0 : i32
    %c0_i32_3 = arith.constant 0 : i32
    return %c0_i32, %c0_i32_0, %c0_i32_1, %c0_i32_2 : i32, i32, i32, i32
  }
  func.func @transform_3(%arg0: i32) -> (i32, i32) {
    %c0_i32 = arith.constant 0 : i32
    %c0_i32_0 = arith.constant 0 : i32
    %c0_i32_1 = arith.constant 0 : i32
    return %c0_i32, %c0_i32_0 : i32, i32
  }
  func.func @transform_4(%arg0: i32) -> (i32, i32, i32, i32) {
    %c0_i32 = arith.constant 0 : i32
    %c0_i32_0 = arith.constant 0 : i32
    %c0_i32_1 = arith.constant 0 : i32
    %c0_i32_2 = arith.constant 0 : i32
    %c0_i32_3 = arith.constant 0 : i32
    return %c0_i32, %c0_i32_0, %c0_i32_1, %c0_i32_2 : i32, i32, i32, i32
  }
  func.func @transform_5(%arg0: i32) -> (i32, i32) {
    %c0_i32 = arith.constant 0 : i32
    %c0_i32_0 = arith.constant 0 : i32
    %c0_i32_1 = arith.constant 0 : i32
    return %c0_i32, %c0_i32_0 : i32, i32
  }
  func.func @transform_6(%arg0: i32) -> (i32, i32, i32) {
    %c0_i32 = arith.constant 0 : i32
    %c0_i32_0 = arith.constant 0 : i32
    %c0_i32_1 = arith.constant 0 : i32
    return %arg0, %c0_i32, %c0_i32_0 : i32, i32, i32
  }
  func.func @transform_7(%arg0: i32) -> (i32, i32, i32) {
    %c0_i32 = arith.constant 0 : i32
    %c0_i32_0 = arith.constant 0 : i32
    %c0_i32_1 = arith.constant 0 : i32
    return %arg0, %c0_i32, %c0_i32_0 : i32, i32, i32
  }
}

</mosaic_0001>

<llo_original>
// kernel: _lambda_.1
$region0: #{_lambda_.1}
  #allocation0 [shape = 'u32[]', space=smem, size = 0x4, offset = 0x4, fixed_abs, tag = 'smem constant byte address 0x4 - core index']
  #allocation1 [shape = 'u32[144,128]{1,0:T(1,128)}', space=vmem, size = 0x12000, scoped, tag = 'internal scratch']
  #allocation2 [shape = 'f32[176,128]{1,0:T(8,128)}', space=vmem, size = 0x16000, scoped, tag = 'scratch operand']
  #allocation3 [shape = 'bf16[2,88,128]{2,1,0:T(8,128)(2,1)}', space=vmem, size = 0xb000, scoped, tag = 'scratch operand']
  %s0 = inlined_call_operand.vmem [shape: bf16[2,4,152,128], index: 0, kind: input, shape index: {}]
  %s1 = inlined_call_operand.vmem [shape: f32[128,1], index: 1, kind: input, shape index: {}]
  %s2 = inlined_call_operand.vmem [shape: bf16[3,3,128,128], index: 2, kind: input, shape index: {}]
  %s3 = inlined_call_operand.vmem [shape: f32[1,128], index: 3, kind: input, shape index: {}]
  %s4 = inlined_call_operand.vmem [shape: bf16[3,3,128,128], index: 4, kind: input, shape index: {}]
  %s5 = inlined_call_operand.vmem [shape: f32[1,128], index: 5, kind: input, shape index: {}]
  %s6 = inlined_call_operand.vmem [shape: f32[2,128,128], index: 6, kind: output, shape index: {0}]
  %s7 = inlined_call_operand.vmem [shape: f32[2,64,128], index: 7, kind: output, shape index: {1}]
  %8 = xla_tuple %s6, %s7
  %s9 = sld [smem:[#allocation0]]
  $region65: #{_lambda_.1} parent=0
    _
  %s11 = ssub.s32 1, %s9
  %s12 = scalar_select 0, %s11, %s9
  loop: start=0, step=1, limit=4
  $region2: #{_lambda_.1} parent=0 // loop_pre_header
    _
  $region3: #{_lambda_.1} parent=0 // loop_header
    %s14 = sphi 0, %s18
    %p15 = scmp.ge.s32.totalorder %s14, 4
    %s24 = sphi 0, %s26
    %s27 = sphi 0, %s24
    %s28 = sphi 0, %s27
    %s44 = sphi 0, %s28
    %s48 = sphi 0, %s48
    %s50 = sphi 0, %s48
    %s51 = sphi 0, %s50
    %s65 = sphi 0, %s51
    %s69 = sphi 0, %s69
    %s71 = sphi 0, %s69
    %s72 = sphi 0, %s71
    %s86 = sphi 0, %s72
    %s90 = sphi 0, %s90
    %s92 = sphi 0, %s90
    %s93 = sphi 0, %s92
    %s107 = sphi 0, %s93
    %s111 = sphi 0, %s111
    %s113 = sphi 0, %s111
    %s114 = sphi 0, %s113
    %s128 = sphi 0, %s114
    %s132 = sphi 0, %s132
    %s134 = sphi 0, %s132
    %s135 = sphi 0, %s134
    %s149 = sphi 0, %s135
    %s155 = sphi 0, %s157
    %s158 = sphi 0, %s155
    %s159 = sphi 0, %s158
    %s175 = sphi 0, %s159
    %s181 = sphi 0, %s183
    %s184 = sphi 0, %s181
    %s185 = sphi 0, %s184
    %s201 = sphi 0, %s185
  $region4: #{_lambda_.1} parent=0 // loop_header_branch
    %17 = sbr.rel (%p15) target = $region8
  $region5: #{_lambda_.1} parent=0 // loop_body
    %s19 = ssub.s32 %s14, 1
    %s20 = ssub.s32 %s14, 2
    %s21 = sadd.s32 %s14, 1
    %s22 = ssub.s32 %s14, %s21
    %p23 = scmp.eq.s32.totalorder %s22, 0
    %s25 = sadd.s32 %s24, 1
    %s26 = scalar_select %p23, %s24, %s25
    %p29 = pneg %p23
    %p30 = scmp.eq.s32.totalorder %s14, 1
    %p31 = por %p29, %p30
    %p32 = scmp.ne.s32.totalorder %s24, %s27
    %p33 = scmp.eq.s32.totalorder %s14, 0
    %p34 = por %p32, %p33
    %p35 = scmp.ne.s32.totalorder %s24, %s27
    %p36 = scmp.eq.s32.totalorder %s19, 1
    %p37 = por %p35, %p36
    %p38 = scmp.ne.s32.totalorder %s27, %s28
    %p39 = scmp.eq.s32.totalorder %s19, 0
    %p40 = por %p38, %p39
    %p41 = scmp.ne.s32.totalorder %s27, %s28
    %p42 = scmp.eq.s32.totalorder %s20, 1
    %p43 = por %p41, %p42
    %p45 = scmp.ne.s32.totalorder %s28, %s44
    %p46 = scmp.eq.s32.totalorder %s20, 0
    %p47 = por %p45, %p46
    %s49 = sadd.s32 %s48, 1
    %p52 = scmp.eq.s32.totalorder %s14, 1
    %p53 = scmp.ne.s32.totalorder %s48, %s50
    %p54 = scmp.eq.s32.totalorder %s14, 0
    %p55 = por %p53, %p54
    %p56 = scmp.ne.s32.totalorder %s48, %s50
    %p57 = scmp.eq.s32.totalorder %s19, 1
    %p58 = por %p56, %p57
    %p59 = scmp.ne.s32.totalorder %s50, %s51
    %p60 = scmp.eq.s32.totalorder %s19, 0
    %p61 = por %p59, %p60
    %p62 = scmp.ne.s32.totalorder %s50, %s51
    %p63 = scmp.eq.s32.totalorder %s20, 1
    %p64 = por %p62, %p63
    %p66 = scmp.ne.s32.totalorder %s51, %s65
    %p67 = scmp.eq.s32.totalorder %s20, 0
    %p68 = por %p66, %p67
    %s70 = sadd.s32 %s69, 1
    %p73 = scmp.eq.s32.totalorder %s14, 1
    %p74 = scmp.ne.s32.totalorder %s69, %s71
    %p75 = scmp.eq.s32.totalorder %s14, 0
    %p76 = por %p74, %p75
    %p77 = scmp.ne.s32.totalorder %s69, %s71
    %p78 = scmp.eq.s32.totalorder %s19, 1
    %p79 = por %p77, %p78
    %p80 = scmp.ne.s32.totalorder %s71, %s72
    %p81 = scmp.eq.s32.totalorder %s19, 0
    %p82 = por %p80, %p81
    %p83 = scmp.ne.s32.totalorder %s71, %s72
    %p84 = scmp.eq.s32.totalorder %s20, 1
    %p85 = por %p83, %p84
    %p87 = scmp.ne.s32.totalorder %s72, %s86
    %p88 = scmp.eq.s32.totalorder %s20, 0
    %p89 = por %p87, %p88
    %s91 = sadd.s32 %s90, 1
    %p94 = scmp.eq.s32.totalorder %s14, 1
    %p95 = scmp.ne.s32.totalorder %s90, %s92
    %p96 = scmp.eq.s32.totalorder %s14, 0
    %p97 = por %p95, %p96
    %p98 = scmp.ne.s32.totalorder %s90, %s92
    %p99 = scmp.eq.s32.totalorder %s19, 1
    %p100 = por %p98, %p99
    %p101 = scmp.ne.s32.totalorder %s92, %s93
    %p102 = scmp.eq.s32.totalorder %s19, 0
    %p103 = por %p101, %p102
    %p104 = scmp.ne.s32.totalorder %s92, %s93
    %p105 = scmp.eq.s32.totalorder %s20, 1
    %p106 = por %p104, %p105
    %p108 = scmp.ne.s32.totalorder %s93, %s107
    %p109 = scmp.eq.s32.totalorder %s20, 0
    %p110 = por %p108, %p109
    %s112 = sadd.s32 %s111, 1
    %p115 = scmp.eq.s32.totalorder %s14, 1
    %p116 = scmp.ne.s32.totalorder %s111, %s113
    %p117 = scmp.eq.s32.totalorder %s14, 0
    %p118 = por %p116, %p117
    %p119 = scmp.ne.s32.totalorder %s111, %s113
    %p120 = scmp.eq.s32.totalorder %s19, 1
    %p121 = por %p119, %p120
    %p122 = scmp.ne.s32.totalorder %s113, %s114
    %p123 = scmp.eq.s32.totalorder %s19, 0
    %p124 = por %p122, %p123
    %p125 = scmp.ne.s32.totalorder %s113, %s114
    %p126 = scmp.eq.s32.totalorder %s20, 1
    %p127 = por %p125, %p126
    %p129 = scmp.ne.s32.totalorder %s114, %s128
    %p130 = scmp.eq.s32.totalorder %s20, 0
    %p131 = por %p129, %p130
    %s133 = sadd.s32 %s132, 1
    %p136 = scmp.eq.s32.totalorder %s14, 1
    %p137 = scmp.ne.s32.totalorder %s132, %s134
    %p138 = scmp.eq.s32.totalorder %s14, 0
    %p139 = por %p137, %p138
    %p140 = scmp.ne.s32.totalorder %s132, %s134
    %p141 = scmp.eq.s32.totalorder %s19, 1
    %p142 = por %p140, %p141
    %p143 = scmp.ne.s32.totalorder %s134, %s135
    %p144 = scmp.eq.s32.totalorder %s19, 0
    %p145 = por %p143, %p144
    %p146 = scmp.ne.s32.totalorder %s134, %s135
    %p147 = scmp.eq.s32.totalorder %s20, 1
    %p148 = por %p146, %p147
    %p150 = scmp.ne.s32.totalorder %s135, %s149
    %p151 = scmp.eq.s32.totalorder %s20, 0
    %p152 = por %p150, %p151
    %s153 = ssub.s32 %s14, %s21
    %p154 = scmp.eq.s32.totalorder %s153, 0
    %s156 = sadd.s32 %s155, 1
    %s157 = scalar_select %p154, %s155, %s156
    %p160 = pneg %p154
    %p161 = scmp.eq.s32.totalorder %s14, 1
    %p162 = por %p160, %p161
    %p163 = scmp.ne.s32.totalorder %s155, %s158
    %p164 = scmp.eq.s32.totalorder %s14, 0
    %p165 = por %p163, %p164
    %p166 = scmp.ne.s32.totalorder %s155, %s158
    %p167 = scmp.eq.s32.totalorder %s19, 1
    %p168 = por %p166, %p167
    %p169 = scmp.ne.s32.totalorder %s158, %s159
    %p170 = scmp.eq.s32.totalorder %s19, 0
    %p171 = por %p169, %p170
    %p172 = scmp.ne.s32.totalorder %s158, %s159
    %p173 = scmp.eq.s32.totalorder %s20, 1
    %p174 = por %p172, %p173
    %p176 = scmp.ne.s32.totalorder %s159, %s175
    %p177 = scmp.eq.s32.totalorder %s20, 0
    %p178 = por %p176, %p177
    %s179 = ssub.s32 %s14, %s21
    %p180 = scmp.eq.s32.totalorder %s179, 0
    %s182 = sadd.s32 %s181, 1
    %s183 = scalar_select %p180, %s181, %s182
    %p186 = pneg %p180
    %p187 = scmp.eq.s32.totalorder %s14, 1
    %p188 = por %p186, %p187
    %p189 = scmp.ne.s32.totalorder %s181, %s184
    %p190 = scmp.eq.s32.totalorder %s14, 0
    %p191 = por %p189, %p190
    %p192 = scmp.ne.s32.totalorder %s181, %s184
    %p193 = scmp.eq.s32.totalorder %s19, 1
    %p194 = por %p192, %p193
    %p195 = scmp.ne.s32.totalorder %s184, %s185
    %p196 = scmp.eq.s32.totalorder %s19, 0
    %p197 = por %p195, %p196
    %p198 = scmp.ne.s32.totalorder %s184, %s185
    %p199 = scmp.eq.s32.totalorder %s20, 1
    %p200 = por %p198, %p199
    %p202 = scmp.ne.s32.totalorder %s185, %s201
    %p203 = scmp.eq.s32.totalorder %s20, 0
    %p204 = por %p202, %p203
    %p205 = scmp.le.s32.totalorder 1, %s14
    %p206 = scmp.lt.s32.totalorder %s14, 3
    %p207 = pnand %p205, %p206
    %p208 = pneg %p207
    // Predicated region
    $region9: #{_lambda_.1} parent=5 // pred_check
      _
    $region10: #{_lambda_.1} parent=5 // pred_check_branch
      %210 = sbr.rel (%p207) target = $region12
    $region11: #{_lambda_.1} parent=5 // pred_region
      %s211 = ssub.s32 %s14, 1
      // Predicated region
      $region13: #{_lambda_.1} parent=11 // pred_check
        %p212 = pneg %p61
      $region14: #{_lambda_.1} parent=11 // pred_check_branch
        %214 = sbr.rel (%p212) target = $region16
      $region15: #{_lambda_.1} parent=11 // pred_region
        _
      $region16: #{_lambda_.1} parent=11 // pred_fallthru
        _
      // Predicated region
      $region17: #{_lambda_.1} parent=11 // pred_check
        %p215 = pneg %p82
      $region18: #{_lambda_.1} parent=11 // pred_check_branch
        %217 = sbr.rel (%p215) target = $region20
      $region19: #{_lambda_.1} parent=11 // pred_region
        _
      $region20: #{_lambda_.1} parent=11 // pred_fallthru
        _
      // Predicated region
      $region21: #{_lambda_.1} parent=11 // pred_check
        %p218 = pneg %p103
      $region22: #{_lambda_.1} parent=11 // pred_check_branch
        %220 = sbr.rel (%p218) target = $region24
      $region23: #{_lambda_.1} parent=11 // pred_region
        _
      $region24: #{_lambda_.1} parent=11 // pred_fallthru
        _
      // Predicated region
      $region25: #{_lambda_.1} parent=11 // pred_check
        %p221 = pneg %p124
      $region26: #{_lambda_.1} parent=11 // pred_check_branch
        %223 = sbr.rel (%p221) target = $region28
      $region27: #{_lambda_.1} parent=11 // pred_region
        _
      $region28: #{_lambda_.1} parent=11 // pred_fallthru
        _
      // Predicated region
      $region29: #{_lambda_.1} parent=11 // pred_check
        %p224 = pneg %p145
      $region30: #{_lambda_.1} parent=11 // pred_check_branch
        %226 = sbr.rel (%p224) target = $region32
      $region31: #{_lambda_.1} parent=11 // pred_region
        _
      $region32: #{_lambda_.1} parent=11 // pred_fallthru
        _
    $region12: #{_lambda_.1} parent=5 // pred_fallthru
      _
    %p227 = scmp.lt.s32.totalorder %s14, 2
    // Predicated region
    $region33: #{_lambda_.1} parent=5 // pred_check
      %p228 = pneg %p227
    $region34: #{_lambda_.1} parent=5 // pred_check_branch
      %230 = sbr.rel (%p228) target = $region36
    $region35: #{_lambda_.1} parent=5 // pred_region
      // Predicated region
      $region37: #{_lambda_.1} parent=35 // pred_check
        %p231 = pneg %p34
      $region38: #{_lambda_.1} parent=35 // pred_check_branch
        %233 = sbr.rel (%p231) target = $region40
      $region39: #{_lambda_.1} parent=35 // pred_region
        %p234 = scmp.lt.s32.totalorder %s14, 1
        %s235 = scalar_select %p234, %s14, 1
        %s236 = smul.addr %s235, 76
        %s237 = smul.addr %s236, 4
        %s238 = scalar_lea.vmem %s0, %s237
      $region40: #{_lambda_.1} parent=35 // pred_fallthru
        _
    $region36: #{_lambda_.1} parent=5 // pred_fallthru
      _
    %p239 = scmp.le.s32.totalorder 1, %s14
    %p240 = scmp.lt.s32.totalorder %s14, 3
    %p241 = pnand %p239, %p240
    %p242 = pneg %p241
    // Predicated region
    $region41: #{_lambda_.1} parent=5 // pred_check
      _
    $region42: #{_lambda_.1} parent=5 // pred_check_branch
      %244 = sbr.rel (%p241) target = $region44
    $region43: #{_lambda_.1} parent=5 // pred_region
      %s245 = ssub.s32 %s14, 1
      %p246 = scmp.lt.s32.totalorder %s19, 1
      %s247 = scalar_select %p246, %s19, 1
      %s248 = smul.addr %s247, 76
      %s249 = smul.addr %s248, 4
      %s250 = scalar_lea.vmem %s0, %s249
      %p251 = pneg %p40
      %p252 = pneg %p37
      %p253 = pneg %p61
      %p254 = pneg %p58
      %p255 = pneg %p82
      %p256 = pneg %p79
      %p257 = pneg %p103
      %p258 = pneg %p100
      %p259 = pneg %p124
      %p260 = pneg %p121
      %p261 = pneg %p145
      %p262 = pneg %p142
      %p263 = pneg %p171
      %p264 = pneg %p168
      %p265 = scmp.lt.s32.totalorder %s19, 1
      %s266 = scalar_select %p265, %s19, 1
      %s267 = smul.addr %s266, 16
      %s268 = smul.addr %s267, 8
      %s269 = scalar_lea.vmem %s6, %s268
      %p270 = pneg %p197
      %p271 = pneg %p194
      %p272 = scmp.lt.s32.totalorder %s19, 1
      %s273 = scalar_select %p272, %s19, 1
      %s274 = smul.addr %s273, 8
      %s275 = smul.addr %s274, 8
      %s276 = scalar_lea.vmem %s7, %s275
      %p277 = scmp.lt.s32.totalorder %s19, 1
      %s278 = scalar_select %p277, %s19, 1
      %s279 = smul.addr %s278, 76
      %s280 = smul.addr %s279, 4
      %s281 = scalar_lea.vmem %s0, %s280
      %p282 = scmp.lt.s32.totalorder %s19, 1
      %s283 = scalar_select %p282, %s19, 1
      %s284 = smul.addr %s283, 16
      %s285 = smul.addr %s284, 8
      %s286 = scalar_lea.vmem %s6, %s285
      %p287 = scmp.lt.s32.totalorder %s19, 1
      %s288 = scalar_select %p287, %s19, 1
      %s289 = smul.addr %s288, 8
      %s290 = smul.addr %s289, 8
      %s291 = scalar_lea.vmem %s7, %s290
      %293 = vst [vmem:[#allocation2] sm:$0xff] 0.0
      %294 = vst [vmem:[#allocation2 + $0x8] sm:$0xff] 0.0
      %295 = vst [vmem:[#allocation2 + $0x10] sm:$0xff] 0.0
      %296 = vst [vmem:[#allocation2 + $0x98] sm:$0xff] 0.0
      %297 = vst [vmem:[#allocation2 + $0xa0] sm:$0xff] 0.0
      %298 = vst [vmem:[#allocation2 + $0xa8] sm:$0xff] 0.0
      %v299 = vld [vmem:[%s281] sm:$0xf]
      %v300 = vld [vmem:[%s281 + $0x4] sm:$0xf]
      %v301 = vld [vmem:[%s281 + $0x8] sm:$0xf]
      %v302 = vld [vmem:[%s281 + $0xc] sm:$0xf]
      %v303 = vld [vmem:[%s281 + $0x10] sm:$0xf]
      %v304 = vld [vmem:[%s281 + $0x14] sm:$0xf]
      %v305 = vld [vmem:[%s281 + $0x18] sm:$0xf]
      %v306 = vld [vmem:[%s281 + $0x1c] sm:$0xf]
      %v307 = vld [vmem:[%s281 + $0x20] sm:$0xf]
      %v308 = vld [vmem:[%s281 + $0x24] sm:$0xf]
      %v309 = vld [vmem:[%s281 + $0x28] sm:$0xf]
      %v310 = vld [vmem:[%s281 + $0x2c] sm:$0xf]
      %v311 = vld [vmem:[%s281 + $0x30] sm:$0xf]
      %v312 = vld [vmem:[%s281 + $0x34] sm:$0xf]
      %v313 = vld [vmem:[%s281 + $0x38] sm:$0xf]
      %v314 = vld [vmem:[%s281 + $0x3c] sm:$0xf]
      %v315 = vld [vmem:[%s2] sm:$0xf]
      %v316 = vld [vmem:[%s2 + $0x4] sm:$0xf]
      %v317 = vld [vmem:[%s2 + $0x8] sm:$0xf]
      %v318 = vld [vmem:[%s2 + $0xc] sm:$0xf]
      %v319 = vld [vmem:[%s2 + $0x10] sm:$0xf]
      %v320 = vld [vmem:[%s2 + $0x14] sm:$0xf]
      %v321 = vld [vmem:[%s2 + $0x18] sm:$0xf]
      %v322 = vld [vmem:[%s2 + $0x1c] sm:$0xf]
      %v323 = vld [vmem:[%s2 + $0x20] sm:$0xf]
      %v324 = vld [vmem:[%s2 + $0x24] sm:$0xf]
      %v325 = vld [vmem:[%s2 + $0x28] sm:$0xf]
      %v326 = vld [vmem:[%s2 + $0x2c] sm:$0xf]
      %v327 = vld [vmem:[%s2 + $0x30] sm:$0xf]
      %v328 = vld [vmem:[%s2 + $0x34] sm:$0xf]
      %v329 = vld [vmem:[%s2 + $0x38] sm:$0xf]
      %v330 = vld [vmem:[%s2 + $0x3c] sm:$0xf]
      %s331 = scalar_lea.vmem %s281, 76
      %v332 = vld [vmem:[%s331] sm:$0xf]
      %v333 = vld [vmem:[%s331 + $0x4] sm:$0xf]
      %v334 = vld [vmem:[%s331 + $0x8] sm:$0xf]
      %v335 = vld [vmem:[%s331 + $0xc] sm:$0xf]
      %v336 = vld [vmem:[%s331 + $0x10] sm:$0xf]
      %v337 = vld [vmem:[%s331 + $0x14] sm:$0xf]
      %v338 = vld [vmem:[%s331 + $0x18] sm:$0xf]
      %v339 = vld [vmem:[%s331 + $0x1c] sm:$0xf]
      %v340 = vld [vmem:[%s331 + $0x20] sm:$0xf]
      %v341 = vld [vmem:[%s331 + $0x24] sm:$0xf]
      %v342 = vld [vmem:[%s331 + $0x28] sm:$0xf]
      %v343 = vld [vmem:[%s331 + $0x2c] sm:$0xf]
      %v344 = vld [vmem:[%s331 + $0x30] sm:$0xf]
      %v345 = vld [vmem:[%s331 + $0x34] sm:$0xf]
      %v346 = vld [vmem:[%s331 + $0x38] sm:$0xf]
      %v347 = vld [vmem:[%s331 + $0x3c] sm:$0xf]
      %s348 = scalar_lea.vmem %s2, 64
      %v349 = vld [vmem:[%s348] sm:$0xf]
      %v350 = vld [vmem:[%s348 + $0x4] sm:$0xf]
      %v351 = vld [vmem:[%s348 + $0x8] sm:$0xf]
      %v352 = vld [vmem:[%s348 + $0xc] sm:$0xf]
      %v353 = vld [vmem:[%s348 + $0x10] sm:$0xf]
      %v354 = vld [vmem:[%s348 + $0x14] sm:$0xf]
      %v355 = vld [vmem:[%s348 + $0x18] sm:$0xf]
      %v356 = vld [vmem:[%s348 + $0x1c] sm:$0xf]
      %v357 = vld [vmem:[%s348 + $0x20] sm:$0xf]
      %v358 = vld [vmem:[%s348 + $0x24] sm:$0xf]
      %v359 = vld [vmem:[%s348 + $0x28] sm:$0xf]
      %v360 = vld [vmem:[%s348 + $0x2c] sm:$0xf]
      %v361 = vld [vmem:[%s348 + $0x30] sm:$0xf]
      %v362 = vld [vmem:[%s348 + $0x34] sm:$0xf]
      %v363 = vld [vmem:[%s348 + $0x38] sm:$0xf]
      %v364 = vld [vmem:[%s348 + $0x3c] sm:$0xf]
      %v381 = vunpack.c.l.b16 %v332
      %v382 = vunpack.c.l.b16 %v333
      %v383 = vunpack.c.l.b16 %v334
      %v384 = vunpack.c.l.b16 %v335
      %v385 = vunpack.c.l.b16 %v336
      %v386 = vunpack.c.l.b16 %v337
      %v387 = vunpack.c.l.b16 %v338
      %v388 = vunpack.c.l.b16 %v339
      %v389 = vunpack.c.l.b16 %v340
      %v390 = vunpack.c.l.b16 %v341
      %v391 = vunpack.c.l.b16 %v342
      %v392 = vunpack.c.l.b16 %v343
      %v393 = vunpack.c.l.b16 %v344
      %v394 = vunpack.c.l.b16 %v345
      %v395 = vunpack.c.l.b16 %v346
      %v396 = vunpack.c.l.b16 %v347
      %v397 = vpack.c.b16 %v382, %v381
      %v398 = vpack.c.b16 %v384, %v383
      %v399 = vpack.c.b16 %v386, %v385
      %v400 = vpack.c.b16 %v388, %v387
      %v401 = vpack.c.b16 %v390, %v389
      %v402 = vpack.c.b16 %v392, %v391
      %v403 = vpack.c.b16 %v394, %v393
      %v404 = vpack.c.b16 %v396, %v395
      %v429 = vunpack.c.l.b16 %v349
      %v430 = vunpack.c.l.b16 %v350
      %v431 = vunpack.c.l.b16 %v351
      %v432 = vunpack.c.l.b16 %v352
      %v433 = vunpack.c.l.b16 %v353
      %v434 = vunpack.c.l.b16 %v354
      %v435 = vunpack.c.l.b16 %v355
      %v436 = vunpack.c.l.b16 %v356
      %v437 = vunpack.c.l.b16 %v357
      %v438 = vunpack.c.l.b16 %v358
      %v439 = vunpack.c.l.b16 %v359
      %v440 = vunpack.c.l.b16 %v360
      %v441 = vunpack.c.l.b16 %v361
      %v442 = vunpack.c.l.b16 %v362
      %v443 = vunpack.c.l.b16 %v363
      %v444 = vunpack.c.l.b16 %v364
      %v445 = vpack.c.b16 %v430, %v429
      %v446 = vpack.c.b16 %v432, %v431
      %v447 = vpack.c.b16 %v434, %v433
      %v448 = vpack.c.b16 %v436, %v435
      %v449 = vpack.c.b16 %v438, %v437
      %v450 = vpack.c.b16 %v440, %v439
      %v451 = vpack.c.b16 %v442, %v441
      %v452 = vpack.c.b16 %v444, %v443
      %461 = vmatprep.subr.bf16.mxu0 0
      %462 = vmatpush1.bf16.msra.mxu0 %v445
      %463 = vmatprep.subr.bf16.mxu0 0
      %464 = vmatpush1.bf16.msra.mxu0 %v446
      %465 = vmatprep.subr.bf16.mxu0 0
      %466 = vmatpush1.bf16.msra.mxu0 %v447
      %467 = vmatprep.subr.bf16.mxu0 0
      %468 = vmatpush1.bf16.msra.mxu0 %v448
      %469 = vmatprep.subr.bf16.mxu0 0
      %470 = vmatpush1.bf16.msra.mxu0 %v449
      %471 = vmatprep.subr.bf16.mxu0 0
      %472 = vmatpush1.bf16.msra.mxu0 %v450
      %473 = vmatprep.subr.bf16.mxu0 0
      %474 = vmatpush1.bf16.msra.mxu0 %v451
      %475 = vmatprep.subr.bf16.mxu0 0
      %476 = vmatpush1.bf16.msra.mxu0 %v452
      %477 = vmatprep.subr.bf16.mxu0 0
      %478 = vmatpush1.bf16.msra.mxu0 0
      %479 = vmatprep.subr.bf16.mxu0 0
      %480 = vmatpush1.bf16.msra.mxu0 0
      %481 = vmatprep.subr.bf16.mxu0 0
      %482 = vmatpush1.bf16.msra.mxu0 0
      %483 = vmatprep.subr.bf16.mxu0 0
      %484 = vmatpush1.bf16.msra.mxu0 0
      %485 = vmatprep.subr.bf16.mxu0 0
      %486 = vmatpush1.bf16.msra.mxu0 0
      %487 = vmatprep.subr.bf16.mxu0 0
      %488 = vmatpush1.bf16.msra.mxu0 0
      %489 = vmatprep.subr.bf16.mxu0 0
      %490 = vmatpush1.bf16.msra.mxu0 0
      %491 = vmatprep.subr.bf16.mxu0 0
      %492 = vmatpush1.bf16.msra.mxu0 0
      %493 = vmatprep.mubr.bf16.mxu0 0
      %494 = vmatmul.mubr.bf16.gmra.mrb[0].mxu0 %v397
      %v495 = vpop.f32.mrb[0].mxu0
      %v496 = vadd.f32 0.0, %v495
      %v497 = vpop.f32.mrb[0].mxu0
      %v498 = vpop.f32.mrb[0].mxu0
      %v499 = vadd.f32 0.0, %v498
      %v500 = vpop.f32.mrb[0].mxu0
      %501 = vmatprep.mubr.bf16.mxu0 0
      %502 = vmatmul.mubr.bf16.gmra.mrb[0].mxu0 %v398
      %v503 = vpop.f32.mrb[0].mxu0
      %v504 = vadd.f32 0.0, %v503
      %v505 = vpop.f32.mrb[0].mxu0
      %v506 = vpop.f32.mrb[0].mxu0
      %v507 = vadd.f32 0.0, %v506
      %v508 = vpop.f32.mrb[0].mxu0
      %509 = vmatprep.mubr.bf16.mxu0 0
      %510 = vmatmul.mubr.bf16.gmra.mrb[0].mxu0 %v399
      %v511 = vpop.f32.mrb[0].mxu0
      %v512 = vadd.f32 0.0, %v511
      %v513 = vpop.f32.mrb[0].mxu0
      %v514 = vpop.f32.mrb[0].mxu0
      %v515 = vadd.f32 0.0, %v514
      %v516 = vpop.f32.mrb[0].mxu0
      %517 = vmatprep.mubr.bf16.mxu0 0
      %518 = vmatmul.mubr.bf16.gmra.mrb[0].mxu0 %v400
      %v519 = vpop.f32.mrb[0].mxu0
      %v520 = vadd.f32 0.0, %v519
      %v521 = vpop.f32.mrb[0].mxu0
      %v522 = vpop.f32.mrb[0].mxu0
      %v523 = vadd.f32 0.0, %v522
      %v524 = vpop.f32.mrb[0].mxu0
      %525 = vmatprep.mubr.bf16.mxu0 0
      %526 = vmatmul.mubr.bf16.gmra.mrb[0].mxu0 %v401
      %v527 = vpop.f32.mrb[0].mxu0
      %v528 = vadd.f32 0.0, %v527
      %v529 = vpop.f32.mrb[0].mxu0
      %v530 = vpop.f32.mrb[0].mxu0
      %v531 = vadd.f32 0.0, %v530
      %v532 = vpop.f32.mrb[0].mxu0
      %533 = vmatprep.mubr.bf16.mxu0 0
      %534 = vmatmul.mubr.bf16.gmra.mrb[0].mxu0 %v402
      %v535 = vpop.f32.mrb[0].mxu0
      %v536 = vadd.f32 0.0, %v535
      %v537 = vpop.f32.mrb[0].mxu0
      %v538 = vpop.f32.mrb[0].mxu0
      %v539 = vadd.f32 0.0, %v538
      %v540 = vpop.f32.mrb[0].mxu0
      %541 = vmatprep.mubr.bf16.mxu0 0
      %542 = vmatmul.mubr.bf16.gmra.mrb[0].mxu0 %v403
      %v543 = vpop.f32.mrb[0].mxu0
      %v544 = vadd.f32 0.0, %v543
      %v545 = vpop.f32.mrb[0].mxu0
      %v546 = vpop.f32.mrb[0].mxu0
      %v547 = vadd.f32 0.0, %v546
      %v548 = vpop.f32.mrb[0].mxu0
      %549 = vmatprep.mubr.bf16.mxu0 0
      %550 = vmatmul.mubr.bf16.gmra.mrb[0].mxu0 %v404
      %v551 = vpop.f32.mrb[0].mxu0
      %v552 = vadd.f32 0.0, %v551
      %v553 = vpop.f32.mrb[0].mxu0
      %v554 = vpop.f32.mrb[0].mxu0
      %v555 = vadd.f32 0.0, %v554
      %v556 = vpop.f32.mrb[0].mxu0
      %557 = vdwg.mxu0
      %v574 = vunpack.c.l.b16 %v299
      %v575 = vunpack.c.l.b16 %v300
      %v576 = vunpack.c.l.b16 %v301
      %v577 = vunpack.c.l.b16 %v302
      %v578 = vunpack.c.l.b16 %v303
      %v579 = vunpack.c.l.b16 %v304
      %v580 = vunpack.c.l.b16 %v305
      %v581 = vunpack.c.l.b16 %v306
      %v582 = vunpack.c.l.b16 %v307
      %v583 = vunpack.c.l.b16 %v308
      %v584 = vunpack.c.l.b16 %v309
      %v585 = vunpack.c.l.b16 %v310
      %v586 = vunpack.c.l.b16 %v311
      %v587 = vunpack.c.l.b16 %v312
      %v588 = vunpack.c.l.b16 %v313
      %v589 = vunpack.c.l.b16 %v314
      %v590 = vpack.c.b16 %v575, %v574
      %v591 = vpack.c.b16 %v577, %v576
      %v592 = vpack.c.b16 %v579, %v578
      %v593 = vpack.c.b16 %v581, %v580
      %v594 = vpack.c.b16 %v583, %v582
      %v595 = vpack.c.b16 %v585, %v584
      %v596 = vpack.c.b16 %v587, %v586
      %v597 = vpack.c.b16 %v589, %v588
      %v622 = vunpack.c.l.b16 %v315
      %v623 = vunpack.c.l.b16 %v316
      %v624 = vunpack.c.l.b16 %v317
      %v625 = vunpack.c.l.b16 %v318
      %v626 = vunpack.c.l.b16 %v319
      %v627 = vunpack.c.l.b16 %v320
      %v628 = vunpack.c.l.b16 %v321
      %v629 = vunpack.c.l.b16 %v322
      %v630 = vunpack.c.l.b16 %v323
      %v631 = vunpack.c.l.b16 %v324
      %v632 = vunpack.c.l.b16 %v325
      %v633 = vunpack.c.l.b16 %v326
      %v634 = vunpack.c.l.b16 %v327
      %v635 = vunpack.c.l.b16 %v328
      %v636 = vunpack.c.l.b16 %v329
      %v637 = vunpack.c.l.b16 %v330
      %v638 = vpack.c.b16 %v623, %v622
      %v639 = vpack.c.b16 %v625, %v624
      %v640 = vpack.c.b16 %v627, %v626
      %v641 = vpack.c.b16 %v629, %v628
      %v642 = vpack.c.b16 %v631, %v630
      %v643 = vpack.c.b16 %v633, %v632
      %v644 = vpack.c.b16 %v635, %v634
      %v645 = vpack.c.b16 %v637, %v636
      %654 = vmatprep.subr.bf16.mxu0 0
      %655 = vmatpush1.bf16.msra.mxu0 %v638
      %656 = vmatprep.subr.bf16.mxu0 0
      %657 = vmatpush1.bf16.msra.mxu0 %v639
      %658 = vmatprep.subr.bf16.mxu0 0
      %659 = vmatpush1.bf16.msra.mxu0 %v640
      %660 = vmatprep.subr.bf16.mxu0 0
      %661 = vmatpush1.bf16.msra.mxu0 %v641
      %662 = vmatprep.subr.bf16.mxu0 0
      %663 = vmatpush1.bf16.msra.mxu0 %v642
      %664 = vmatprep.subr.bf16.mxu0 0
      %665 = vmatpush1.bf16.msra.mxu0 %v643
      %666 = vmatprep.subr.bf16.mxu0 0
      %667 = vmatpush1.bf16.msra.mxu0 %v644
      %668 = vmatprep.subr.bf16.mxu0 0
      %669 = vmatpush1.bf16.msra.mxu0 %v645
      %670 = vmatprep.subr.bf16.mxu0 0
      %671 = vmatpush1.bf16.msra.mxu0 0
      %672 = vmatprep.subr.bf16.mxu0 0
      %673 = vmatpush1.bf16.msra.mxu0 0
      %674 = vmatprep.subr.bf16.mxu0 0
      %675 = vmatpush1.bf16.msra.mxu0 0
      %676 = vmatprep.subr.bf16.mxu0 0
      %677 = vmatpush1.bf16.msra.mxu0 0
      %678 = vmatprep.subr.bf16.mxu0 0
      %679 = vmatpush1.bf16.msra.mxu0 0
      %680 = vmatprep.subr.bf16.mxu0 0
      %681 = vmatpush1.bf16.msra.mxu0 0
      %682 = vmatprep.subr.bf16.mxu0 0
      %683 = vmatpush1.bf16.msra.mxu0 0
      %684 = vmatprep.subr.bf16.mxu0 0
      %685 = vmatpush1.bf16.msra.mxu0 0
      %686 = vmatprep.mubr.bf16.mxu0 0
      %687 = vmatmul.mubr.bf16.gmra.mrb[0].mxu0 %v590
      %v688 = vpop.f32.mrb[0].mxu0
      %v689 = vadd.f32 %v496, %v688
      %v690 = vpop.f32.mrb[0].mxu0
      %v691 = vpop.f32.mrb[0].mxu0
      %v692 = vadd.f32 %v499, %v691
      %v693 = vpop.f32.mrb[0].mxu0
      %694 = vmatprep.mubr.bf16.mxu0 0
      %695 = vmatmul.mubr.bf16.gmra.mrb[0].mxu0 %v591
      %v696 = vpop.f32.mrb[0].mxu0
      %v697 = vadd.f32 %v504, %v696
      %v698 = vpop.f32.mrb[0].mxu0
      %v699 = vpop.f32.mrb[0].mxu0
      %v700 = vadd.f32 %v507, %v699
      %v701 = vpop.f32.mrb[0].mxu0
      %702 = vmatprep.mubr.bf16.mxu0 0
      %703 = vmatmul.mubr.bf16.gmra.mrb[0].mxu0 %v592
      %v704 = vpop.f32.mrb[0].mxu0
      %v705 = vadd.f32 %v512, %v704
      %v706 = vpop.f32.mrb[0].mxu0
      %v707 = vpop.f32.mrb[0].mxu0
      %v708 = vadd.f32 %v515, %v707
      %v709 = vpop.f32.mrb[0].mxu0
      %710 = vmatprep.mubr.bf16.mxu0 0
      %711 = vmatmul.mubr.bf16.gmra.mrb[0].mxu0 %v593
      %v712 = vpop.f32.mrb[0].mxu0
      %v713 = vadd.f32 %v520, %v712
      %v714 = vpop.f32.mrb[0].mxu0
      %v715 = vpop.f32.mrb[0].mxu0
      %v716 = vadd.f32 %v523, %v715
      %v717 = vpop.f32.mrb[0].mxu0
      %718 = vmatprep.mubr.bf16.mxu0 0
      %719 = vmatmul.mubr.bf16.gmra.mrb[0].mxu0 %v594
      %v720 = vpop.f32.mrb[0].mxu0
      %v721 = vadd.f32 %v528, %v720
      %v722 = vpop.f32.mrb[0].mxu0
      %v723 = vpop.f32.mrb[0].mxu0
      %v724 = vadd.f32 %v531, %v723
      %v725 = vpop.f32.mrb[0].mxu0
      %726 = vmatprep.mubr.bf16.mxu0 0
      %727 = vmatmul.mubr.bf16.gmra.mrb[0].mxu0 %v595
      %v728 = vpop.f32.mrb[0].mxu0
      %v729 = vadd.f32 %v536, %v728
      %v730 = vpop.f32.mrb[0].mxu0
      %v731 = vpop.f32.mrb[0].mxu0
      %v732 = vadd.f32 %v539, %v731
      %v733 = vpop.f32.mrb[0].mxu0
      %734 = vmatprep.mubr.bf16.mxu0 0
      %735 = vmatmul.mubr.bf16.gmra.mrb[0].mxu0 %v596
      %v736 = vpop.f32.mrb[0].mxu0
      %v737 = vadd.f32 %v544, %v736
      %v738 = vpop.f32.mrb[0].mxu0
      %v739 = vpop.f32.mrb[0].mxu0
      %v740 = vadd.f32 %v547, %v739
      %v741 = vpop.f32.mrb[0].mxu0
      %742 = vmatprep.mubr.bf16.mxu0 0
      %743 = vmatmul.mubr.bf16.gmra.mrb[0].mxu0 %v597
      %v744 = vpop.f32.mrb[0].mxu0
      %v745 = vadd.f32 %v552, %v744
      %v746 = vpop.f32.mrb[0].mxu0
      %v747 = vpop.f32.mrb[0].mxu0
      %v748 = vadd.f32 %v555, %v747
      %v749 = vpop.f32.mrb[0].mxu0
      %750 = vdwg.mxu0
      %v751 = vld [vmem:[%s281] sm:$0xf]
      %v752 = vld [vmem:[%s281 + $0x4] sm:$0xf]
      %v753 = vld [vmem:[%s281 + $0x8] sm:$0xf]
      %v754 = vld [vmem:[%s281 + $0xc] sm:$0xf]
      %v755 = vld [vmem:[%s281 + $0x10] sm:$0xf]
      %v756 = vld [vmem:[%s281 + $0x14] sm:$0xf]
      %v757 = vld [vmem:[%s281 + $0x18] sm:$0xf]
      %v758 = vld [vmem:[%s281 + $0x1c] sm:$0xf]
      %v759 = vld [vmem:[%s281 + $0x20] sm:$0xf]
      %v760 = vld [vmem:[%s281 + $0x24] sm:$0xf]
      %v761 = vld [vmem:[%s281 + $0x28] sm:$0xf]
      %v762 = vld [vmem:[%s281 + $0x2c] sm:$0xf]
      %v763 = vld [vmem:[%s281 + $0x30] sm:$0xf]
      %v764 = vld [vmem:[%s281 + $0x34] sm:$0xf]
      %v765 = vld [vmem:[%s281 + $0x38] sm:$0xf]
      %v766 = vld [vmem:[%s281 + $0x3c] sm:$0xf]
      %v767 = vld [vmem:[%s281 + $0x40] sm:$0x1]
      %s768 = scalar_lea.vmem %s2, 128
      %v769 = vld [vmem:[%s768] sm:$0xf]
      %v770 = vld [vmem:[%s768 + $0x4] sm:$0xf]
      %v771 = vld [vmem:[%s768 + $0x8] sm:$0xf]
      %v772 = vld [vmem:[%s768 + $0xc] sm:$0xf]
      %v773 = vld [vmem:[%s768 + $0x10] sm:$0xf]
      %v774 = vld [vmem:[%s768 + $0x14] sm:$0xf]
      %v775 = vld [vmem:[%s768 + $0x18] sm:$0xf]
      %v776 = vld [vmem:[%s768 + $0x1c] sm:$0xf]
      %v777 = vld [vmem:[%s768 + $0x20] sm:$0xf]
      %v778 = vld [vmem:[%s768 + $0x24] sm:$0xf]
      %v779 = vld [vmem:[%s768 + $0x28] sm:$0xf]
      %v780 = vld [vmem:[%s768 + $0x2c] sm:$0xf]
      %v781 = vld [vmem:[%s768 + $0x30] sm:$0xf]
      %v782 = vld [vmem:[%s768 + $0x34] sm:$0xf]
      %v783 = vld [vmem:[%s768 + $0x38] sm:$0xf]
      %v784 = vld [vmem:[%s768 + $0x3c] sm:$0xf]
      %v802 = vunpack.c.l.b16 %v751
      %v803 = vunpack.c.l.b16 %v752
      %v804 = vunpack.c.l.b16 %v753
      %v805 = vunpack.c.l.b16 %v754
      %v806 = vunpack.c.l.b16 %v755
      %v807 = vunpack.c.l.b16 %v756
      %v808 = vunpack.c.l.b16 %v757
      %v809 = vunpack.c.l.b16 %v758
      %v810 = vunpack.c.l.b16 %v759
      %v811 = vunpack.c.l.b16 %v760
      %v812 = vunpack.c.l.b16 %v761
      %v813 = vunpack.c.l.b16 %v762
      %v814 = vunpack.c.l.b16 %v763
      %v815 = vunpack.c.l.b16 %v764
      %v816 = vunpack.c.l.b16 %v765
      %v817 = vunpack.c.l.b16 %v766
      %v818 = vunpack.c.l.b16 %v767
      %v819 = vpack.c.b16 %v803, %v802
      %v820 = vpack.c.b16 %v805, %v804
      %v821 = vpack.c.b16 %v807, %v806
      %v822 = vpack.c.b16 %v809, %v808
      %v823 = vpack.c.b16 %v811, %v810
      %v824 = vpack.c.b16 %v813, %v812
      %v825 = vpack.c.b16 %v815, %v814
      %v826 = vpack.c.b16 %v817, %v816
      %v827 = vpack.c.b16 %v818, %v818
      %vm828 = vsmask.f32 7424
      %v830 = vshrl.u32 %v819, 16
      %v832 = vshll.u32 %v819, 16
      %v834 = vrot.slane %v832, 1
      %v835 = vor.u32 %v830, %v834
      %v837 = vshll.u32 %v820, 16
      %v839 = vrot.slane %v837, 1
      %v840 = vsel %vm828, %v835, %v839
      %v841 = vshrl.u32 %v820, 16
      %v843 = vor.u32 %v841, %v839
      %v845 = vshll.u32 %v821, 16
      %v847 = vrot.slane %v845, 1
      %v848 = vsel %vm828, %v843, %v847
      %v849 = vshrl.u32 %v821, 16
      %v851 = vor.u32 %v849, %v847
      %v853 = vshll.u32 %v822, 16
      %v855 = vrot.slane %v853, 1
      %v856 = vsel %vm828, %v851, %v855
      %v857 = vshrl.u32 %v822, 16
      %v859 = vor.u32 %v857, %v855
      %v861 = vshll.u32 %v823, 16
      %v863 = vrot.slane %v861, 1
      %v864 = vsel %vm828, %v859, %v863
      %v865 = vshrl.u32 %v823, 16
      %v867 = vor.u32 %v865, %v863
      %v869 = vshll.u32 %v824, 16
      %v871 = vrot.slane %v869, 1
      %v872 = vsel %vm828, %v867, %v871
      %v873 = vshrl.u32 %v824, 16
      %v875 = vor.u32 %v873, %v871
      %v877 = vshll.u32 %v825, 16
      %v879 = vrot.slane %v877, 1
      %v880 = vsel %vm828, %v875, %v879
      %v881 = vshrl.u32 %v825, 16
      %v883 = vor.u32 %v881, %v879
      %v885 = vshll.u32 %v826, 16
      %v887 = vrot.slane %v885, 1
      %v888 = vsel %vm828, %v883, %v887
      %v889 = vshrl.u32 %v826, 16
      %v891 = vor.u32 %v889, %v887
      %v893 = vshll.u32 %v827, 16
      %v895 = vrot.slane %v893, 1
      %v896 = vsel %vm828, %v891, %v895
      %v921 = vunpack.c.l.b16 %v769
      %v922 = vunpack.c.l.b16 %v770
      %v923 = vunpack.c.l.b16 %v771
      %v924 = vunpack.c.l.b16 %v772
      %v925 = vunpack.c.l.b16 %v773
      %v926 = vunpack.c.l.b16 %v774
      %v927 = vunpack.c.l.b16 %v775
      %v928 = vunpack.c.l.b16 %v776
      %v929 = vunpack.c.l.b16 %v777
      %v930 = vunpack.c.l.b16 %v778
      %v931 = vunpack.c.l.b16 %v779
      %v932 = vunpack.c.l.b16 %v780
      %v933 = vunpack.c.l.b16 %v781
      %v934 = vunpack.c.l.b16 %v782
      %v935 = vunpack.c.l.b16 %v783
      %v936 = vunpack.c.l.b16 %v784
      %v937 = vpack.c.b16 %v922, %v921
      %v938 = vpack.c.b16 %v924, %v923
      %v939 = vpack.c.b16 %v926, %v925
      %v940 = vpack.c.b16 %v928, %v927
      %v941 = vpack.c.b16 %v930, %v929
      %v942 = vpack.c.b16 %v932, %v931
      %v943 = vpack.c.b16 %v934, %v933
      %v944 = vpack.c.b16 %v936, %v935
      %953 = vmatprep.subr.bf16.mxu0 0
      %954 = vmatpush1.bf16.msra.mxu0 %v937
      %955 = vmatprep.subr.bf16.mxu0 0
      %956 = vmatpush1.bf16.msra.mxu0 %v938
      %957 = vmatprep.subr.bf16.mxu0 0
      %958 = vmatpush1.bf16.msra.mxu0 %v939
      %959 = vmatprep.subr.bf16.mxu0 0
      %960 = vmatpush1.bf16.msra.mxu0 %v940
      %961 = vmatprep.subr.bf16.mxu0 0
      %962 = vmatpush1.bf16.msra.mxu0 %v941
      %963 = vmatprep.subr.bf16.mxu0 0
      %964 = vmatpush1.bf16.msra.mxu0 %v942
      %965 = vmatprep.subr.bf16.mxu0 0
      %966 = vmatpush1.bf16.msra.mxu0 %v943
      %967 = vmatprep.subr.bf16.mxu0 0
      %968 = vmatpush1.bf16.msra.mxu0 %v944
      %969 = vmatprep.subr.bf16.mxu0 0
      %970 = vmatpush1.bf16.msra.mxu0 0
      %971 = vmatprep.subr.bf16.mxu0 0
      %972 = vmatpush1.bf16.msra.mxu0 0
      %973 = vmatprep.subr.bf16.mxu0 0
      %974 = vmatpush1.bf16.msra.mxu0 0
      %975 = vmatprep.subr.bf16.mxu0 0
      %976 = vmatpush1.bf16.msra.mxu0 0
      %977 = vmatprep.subr.bf16.mxu0 0
      %978 = vmatpush1.bf16.msra.mxu0 0
      %979 = vmatprep.subr.bf16.mxu0 0
      %980 = vmatpush1.bf16.msra.mxu0 0
      %981 = vmatprep.subr.bf16.mxu0 0
      %982 = vmatpush1.bf16.msra.mxu0 0
      %983 = vmatprep.subr.bf16.mxu0 0
      %984 = vmatpush1.bf16.msra.mxu0 0
      %985 = vmatprep.mubr.bf16.mxu0 0
      %986 = vmatmul.mubr.bf16.gmra.mrb[0].mxu0 %v840
      %v987 = vpop.f32.mrb[0].mxu0
      %v988 = vadd.f32 0.0, %v987
      %v989 = vpop.f32.mrb[0].mxu0
      %v990 = vpop.f32.mrb[0].mxu0
      %v991 = vadd.f32 0.0, %v990
      %v992 = vpop.f32.mrb[0].mxu0
      %993 = vmatprep.mubr.bf16.mxu0 0
      %994 = vmatmul.mubr.bf16.gmra.mrb[0].mxu0 %v848
      %v995 = vpop.f32.mrb[0].mxu0
      %v996 = vadd.f32 0.0, %v995
      %v997 = vpop.f32.mrb[0].mxu0
      %v998 = vpop.f32.mrb[0].mxu0
      %v999 = vadd.f32 0.0, %v998
      %v1000 = vpop.f32.mrb[0].mxu0
      %1001 = vmatprep.mubr.bf16.mxu0 0
      %1002 = vmatmul.mubr.bf16.gmra.mrb[0].mxu0 %v856
      %v1003 = vpop.f32.mrb[0].mxu0
      %v1004 = vadd.f32 0.0, %v1003
      %v1005 = vpop.f32.mrb[0].mxu0
      %v1006 = vpop.f32.mrb[0].mxu0
      %v1007 = vadd.f32 0.0, %v1006
      %v1008 = vpop.f32.mrb[0].mxu0
      %1009 = vmatprep.mubr.bf16.mxu0 0
      %1010 = vmatmul.mubr.bf16.gmra.mrb[0].mxu0 %v864
      %v1011 = vpop.f32.mrb[0].mxu0
      %v1012 = vadd.f32 0.0, %v1011
      %v1013 = vpop.f32.mrb[0].mxu0
      %v1014 = vpop.f32.mrb[0].mxu0
      %v1015 = vadd.f32 0.0, %v1014
      %v1016 = vpop.f32.mrb[0].mxu0
      %1017 = vmatprep.mubr.bf16.mxu0 0
      %1018 = vmatmul.mubr.bf16.gmra.mrb[0].mxu0 %v872
      %v1019 = vpop.f32.mrb[0].mxu0
      %v1020 = vadd.f32 0.0, %v1019
      %v1021 = vpop.f32.mrb[0].mxu0
      %v1022 = vpop.f32.mrb[0].mxu0
      %v1023 = vadd.f32 0.0, %v1022
      %v1024 = vpop.f32.mrb[0].mxu0
      %1025 = vmatprep.mubr.bf16.mxu0 0
      %1026 = vmatmul.mubr.bf16.gmra.mrb[0].mxu0 %v880
      %v1027 = vpop.f32.mrb[0].mxu0
      %v1028 = vadd.f32 0.0, %v1027
      %v1029 = vpop.f32.mrb[0].mxu0
      %v1030 = vpop.f32.mrb[0].mxu0
      %v1031 = vadd.f32 0.0, %v1030
      %v1032 = vpop.f32.mrb[0].mxu0
      %1033 = vmatprep.mubr.bf16.mxu0 0
      %1034 = vmatmul.mubr.bf16.gmra.mrb[0].mxu0 %v888
      %v1035 = vpop.f32.mrb[0].mxu0
      %v1036 = vadd.f32 0.0, %v1035
      %v1037 = vpop.f32.mrb[0].mxu0
      %v1038 = vpop.f32.mrb[0].mxu0
      %v1039 = vadd.f32 0.0, %v1038
      %v1040 = vpop.f32.mrb[0].mxu0
      %1041 = vmatprep.mubr.bf16.mxu0 0
      %1042 = vmatmul.mubr.bf16.gmra.mrb[0].mxu0 %v896
      %v1043 = vpop.f32.mrb[0].mxu0
      %v1044 = vadd.f32 0.0, %v1043
      %v1045 = vpop.f32.mrb[0].mxu0
      %v1046 = vpop.f32.mrb[0].mxu0
      %v1047 = vadd.f32 0.0, %v1046
      %v1048 = vpop.f32.mrb[0].mxu0
      %1049 = vdwg.mxu0
      %v1050 = vadd.f32 %v689, %v988
      %v1051 = vadd.f32 %v692, %v991
      %v1052 = vadd.f32 %v697, %v996
      %v1053 = vadd.f32 %v700, %v999
      %v1054 = vadd.f32 %v705, %v1004
      %v1055 = vadd.f32 %v708, %v1007
      %v1056 = vadd.f32 %v713, %v1012
      %v1057 = vadd.f32 %v716, %v1015
      %v1058 = vadd.f32 %v721, %v1020
      %v1059 = vadd.f32 %v724, %v1023
      %v1060 = vadd.f32 %v729, %v1028
      %v1061 = vadd.f32 %v732, %v1031
      %v1062 = vadd.f32 %v737, %v1036
      %v1063 = vadd.f32 %v740, %v1039
      %v1064 = vadd.f32 %v745, %v1044
      %v1065 = vadd.f32 %v748, %v1047
      %s1066 = scalar_lea.vmem %s281, 152
      %v1067 = vld [vmem:[%s1066] sm:$0xf]
      %v1068 = vld [vmem:[%s1066 + $0x4] sm:$0xf]
      %v1069 = vld [vmem:[%s1066 + $0x8] sm:$0xf]
      %v1070 = vld [vmem:[%s1066 + $0xc] sm:$0xf]
      %v1071 = vld [vmem:[%s1066 + $0x10] sm:$0xf]
      %v1072 = vld [vmem:[%s1066 + $0x14] sm:$0xf]
      %v1073 = vld [vmem:[%s1066 + $0x18] sm:$0xf]
      %v1074 = vld [vmem:[%s1066 + $0x1c] sm:$0xf]
      %v1075 = vld [vmem:[%s1066 + $0x20] sm:$0xf]
      %v1076 = vld [vmem:[%s1066 + $0x24] sm:$0xf]
      %v1077 = vld [vmem:[%s1066 + $0x28] sm:$0xf]
      %v1078 = vld [vmem:[%s1066 + $0x2c] sm:$0xf]
      %v1079 = vld [vmem:[%s1066 + $0x30] sm:$0xf]
      %v1080 = vld [vmem:[%s1066 + $0x34] sm:$0xf]
      %v1081 = vld [vmem:[%s1066 + $0x38] sm:$0xf]
      %v1082 = vld [vmem:[%s1066 + $0x3c] sm:$0xf]
      %s1083 = scalar_lea.vmem %s2, 192
      %v1084 = vld [vmem:[%s1083] sm:$0xf]
      %v1085 = vld [vmem:[%s1083 + $0x4] sm:$0xf]
      %v1086 = vld [vmem:[%s1083 + $0x8] sm:$0xf]
      %v1087 = vld [vmem:[%s1083 + $0xc] sm:$0xf]
      %v1088 = vld [vmem:[%s1083 + $0x10] sm:$0xf]
      %v1089 = vld [vmem:[%s1083 + $0x14] sm:$0xf]
      %v1090 = vld [vmem:[%s1083 + $0x18] sm:$0xf]
      %v1091 = vld [vmem:[%s1083 + $0x1c] sm:$0xf]
      %v1092 = vld [vmem:[%s1083 + $0x20] sm:$0xf]
      %v1093 = vld [vmem:[%s1083 + $0x24] sm:$0xf]
      %v1094 = vld [vmem:[%s1083 + $0x28] sm:$0xf]
      %v1095 = vld [vmem:[%s1083 + $0x2c] sm:$0xf]
      %v1096 = vld [vmem:[%s1083 + $0x30] sm:$0xf]
      %v1097 = vld [vmem:[%s1083 + $0x34] sm:$0xf]
      %v1098 = vld [vmem:[%s1083 + $0x38] sm:$0xf]
      %v1099 = vld [vmem:[%s1083 + $0x3c] sm:$0xf]
      %v1116 = vunpack.c.l.b16 %v1067
      %v1117 = vunpack.c.l.b16 %v1068
      %v1118 = vunpack.c.l.b16 %v1069
      %v1119 = vunpack.c.l.b16 %v1070
      %v1120 = vunpack.c.l.b16 %v1071
      %v1121 = vunpack.c.l.b16 %v1072
      %v1122 = vunpack.c.l.b16 %v1073
      %v1123 = vunpack.c.l.b16 %v1074
      %v1124 = vunpack.c.l.b16 %v1075
      %v1125 = vunpack.c.l.b16 %v1076
      %v1126 = vunpack.c.l.b16 %v1077
      %v1127 = vunpack.c.l.b16 %v1078
      %v1128 = vunpack.c.l.b16 %v1079
      %v1129 = vunpack.c.l.b16 %v1080
      %v1130 = vunpack.c.l.b16 %v1081
      %v1131 = vunpack.c.l.b16 %v1082
      %v1132 = vpack.c.b16 %v1117, %v1116
      %v1133 = vpack.c.b16 %v1119, %v1118
      %v1134 = vpack.c.b16 %v1121, %v1120
      %v1135 = vpack.c.b16 %v1123, %v1122
      %v1136 = vpack.c.b16 %v1125, %v1124
      %v1137 = vpack.c.b16 %v1127, %v1126
      %v1138 = vpack.c.b16 %v1129, %v1128
      %v1139 = vpack.c.b16 %v1131, %v1130
      %v1164 = vunpack.c.l.b16 %v1084
      %v1165 = vunpack.c.l.b16 %v1085
      %v1166 = vunpack.c.l.b16 %v1086
      %v1167 = vunpack.c.l.b16 %v1087
      %v1168 = vunpack.c.l.b16 %v1088
      %v1169 = vunpack.c.l.b16 %v1089
      %v1170 = vunpack.c.l.b16 %v1090
      %v1171 = vunpack.c.l.b16 %v1091
      %v1172 = vunpack.c.l.b16 %v1092
      %v1173 = vunpack.c.l.b16 %v1093
      %v1174 = vunpack.c.l.b16 %v1094
      %v1175 = vunpack.c.l.b16 %v1095
      %v1176 = vunpack.c.l.b16 %v1096
      %v1177 = vunpack.c.l.b16 %v1097
      %v1178 = vunpack.c.l.b16 %v1098
      %v1179 = vunpack.c.l.b16 %v1099
      %v1180 = vpack.c.b16 %v1165, %v1164
      %v1181 = vpack.c.b16 %v1167, %v1166
      %v1182 = vpack.c.b16 %v1169, %v1168
      %v1183 = vpack.c.b16 %v1171, %v1170
      %v1184 = vpack.c.b16 %v1173, %v1172
      %v1185 = vpack.c.b16 %v1175, %v1174
      %v1186 = vpack.c.b16 %v1177, %v1176
      %v1187 = vpack.c.b16 %v1179, %v1178
      %1196 = vmatprep.subr.bf16.mxu0 0
      %1197 = vmatpush1.bf16.msra.mxu0 %v1180
      %1198 = vmatprep.subr.bf16.mxu0 0
      %1199 = vmatpush1.bf16.msra.mxu0 %v1181
      %1200 = vmatprep.subr.bf16.mxu0 0
      %1201 = vmatpush1.bf16.msra.mxu0 %v1182
      %1202 = vmatprep.subr.bf16.mxu0 0
      %1203 = vmatpush1.bf16.msra.mxu0 %v1183
      %1204 = vmatprep.subr.bf16.mxu0 0
      %1205 = vmatpush1.bf16.msra.mxu0 %v1184
      %1206 = vmatprep.subr.bf16.mxu0 0
      %1207 = vmatpush1.bf16.msra.mxu0 %v1185
      %1208 = vmatprep.subr.bf16.mxu0 0
      %1209 = vmatpush1.bf16.msra.mxu0 %v1186
      %1210 = vmatprep.subr.bf16.mxu0 0
      %1211 = vmatpush1.bf16.msra.mxu0 %v1187
      %1212 = vmatprep.subr.bf16.mxu0 0
      %1213 = vmatpush1.bf16.msra.mxu0 0
      %1214 = vmatprep.subr.bf16.mxu0 0
      %1215 = vmatpush1.bf16.msra.mxu0 0
      %1216 = vmatprep.subr.bf16.mxu0 0
      %1217 = vmatpush1.bf16.msra.mxu0 0
      %1218 = vmatprep.subr.bf16.mxu0 0
      %1219 = vmatpush1.bf16.msra.mxu0 0
      %1220 = vmatprep.subr.bf16.mxu0 0
      %1221 = vmatpush1.bf16.msra.mxu0 0
      %1222 = vmatprep.subr.bf16.mxu0 0
      %1223 = vmatpush1.bf16.msra.mxu0 0
      %1224 = vmatprep.subr.bf16.mxu0 0
      %1225 = vmatpush1.bf16.msra.mxu0 0
      %1226 = vmatprep.subr.bf16.mxu0 0
      %1227 = vmatpush1.bf16.msra.mxu0 0
      %1228 = vmatprep.mubr.bf16.mxu0 0
      %1229 = vmatmul.mubr.bf16.gmra.mrb[0].mxu0 %v1132
      %v1230 = vpop.f32.mrb[0].mxu0
      %v1231 = vadd.f32 0.0, %v1230
      %v1232 = vpop.f32.mrb[0].mxu0
      %v1233 = vpop.f32.mrb[0].mxu0
      %v1234 = vadd.f32 0.0, %v1233
      %v1235 = vpop.f32.mrb[0].mxu0
      %1236 = vmatprep.mubr.bf16.mxu0 0
      %1237 = vmatmul.mubr.bf16.gmra.mrb[0].mxu0 %v1133
      %v1238 = vpop.f32.mrb[0].mxu0
      %v1239 = vadd.f32 0.0, %v1238
      %v1240 = vpop.f32.mrb[0].mxu0
      %v1241 = vpop.f32.mrb[0].mxu0
      %v1242 = vadd.f32 0.0, %v1241
      %v1243 = vpop.f32.mrb[0].mxu0
      %1244 = vmatprep.mubr.bf16.mxu0 0
      %1245 = vmatmul.mubr.bf16.gmra.mrb[0].mxu0 %v1134
      %v1246 = vpop.f32.mrb[0].mxu0
      %v1247 = vadd.f32 0.0, %v1246
      %v1248 = vpop.f32.mrb[0].mxu0
      %v1249 = vpop.f32.mrb[0].mxu0
      %v1250 = vadd.f32 0.0, %v1249
      %v1251 = vpop.f32.mrb[0].mxu0
      %1252 = vmatprep.mubr.bf16.mxu0 0
      %1253 = vmatmul.mubr.bf16.gmra.mrb[0].mxu0 %v1135
      %v1254 = vpop.f32.mrb[0].mxu0
      %v1255 = vadd.f32 0.0, %v1254
      %v1256 = vpop.f32.mrb[0].mxu0
      %v1257 = vpop.f32.mrb[0].mxu0
      %v1258 = vadd.f32 0.0, %v1257
      %v1259 = vpop.f32.mrb[0].mxu0
      %1260 = vmatprep.mubr.bf16.mxu0 0
      %1261 = vmatmul.mubr.bf16.gmra.mrb[0].mxu0 %v1136
      %v1262 = vpop.f32.mrb[0].mxu0
      %v1263 = vadd.f32 0.0, %v1262
      %v1264 = vpop.f32.mrb[0].mxu0
      %v1265 = vpop.f32.mrb[0].mxu0
      %v1266 = vadd.f32 0.0, %v1265
      %v1267 = vpop.f32.mrb[0].mxu0
      %1268 = vmatprep.mubr.bf16.mxu0 0
      %1269 = vmatmul.mubr.bf16.gmra.mrb[0].mxu0 %v1137
      %v1270 = vpop.f32.mrb[0].mxu0
      %v1271 = vadd.f32 0.0, %v1270
      %v1272 = vpop.f32.mrb[0].mxu0
      %v1273 = vpop.f32.mrb[0].mxu0
      %v1274 = vadd.f32 0.0, %v1273
      %v1275 = vpop.f32.mrb[0].mxu0
      %1276 = vmatprep.mubr.bf16.mxu0 0
      %1277 = vmatmul.mubr.bf16.gmra.mrb[0].mxu0 %v1138
      %v1278 = vpop.f32.mrb[0].mxu0
      %v1279 = vadd.f32 0.0, %v1278
      %v1280 = vpop.f32.mrb[0].mxu0
      %v1281 = vpop.f32.mrb[0].mxu0
      %v1282 = vadd.f32 0.0, %v1281
      %v1283 = vpop.f32.mrb[0].mxu0
      %1284 = vmatprep.mubr.bf16.mxu0 0
      %1285 = vmatmul.mubr.bf16.gmra.mrb[0].mxu0 %v1139
      %v1286 = vpop.f32.mrb[0].mxu0
      %v1287 = vadd.f32 0.0, %v1286
      %v1288 = vpop.f32.mrb[0].mxu0
      %v1289 = vpop.f32.mrb[0].mxu0
      %v1290 = vadd.f32 0.0, %v1289
      %v1291 = vpop.f32.mrb[0].mxu0
      %1292 = vdwg.mxu0
      %v1293 = vadd.f32 %v1050, %v1231
      %v1294 = vadd.f32 %v1051, %v1234
      %v1295 = vadd.f32 %v1052, %v1239
      %v1296 = vadd.f32 %v1053, %v1242
      %v1297 = vadd.f32 %v1054, %v1247
      %v1298 = vadd.f32 %v1055, %v1250
      %v1299 = vadd.f32 %v1056, %v1255
      %v1300 = vadd.f32 %v1057, %v1258
      %v1301 = vadd.f32 %v1058, %v1263
      %v1302 = vadd.f32 %v1059, %v1266
      %v1303 = vadd.f32 %v1060, %v1271
      %v1304 = vadd.f32 %v1061, %v1274
      %v1305 = vadd.f32 %v1062, %v1279
      %v1306 = vadd.f32 %v1063, %v1282
      %v1307 = vadd.f32 %v1064, %v1287
      %v1308 = vadd.f32 %v1065, %v1290
      %s1309 = scalar_lea.vmem %s281, 228
      %v1310 = vld [vmem:[%s1309] sm:$0xf]
      %v1311 = vld [vmem:[%s1309 + $0x4] sm:$0xf]
      %v1312 = vld [vmem:[%s1309 + $0x8] sm:$0xf]
      %v1313 = vld [vmem:[%s1309 + $0xc] sm:$0xf]
      %v1314 = vld [vmem:[%s1309 + $0x10] sm:$0xf]
      %v1315 = vld [vmem:[%s1309 + $0x14] sm:$0xf]
      %v1316 = vld [vmem:[%s1309 + $0x18] sm:$0xf]
      %v1317 = vld [vmem:[%s1309 + $0x1c] sm:$0xf]
      %v1318 = vld [vmem:[%s1309 + $0x20] sm:$0xf]
      %v1319 = vld [vmem:[%s1309 + $0x24] sm:$0xf]
      %v1320 = vld [vmem:[%s1309 + $0x28] sm:$0xf]
      %v1321 = vld [vmem:[%s1309 + $0x2c] sm:$0xf]
      %v1322 = vld [vmem:[%s1309 + $0x30] sm:$0xf]
      %v1323 = vld [vmem:[%s1309 + $0x34] sm:$0xf]
      %v1324 = vld [vmem:[%s1309 + $0x38] sm:$0xf]
      %v1325 = vld [vmem:[%s1309 + $0x3c] sm:$0xf]
      %s1326 = scalar_lea.vmem %s2, 256
      %v1327 = vld [vmem:[%s1326] sm:$0xf]
      %v1328 = vld [vmem:[%s1326 + $0x4] sm:$0xf]
      %v1329 = vld [vmem:[%s1326 + $0x8] sm:$0xf]
      %v1330 = vld [vmem:[%s1326 + $0xc] sm:$0xf]
      %v1331 = vld [vmem:[%s1326 + $0x10] sm:$0xf]
      %v1332 = vld [vmem:[%s1326 + $0x14] sm:$0xf]
      %v1333 = vld [vmem:[%s1326 + $0x18] sm:$0xf]
      %v1334 = vld [vmem:[%s1326 + $0x1c] sm:$0xf]
      %v1335 = vld [vmem:[%s1326 + $0x20] sm:$0xf]
      %v1336 = vld [vmem:[%s1326 + $0x24] sm:$0xf]
      %v1337 = vld [vmem:[%s1326 + $0x28] sm:$0xf]
      %v1338 = vld [vmem:[%s1326 + $0x2c] sm:$0xf]
      %v1339 = vld [vmem:[%s1326 + $0x30] sm:$0xf]
      %v1340 = vld [vmem:[%s1326 + $0x34] sm:$0xf]
      %v1341 = vld [vmem:[%s1326 + $0x38] sm:$0xf]
      %v1342 = vld [vmem:[%s1326 + $0x3c] sm:$0xf]
      %v1359 = vunpack.c.l.b16 %v1310
      %v1360 = vunpack.c.l.b16 %v1311
      %v1361 = vunpack.c.l.b16 %v1312
      %v1362 = vunpack.c.l.b16 %v1313
      %v1363 = vunpack.c.l.b16 %v1314
      %v1364 = vunpack.c.l.b16 %v1315
      %v1365 = vunpack.c.l.b16 %v1316
      %v1366 = vunpack.c.l.b16 %v1317
      %v1367 = vunpack.c.l.b16 %v1318
      %v1368 = vunpack.c.l.b16 %v1319
      %v1369 = vunpack.c.l.b16 %v1320
      %v1370 = vunpack.c.l.b16 %v1321
      %v1371 = vunpack.c.l.b16 %v1322
      %v1372 = vunpack.c.l.b16 %v1323
      %v1373 = vunpack.c.l.b16 %v1324
      %v1374 = vunpack.c.l.b16 %v1325
      %v1375 = vpack.c.b16 %v1360, %v1359
      %v1376 = vpack.c.b16 %v1362, %v1361
      %v1377 = vpack.c.b16 %v1364, %v1363
      %v1378 = vpack.c.b16 %v1366, %v1365
      %v1379 = vpack.c.b16 %v1368, %v1367
      %v1380 = vpack.c.b16 %v1370, %v1369
      %v1381 = vpack.c.b16 %v1372, %v1371
      %v1382 = vpack.c.b16 %v1374, %v1373
      %v1407 = vunpack.c.l.b16 %v1327
      %v1408 = vunpack.c.l.b16 %v1328
      %v1409 = vunpack.c.l.b16 %v1329
      %v1410 = vunpack.c.l.b16 %v1330
      %v1411 = vunpack.c.l.b16 %v1331
      %v1412 = vunpack.c.l.b16 %v1332
      %v1413 = vunpack.c.l.b16 %v1333
      %v1414 = vunpack.c.l.b16 %v1334
      %v1415 = vunpack.c.l.b16 %v1335
      %v1416 = vunpack.c.l.b16 %v1336
      %v1417 = vunpack.c.l.b16 %v1337
      %v1418 = vunpack.c.l.b16 %v1338
      %v1419 = vunpack.c.l.b16 %v1339
      %v1420 = vunpack.c.l.b16 %v1340
      %v1421 = vunpack.c.l.b16 %v1341
      %v1422 = vunpack.c.l.b16 %v1342
      %v1423 = vpack.c.b16 %v1408, %v1407
      %v1424 = vpack.c.b16 %v1410, %v1409
      %v1425 = vpack.c.b16 %v1412, %v1411
      %v1426 = vpack.c.b16 %v1414, %v1413
      %v1427 = vpack.c.b16 %v1416, %v1415
      %v1428 = vpack.c.b16 %v1418, %v1417
      %v1429 = vpack.c.b16 %v1420, %v1419
      %v1430 = vpack.c.b16 %v1422, %v1421
      %1439 = vmatprep.subr.bf16.mxu0 0
      %1440 = vmatpush1.bf16.msra.mxu0 %v1423
      %1441 = vmatprep.subr.bf16.mxu0 0
      %1442 = vmatpush1.bf16.msra.mxu0 %v1424
      %1443 = vmatprep.subr.bf16.mxu0 0
      %1444 = vmatpush1.bf16.msra.mxu0 %v1425
      %1445 = vmatprep.subr.bf16.mxu0 0
      %1446 = vmatpush1.bf16.msra.mxu0 %v1426
      %1447 = vmatprep.subr.bf16.mxu0 0
      %1448 = vmatpush1.bf16.msra.mxu0 %v1427
      %1449 = vmatprep.subr.bf16.mxu0 0
      %1450 = vmatpush1.bf16.msra.mxu0 %v1428
      %1451 = vmatprep.subr.bf16.mxu0 0
      %1452 = vmatpush1.bf16.msra.mxu0 %v1429
      %1453 = vmatprep.subr.bf16.mxu0 0
      %1454 = vmatpush1.bf16.msra.mxu0 %v1430
      %1455 = vmatprep.subr.bf16.mxu0 0
      %1456 = vmatpush1.bf16.msra.mxu0 0
      %1457 = vmatprep.subr.bf16.mxu0 0
      %1458 = vmatpush1.bf16.msra.mxu0 0
      %1459 = vmatprep.subr.bf16.mxu0 0
      %1460 = vmatpush1.bf16.msra.mxu0 0
      %1461 = vmatprep.subr.bf16.mxu0 0
      %1462 = vmatpush1.bf16.msra.mxu0 0
      %1463 = vmatprep.subr.bf16.mxu0 0
      %1464 = vmatpush1.bf16.msra.mxu0 0
      %1465 = vmatprep.subr.bf16.mxu0 0
      %1466 = vmatpush1.bf16.msra.mxu0 0
      %1467 = vmatprep.subr.bf16.mxu0 0
      %1468 = vmatpush1.bf16.msra.mxu0 0
      %1469 = vmatprep.subr.bf16.mxu0 0
      %1470 = vmatpush1.bf16.msra.mxu0 0
      %1471 = vmatprep.mubr.bf16.mxu0 0
      %1472 = vmatmul.mubr.bf16.gmra.mrb[0].mxu0 %v1375
      %v1473 = vpop.f32.mrb[0].mxu0
      %v1474 = vadd.f32 0.0, %v1473
      %v1475 = vpop.f32.mrb[0].mxu0
      %v1476 = vpop.f32.mrb[0].mxu0
      %v1477 = vadd.f32 0.0, %v1476
      %v1478 = vpop.f32.mrb[0].mxu0
      %1479 = vmatprep.mubr.bf16.mxu0 0
      %1480 = vmatmul.mubr.bf16.gmra.mrb[0].mxu0 %v1376
      %v1481 = vpop.f32.mrb[0].mxu0
      %v1482 = vadd.f32 0.0, %v1481
      %v1483 = vpop.f32.mrb[0].mxu0
      %v1484 = vpop.f32.mrb[0].mxu0
      %v1485 = vadd.f32 0.0, %v1484
      %v1486 = vpop.f32.mrb[0].mxu0
      %1487 = vmatprep.mubr.bf16.mxu0 0
      %1488 = vmatmul.mubr.bf16.gmra.mrb[0].mxu0 %v1377
      %v1489 = vpop.f32.mrb[0].mxu0
      %v1490 = vadd.f32 0.0, %v1489
      %v1491 = vpop.f32.mrb[0].mxu0
      %v1492 = vpop.f32.mrb[0].mxu0
      %v1493 = vadd.f32 0.0, %v1492
      %v1494 = vpop.f32.mrb[0].mxu0
      %1495 = vmatprep.mubr.bf16.mxu0 0
      %1496 = vmatmul.mubr.bf16.gmra.mrb[0].mxu0 %v1378
      %v1497 = vpop.f32.mrb[0].mxu0
      %v1498 = vadd.f32 0.0, %v1497
      %v1499 = vpop.f32.mrb[0].mxu0
      %v1500 = vpop.f32.mrb[0].mxu0
      %v1501 = vadd.f32 0.0, %v1500
      %v1502 = vpop.f32.mrb[0].mxu0
      %1503 = vmatprep.mubr.bf16.mxu0 0
      %1504 = vmatmul.mubr.bf16.gmra.mrb[0].mxu0 %v1379
      %v1505 = vpop.f32.mrb[0].mxu0
      %v1506 = vadd.f32 0.0, %v1505
      %v1507 = vpop.f32.mrb[0].mxu0
      %v1508 = vpop.f32.mrb[0].mxu0
      %v1509 = vadd.f32 0.0, %v1508
      %v1510 = vpop.f32.mrb[0].mxu0
      %1511 = vmatprep.mubr.bf16.mxu0 0
      %1512 = vmatmul.mubr.bf16.gmra.mrb[0].mxu0 %v1380
      %v1513 = vpop.f32.mrb[0].mxu0
      %v1514 = vadd.f32 0.0, %v1513
      %v1515 = vpop.f32.mrb[0].mxu0
      %v1516 = vpop.f32.mrb[0].mxu0
      %v1517 = vadd.f32 0.0, %v1516
      %v1518 = vpop.f32.mrb[0].mxu0
      %1519 = vmatprep.mubr.bf16.mxu0 0
      %1520 = vmatmul.mubr.bf16.gmra.mrb[0].mxu0 %v1381
      %v1521 = vpop.f32.mrb[0].mxu0
      %v1522 = vadd.f32 0.0, %v1521
      %v1523 = vpop.f32.mrb[0].mxu0
      %v1524 = vpop.f32.mrb[0].mxu0
      %v1525 = vadd.f32 0.0, %v1524
      %v1526 = vpop.f32.mrb[0].mxu0
      %1527 = vmatprep.mubr.bf16.mxu0 0
      %1528 = vmatmul.mubr.bf16.gmra.mrb[0].mxu0 %v1382
      %v1529 = vpop.f32.mrb[0].mxu0
      %v1530 = vadd.f32 0.0, %v1529
      %v1531 = vpop.f32.mrb[0].mxu0
      %v1532 = vpop.f32.mrb[0].mxu0
      %v1533 = vadd.f32 0.0, %v1532
      %v1534 = vpop.f32.mrb[0].mxu0
      %1535 = vdwg.mxu0
      %v1536 = vadd.f32 %v1293, %v1474
      %v1537 = vadd.f32 %v1294, %v1477
      %v1538 = vadd.f32 %v1295, %v1482
      %v1539 = vadd.f32 %v1296, %v1485
      %v1540 = vadd.f32 %v1297, %v1490
      %v1541 = vadd.f32 %v1298, %v1493
      %v1542 = vadd.f32 %v1299, %v1498
      %v1543 = vadd.f32 %v1300, %v1501
      %v1544 = vadd.f32 %v1301, %v1506
      %v1545 = vadd.f32 %v1302, %v1509
      %v1546 = vadd.f32 %v1303, %v1514
      %v1547 = vadd.f32 %v1304, %v1517
      %v1548 = vadd.f32 %v1305, %v1522
      %v1549 = vadd.f32 %v1306, %v1525
      %v1550 = vadd.f32 %v1307, %v1530
      %v1551 = vadd.f32 %v1308, %v1533
      %v1552 = vld [vmem:[%s1066] sm:$0xf]
      %v1553 = vld [vmem:[%s1066 + $0x4] sm:$0xf]
      %v1554 = vld [vmem:[%s1066 + $0x8] sm:$0xf]
      %v1555 = vld [vmem:[%s1066 + $0xc] sm:$0xf]
      %v1556 = vld [vmem:[%s1066 + $0x10] sm:$0xf]
      %v1557 = vld [vmem:[%s1066 + $0x14] sm:$0xf]
      %v1558 = vld [vmem:[%s1066 + $0x18] sm:$0xf]
      %v1559 = vld [vmem:[%s1066 + $0x1c] sm:$0xf]
      %v1560 = vld [vmem:[%s1066 + $0x20] sm:$0xf]
      %v1561 = vld [vmem:[%s1066 + $0x24] sm:$0xf]
      %v1562 = vld [vmem:[%s1066 + $0x28] sm:$0xf]
      %v1563 = vld [vmem:[%s1066 + $0x2c] sm:$0xf]
      %v1564 = vld [vmem:[%s1066 + $0x30] sm:$0xf]
      %v1565 = vld [vmem:[%s1066 + $0x34] sm:$0xf]
      %v1566 = vld [vmem:[%s1066 + $0x38] sm:$0xf]
      %v1567 = vld [vmem:[%s1066 + $0x3c] sm:$0xf]
      %v1568 = vld [vmem:[%s1066 + $0x40] sm:$0x1]
      %s1569 = scalar_lea.vmem %s2, 320
      %v1570 = vld [vmem:[%s1569] sm:$0xf]
      %v1571 = vld [vmem:[%s1569 + $0x4] sm:$0xf]
      %v1572 = vld [vmem:[%s1569 + $0x8] sm:$0xf]
      %v1573 = vld [vmem:[%s1569 + $0xc] sm:$0xf]
      %v1574 = vld [vmem:[%s1569 + $0x10] sm:$0xf]
      %v1575 = vld [vmem:[%s1569 + $0x14] sm:$0xf]
      %v1576 = vld [vmem:[%s1569 + $0x18] sm:$0xf]
      %v1577 = vld [vmem:[%s1569 + $0x1c] sm:$0xf]
      %v1578 = vld [vmem:[%s1569 + $0x20] sm:$0xf]
      %v1579 = vld [vmem:[%s1569 + $0x24] sm:$0xf]
      %v1580 = vld [vmem:[%s1569 + $0x28] sm:$0xf]
      %v1581 = vld [vmem:[%s1569 + $0x2c] sm:$0xf]
      %v1582 = vld [vmem:[%s1569 + $0x30] sm:$0xf]
      %v1583 = vld [vmem:[%s1569 + $0x34] sm:$0xf]
      %v1584 = vld [vmem:[%s1569 + $0x38] sm:$0xf]
      %v1585 = vld [vmem:[%s1569 + $0x3c] sm:$0xf]
      %v1603 = vunpack.c.l.b16 %v1552
      %v1604 = vunpack.c.l.b16 %v1553
      %v1605 = vunpack.c.l.b16 %v1554
      %v1606 = vunpack.c.l.b16 %v1555
      %v1607 = vunpack.c.l.b16 %v1556
      %v1608 = vunpack.c.l.b16 %v1557
      %v1609 = vunpack.c.l.b16 %v1558
      %v1610 = vunpack.c.l.b16 %v1559
      %v1611 = vunpack.c.l.b16 %v1560
      %v1612 = vunpack.c.l.b16 %v1561
      %v1613 = vunpack.c.l.b16 %v1562
      %v1614 = vunpack.c.l.b16 %v1563
      %v1615 = vunpack.c.l.b16 %v1564
      %v1616 = vunpack.c.l.b16 %v1565
      %v1617 = vunpack.c.l.b16 %v1566
      %v1618 = vunpack.c.l.b16 %v1567
      %v1619 = vunpack.c.l.b16 %v1568
      %v1620 = vpack.c.b16 %v1604, %v1603
      %v1621 = vpack.c.b16 %v1606, %v1605
      %v1622 = vpack.c.b16 %v1608, %v1607
      %v1623 = vpack.c.b16 %v1610, %v1609
      %v1624 = vpack.c.b16 %v1612, %v1611
      %v1625 = vpack.c.b16 %v1614, %v1613
      %v1626 = vpack.c.b16 %v1616, %v1615
      %v1627 = vpack.c.b16 %v1618, %v1617
      %v1628 = vpack.c.b16 %v1619, %v1619
      %v1630 = vshrl.u32 %v1620, 16
      %v1632 = vshll.u32 %v1620, 16
      %v1634 = vrot.slane %v1632, 1
      %v1635 = vor.u32 %v1630, %v1634
      %v1637 = vshll.u32 %v1621, 16
      %v1639 = vrot.slane %v1637, 1
      %v1640 = vsel %vm828, %v1635, %v1639
      %v1641 = vshrl.u32 %v1621, 16
      %v1643 = vor.u32 %v1641, %v1639
      %v1645 = vshll.u32 %v1622, 16
      %v1647 = vrot.slane %v1645, 1
      %v1648 = vsel %vm828, %v1643, %v1647
      %v1649 = vshrl.u32 %v1622, 16
      %v1651 = vor.u32 %v1649, %v1647
      %v1653 = vshll.u32 %v1623, 16
      %v1655 = vrot.slane %v1653, 1
      %v1656 = vsel %vm828, %v1651, %v1655
      %v1657 = vshrl.u32 %v1623, 16
      %v1659 = vor.u32 %v1657, %v1655
      %v1661 = vshll.u32 %v1624, 16
      %v1663 = vrot.slane %v1661, 1
      %v1664 = vsel %vm828, %v1659, %v1663
      %v1665 = vshrl.u32 %v1624, 16
      %v1667 = vor.u32 %v1665, %v1663
      %v1669 = vshll.u32 %v1625, 16
      %v1671 = vrot.slane %v1669, 1
      %v1672 = vsel %vm828, %v1667, %v1671
      %v1673 = vshrl.u32 %v1625, 16
      %v1675 = vor.u32 %v1673, %v1671
      %v1677 = vshll.u32 %v1626, 16
      %v1679 = vrot.slane %v1677, 1
      %v1680 = vsel %vm828, %v1675, %v1679
      %v1681 = vshrl.u32 %v1626, 16
      %v1683 = vor.u32 %v1681, %v1679
      %v1685 = vshll.u32 %v1627, 16
      %v1687 = vrot.slane %v1685, 1
      %v1688 = vsel %vm828, %v1683, %v1687
      %v1689 = vshrl.u32 %v1627, 16
      %v1691 = vor.u32 %v1689, %v1687
      %v1693 = vshll.u32 %v1628, 16
      %v1695 = vrot.slane %v1693, 1
      %v1696 = vsel %vm828, %v1691, %v1695
      %v1721 = vunpack.c.l.b16 %v1570
      %v1722 = vunpack.c.l.b16 %v1571
      %v1723 = vunpack.c.l.b16 %v1572
      %v1724 = vunpack.c.l.b16 %v1573
      %v1725 = vunpack.c.l.b16 %v1574
      %v1726 = vunpack.c.l.b16 %v1575
      %v1727 = vunpack.c.l.b16 %v1576
      %v1728 = vunpack.c.l.b16 %v1577
      %v1729 = vunpack.c.l.b16 %v1578
      %v1730 = vunpack.c.l.b16 %v1579
      %v1731 = vunpack.c.l.b16 %v1580
      %v1732 = vunpack.c.l.b16 %v1581
      %v1733 = vunpack.c.l.b16 %v1582
      %v1734 = vunpack.c.l.b16 %v1583
      %v1735 = vunpack.c.l.b16 %v1584
      %v1736 = vunpack.c.l.b16 %v1585
      %v1737 = vpack.c.b16 %v1722, %v1721
      %v1738 = vpack.c.b16 %v1724, %v1723
      %v1739 = vpack.c.b16 %v1726, %v1725
      %v1740 = vpack.c.b16 %v1728, %v1727
      %v1741 = vpack.c.b16 %v1730, %v1729
      %v1742 = vpack.c.b16 %v1732, %v1731
      %v1743 = vpack.c.b16 %v1734, %v1733
      %v1744 = vpack.c.b16 %v1736, %v1735
      %1753 = vmatprep.subr.bf16.mxu0 0
      %1754 = vmatpush1.bf16.msra.mxu0 %v1737
      %1755 = vmatprep.subr.bf16.mxu0 0
      %1756 = vmatpush1.bf16.msra.mxu0 %v1738
      %1757 = vmatprep.subr.bf16.mxu0 0
      %1758 = vmatpush1.bf16.msra.mxu0 %v1739
      %1759 = vmatprep.subr.bf16.mxu0 0
      %1760 = vmatpush1.bf16.msra.mxu0 %v1740
      %1761 = vmatprep.subr.bf16.mxu0 0
      %1762 = vmatpush1.bf16.msra.mxu0 %v1741
      %1763 = vmatprep.subr.bf16.mxu0 0
      %1764 = vmatpush1.bf16.msra.mxu0 %v1742
      %1765 = vmatprep.subr.bf16.mxu0 0
      %1766 = vmatpush1.bf16.msra.mxu0 %v1743
      %1767 = vmatprep.subr.bf16.mxu0 0
      %1768 = vmatpush1.bf16.msra.mxu0 %v1744
      %1769 = vmatprep.subr.bf16.mxu0 0
      %1770 = vmatpush1.bf16.msra.mxu0 0
      %1771 = vmatprep.subr.bf16.mxu0 0
      %1772 = vmatpush1.bf16.msra.mxu0 0
      %1773 = vmatprep.subr.bf16.mxu0 0
      %1774 = vmatpush1.bf16.msra.mxu0 0
      %1775 = vmatprep.subr.bf16.mxu0 0
      %1776 = vmatpush1.bf16.msra.mxu0 0
      %1777 = vmatprep.subr.bf16.mxu0 0
      %1778 = vmatpush1.bf16.msra.mxu0 0
      %1779 = vmatprep.subr.bf16.mxu0 0
      %1780 = vmatpush1.bf16.msra.mxu0 0
      %1781 = vmatprep.subr.bf16.mxu0 0
      %1782 = vmatpush1.bf16.msra.mxu0 0
      %1783 = vmatprep.subr.bf16.mxu0 0
      %1784 = vmatpush1.bf16.msra.mxu0 0
      %1785 = vmatprep.mubr.bf16.mxu0 0
      %1786 = vmatmul.mubr.bf16.gmra.mrb[0].mxu0 %v1640
      %v1787 = vpop.f32.mrb[0].mxu0
      %v1788 = vadd.f32 0.0, %v1787
      %v1789 = vpop.f32.mrb[0].mxu0
      %v1790 = vpop.f32.mrb[0].mxu0
      %v1791 = vadd.f32 0.0, %v1790
      %v1792 = vpop.f32.mrb[0].mxu0
      %1793 = vmatprep.mubr.bf16.mxu0 0
      %1794 = vmatmul.mubr.bf16.gmra.mrb[0].mxu0 %v1648
      %v1795 = vpop.f32.mrb[0].mxu0
      %v1796 = vadd.f32 0.0, %v1795
      %v1797 = vpop.f32.mrb[0].mxu0
      %v1798 = vpop.f32.mrb[0].mxu0
      %v1799 = vadd.f32 0.0, %v1798
      %v1800 = vpop.f32.mrb[0].mxu0
      %1801 = vmatprep.mubr.bf16.mxu0 0
      %1802 = vmatmul.mubr.bf16.gmra.mrb[0].mxu0 %v1656
      %v1803 = vpop.f32.mrb[0].mxu0
      %v1804 = vadd.f32 0.0, %v1803
      %v1805 = vpop.f32.mrb[0].mxu0
      %v1806 = vpop.f32.mrb[0].mxu0
      %v1807 = vadd.f32 0.0, %v1806
      %v1808 = vpop.f32.mrb[0].mxu0
      %1809 = vmatprep.mubr.bf16.mxu0 0
      %1810 = vmatmul.mubr.bf16.gmra.mrb[0].mxu0 %v1664
      %v1811 = vpop.f32.mrb[0].mxu0
      %v1812 = vadd.f32 0.0, %v1811
      %v1813 = vpop.f32.mrb[0].mxu0
      %v1814 = vpop.f32.mrb[0].mxu0
      %v1815 = vadd.f32 0.0, %v1814
      %v1816 = vpop.f32.mrb[0].mxu0
      %1817 = vmatprep.mubr.bf16.mxu0 0
      %1818 = vmatmul.mubr.bf16.gmra.mrb[0].mxu0 %v1672
      %v1819 = vpop.f32.mrb[0].mxu0
      %v1820 = vadd.f32 0.0, %v1819
      %v1821 = vpop.f32.mrb[0].mxu0
      %v1822 = vpop.f32.mrb[0].mxu0
      %v1823 = vadd.f32 0.0, %v1822
      %v1824 = vpop.f32.mrb[0].mxu0
      %1825 = vmatprep.mubr.bf16.mxu0 0
      %1826 = vmatmul.mubr.bf16.gmra.mrb[0].mxu0 %v1680
      %v1827 = vpop.f32.mrb[0].mxu0
      %v1828 = vadd.f32 0.0, %v1827
      %v1829 = vpop.f32.mrb[0].mxu0
      %v1830 = vpop.f32.mrb[0].mxu0
      %v1831 = vadd.f32 0.0, %v1830
      %v1832 = vpop.f32.mrb[0].mxu0
      %1833 = vmatprep.mubr.bf16.mxu0 0
      %1834 = vmatmul.mubr.bf16.gmra.mrb[0].mxu0 %v1688
      %v1835 = vpop.f32.mrb[0].mxu0
      %v1836 = vadd.f32 0.0, %v1835
      %v1837 = vpop.f32.mrb[0].mxu0
      %v1838 = vpop.f32.mrb[0].mxu0
      %v1839 = vadd.f32 0.0, %v1838
      %v1840 = vpop.f32.mrb[0].mxu0
      %1841 = vmatprep.mubr.bf16.mxu0 0
      %1842 = vmatmul.mubr.bf16.gmra.mrb[0].mxu0 %v1696
      %v1843 = vpop.f32.mrb[0].mxu0
      %v1844 = vadd.f32 0.0, %v1843
      %v1845 = vpop.f32.mrb[0].mxu0
      %v1846 = vpop.f32.mrb[0].mxu0
      %v1847 = vadd.f32 0.0, %v1846
      %v1848 = vpop.f32.mrb[0].mxu0
      %1849 = vdwg.mxu0
      %v1850 = vadd.f32 %v1536, %v1788
      %v1851 = vadd.f32 %v1537, %v1791
      %v1852 = vadd.f32 %v1538, %v1796
      %v1853 = vadd.f32 %v1539, %v1799
      %v1854 = vadd.f32 %v1540, %v1804
      %v1855 = vadd.f32 %v1541, %v1807
      %v1856 = vadd.f32 %v1542, %v1812
      %v1857 = vadd.f32 %v1543, %v1815
      %v1858 = vadd.f32 %v1544, %v1820
      %v1859 = vadd.f32 %v1545, %v1823
      %v1860 = vadd.f32 %v1546, %v1828
      %v1861 = vadd.f32 %v1547, %v1831
      %v1862 = vadd.f32 %v1548, %v1836
      %v1863 = vadd.f32 %v1549, %v1839
      %v1864 = vadd.f32 %v1550, %v1844
      %v1865 = vadd.f32 %v1551, %v1847
      %v1866 = vld [vmem:[%s281 + $0x8] sm:$0xf]
      %v1867 = vld [vmem:[%s281 + $0xc] sm:$0xf]
      %v1868 = vld [vmem:[%s281 + $0x10] sm:$0xf]
      %v1869 = vld [vmem:[%s281 + $0x14] sm:$0xf]
      %v1870 = vld [vmem:[%s281 + $0x18] sm:$0xf]
      %v1871 = vld [vmem:[%s281 + $0x1c] sm:$0xf]
      %v1872 = vld [vmem:[%s281 + $0x20] sm:$0xf]
      %v1873 = vld [vmem:[%s281 + $0x24] sm:$0xf]
      %v1874 = vld [vmem:[%s281 + $0x28] sm:$0xf]
      %v1875 = vld [vmem:[%s281 + $0x2c] sm:$0xf]
      %v1876 = vld [vmem:[%s281 + $0x30] sm:$0xf]
      %v1877 = vld [vmem:[%s281 + $0x34] sm:$0xf]
      %v1878 = vld [vmem:[%s281 + $0x38] sm:$0xf]
      %v1879 = vld [vmem:[%s281 + $0x3c] sm:$0xf]
      %v1880 = vld [vmem:[%s281 + $0x40] sm:$0xf]
      %v1881 = vld [vmem:[%s281 + $0x44] sm:$0xf]
      %s1882 = scalar_lea.vmem %s2, 384
      %v1883 = vld [vmem:[%s1882] sm:$0xf]
      %v1884 = vld [vmem:[%s1882 + $0x4] sm:$0xf]
      %v1885 = vld [vmem:[%s1882 + $0x8] sm:$0xf]
      %v1886 = vld [vmem:[%s1882 + $0xc] sm:$0xf]
      %v1887 = vld [vmem:[%s1882 + $0x10] sm:$0xf]
      %v1888 = vld [vmem:[%s1882 + $0x14] sm:$0xf]
      %v1889 = vld [vmem:[%s1882 + $0x18] sm:$0xf]
      %v1890 = vld [vmem:[%s1882 + $0x1c] sm:$0xf]
      %v1891 = vld [vmem:[%s1882 + $0x20] sm:$0xf]
      %v1892 = vld [vmem:[%s1882 + $0x24] sm:$0xf]
      %v1893 = vld [vmem:[%s1882 + $0x28] sm:$0xf]
      %v1894 = vld [vmem:[%s1882 + $0x2c] sm:$0xf]
      %v1895 = vld [vmem:[%s1882 + $0x30] sm:$0xf]
      %v1896 = vld [vmem:[%s1882 + $0x34] sm:$0xf]
      %v1897 = vld [vmem:[%s1882 + $0x38] sm:$0xf]
      %v1898 = vld [vmem:[%s1882 + $0x3c] sm:$0xf]
      %v1915 = vunpack.c.l.b16 %v1866
      %v1916 = vunpack.c.l.b16 %v1867
      %v1917 = vunpack.c.l.b16 %v1868
      %v1918 = vunpack.c.l.b16 %v1869
      %v1919 = vunpack.c.l.b16 %v1870
      %v1920 = vunpack.c.l.b16 %v1871
      %v1921 = vunpack.c.l.b16 %v1872
      %v1922 = vunpack.c.l.b16 %v1873
      %v1923 = vunpack.c.l.b16 %v1874
      %v1924 = vunpack.c.l.b16 %v1875
      %v1925 = vunpack.c.l.b16 %v1876
      %v1926 = vunpack.c.l.b16 %v1877
      %v1927 = vunpack.c.l.b16 %v1878
      %v1928 = vunpack.c.l.b16 %v1879
      %v1929 = vunpack.c.l.b16 %v1880
      %v1930 = vunpack.c.l.b16 %v1881
      %v1931 = vpack.c.b16 %v1916, %v1915
      %v1932 = vpack.c.b16 %v1918, %v1917
      %v1933 = vpack.c.b16 %v1920, %v1919
      %v1934 = vpack.c.b16 %v1922, %v1921
      %v1935 = vpack.c.b16 %v1924, %v1923
      %v1936 = vpack.c.b16 %v1926, %v1925
      %v1937 = vpack.c.b16 %v1928, %v1927
      %v1938 = vpack.c.b16 %v1930, %v1929
      %v1963 = vunpack.c.l.b16 %v1883
      %v1964 = vunpack.c.l.b16 %v1884
      %v1965 = vunpack.c.l.b16 %v1885
      %v1966 = vunpack.c.l.b16 %v1886
      %v1967 = vunpack.c.l.b16 %v1887
      %v1968 = vunpack.c.l.b16 %v1888
      %v1969 = vunpack.c.l.b16 %v1889
      %v1970 = vunpack.c.l.b16 %v1890
      %v1971 = vunpack.c.l.b16 %v1891
      %v1972 = vunpack.c.l.b16 %v1892
      %v1973 = vunpack.c.l.b16 %v1893
      %v1974 = vunpack.c.l.b16 %v1894
      %v1975 = vunpack.c.l.b16 %v1895
      %v1976 = vunpack.c.l.b16 %v1896
      %v1977 = vunpack.c.l.b16 %v1897
      %v1978 = vunpack.c.l.b16 %v1898
      %v1979 = vpack.c.b16 %v1964, %v1963
      %v1980 = vpack.c.b16 %v1966, %v1965
      %v1981 = vpack.c.b16 %v1968, %v1967
      %v1982 = vpack.c.b16 %v1970, %v1969
      %v1983 = vpack.c.b16 %v1972, %v1971
      %v1984 = vpack.c.b16 %v1974, %v1973
      %v1985 = vpack.c.b16 %v1976, %v1975
      %v1986 = vpack.c.b16 %v1978, %v1977
      %1995 = vmatprep.subr.bf16.mxu0 0
      %1996 = vmatpush1.bf16.msra.mxu0 %v1979
      %1997 = vmatprep.subr.bf16.mxu0 0
      %1998 = vmatpush1.bf16.msra.mxu0 %v1980
      %1999 = vmatprep.subr.bf16.mxu0 0
      %2000 = vmatpush1.bf16.msra.mxu0 %v1981
      %2001 = vmatprep.subr.bf16.mxu0 0
      %2002 = vmatpush1.bf16.msra.mxu0 %v1982
      %2003 = vmatprep.subr.bf16.mxu0 0
      %2004 = vmatpush1.bf16.msra.mxu0 %v1983
      %2005 = vmatprep.subr.bf16.mxu0 0
      %2006 = vmatpush1.bf16.msra.mxu0 %v1984
      %2007 = vmatprep.subr.bf16.mxu0 0
      %2008 = vmatpush1.bf16.msra.mxu0 %v1985
      %2009 = vmatprep.subr.bf16.mxu0 0
      %2010 = vmatpush1.bf16.msra.mxu0 %v1986
      %2011 = vmatprep.subr.bf16.mxu0 0
      %2012 = vmatpush1.bf16.msra.mxu0 0
      %2013 = vmatprep.subr.bf16.mxu0 0
      %2014 = vmatpush1.bf16.msra.mxu0 0
      %2015 = vmatprep.subr.bf16.mxu0 0
      %2016 = vmatpush1.bf16.msra.mxu0 0
      %2017 = vmatprep.subr.bf16.mxu0 0
      %2018 = vmatpush1.bf16.msra.mxu0 0
      %2019 = vmatprep.subr.bf16.mxu0 0
      %2020 = vmatpush1.bf16.msra.mxu0 0
      %2021 = vmatprep.subr.bf16.mxu0 0
      %2022 = vmatpush1.bf16.msra.mxu0 0
      %2023 = vmatprep.subr.bf16.mxu0 0
      %2024 = vmatpush1.bf16.msra.mxu0 0
      %2025 = vmatprep.subr.bf16.mxu0 0
      %2026 = vmatpush1.bf16.msra.mxu0 0
      %2027 = vmatprep.mubr.bf16.mxu0 0
      %2028 = vmatmul.mubr.bf16.gmra.mrb[0].mxu0 %v1931
      %v2029 = vpop.f32.mrb[0].mxu0
      %v2030 = vadd.f32 0.0, %v2029
      %v2031 = vpop.f32.mrb[0].mxu0
      %v2032 = vpop.f32.mrb[0].mxu0
      %v2033 = vadd.f32 0.0, %v2032
      %v2034 = vpop.f32.mrb[0].mxu0
      %2035 = vmatprep.mubr.bf16.mxu0 0
      %2036 = vmatmul.mubr.bf16.gmra.mrb[0].mxu0 %v1932
      %v2037 = vpop.f32.mrb[0].mxu0
      %v2038 = vadd.f32 0.0, %v2037
      %v2039 = vpop.f32.mrb[0].mxu0
      %v2040 = vpop.f32.mrb[0].mxu0
      %v2041 = vadd.f32 0.0, %v2040
      %v2042 = vpop.f32.mrb[0].mxu0
      %2043 = vmatprep.mubr.bf16.mxu0 0
      %2044 = vmatmul.mubr.bf16.gmra.mrb[0].mxu0 %v1933
      %v2045 = vpop.f32.mrb[0].mxu0
      %v2046 = vadd.f32 0.0, %v2045
      %v2047 = vpop.f32.mrb[0].mxu0
      %v2048 = vpop.f32.mrb[0].mxu0
      %v2049 = vadd.f32 0.0, %v2048
      %v2050 = vpop.f32.mrb[0].mxu0
      %2051 = vmatprep.mubr.bf16.mxu0 0
      %2052 = vmatmul.mubr.bf16.gmra.mrb[0].mxu0 %v1934
      %v2053 = vpop.f32.mrb[0].mxu0
      %v2054 = vadd.f32 0.0, %v2053
      %v2055 = vpop.f32.mrb[0].mxu0
      %v2056 = vpop.f32.mrb[0].mxu0
      %v2057 = vadd.f32 0.0, %v2056
      %v2058 = vpop.f32.mrb[0].mxu0
      %2059 = vmatprep.mubr.bf16.mxu0 0
      %2060 = vmatmul.mubr.bf16.gmra.mrb[0].mxu0 %v1935
      %v2061 = vpop.f32.mrb[0].mxu0
      %v2062 = vadd.f32 0.0, %v2061
      %v2063 = vpop.f32.mrb[0].mxu0
      %v2064 = vpop.f32.mrb[0].mxu0
      %v2065 = vadd.f32 0.0, %v2064
      %v2066 = vpop.f32.mrb[0].mxu0
      %2067 = vmatprep.mubr.bf16.mxu0 0
      %2068 = vmatmul.mubr.bf16.gmra.mrb[0].mxu0 %v1936
      %v2069 = vpop.f32.mrb[0].mxu0
      %v2070 = vadd.f32 0.0, %v2069
      %v2071 = vpop.f32.mrb[0].mxu0
      %v2072 = vpop.f32.mrb[0].mxu0
      %v2073 = vadd.f32 0.0, %v2072
      %v2074 = vpop.f32.mrb[0].mxu0
      %2075 = vmatprep.mubr.bf16.mxu0 0
      %2076 = vmatmul.mubr.bf16.gmra.mrb[0].mxu0 %v1937
      %v2077 = vpop.f32.mrb[0].mxu0
      %v2078 = vadd.f32 0.0, %v2077
      %v2079 = vpop.f32.mrb[0].mxu0
      %v2080 = vpop.f32.mrb[0].mxu0
      %v2081 = vadd.f32 0.0, %v2080
      %v2082 = vpop.f32.mrb[0].mxu0
      %2083 = vmatprep.mubr.bf16.mxu0 0
      %2084 = vmatmul.mubr.bf16.gmra.mrb[0].mxu0 %v1938
      %v2085 = vpop.f32.mrb[0].mxu0
      %v2086 = vadd.f32 0.0, %v2085
      %v2087 = vpop.f32.mrb[0].mxu0
      %v2088 = vpop.f32.mrb[0].mxu0
      %v2089 = vadd.f32 0.0, %v2088
      %v2090 = vpop.f32.mrb[0].mxu0
      %2091 = vdwg.mxu0
      %v2092 = vadd.f32 %v1850, %v2030
      %v2093 = vadd.f32 %v1851, %v2033
      %v2094 = vadd.f32 %v1852, %v2038
      %v2095 = vadd.f32 %v1853, %v2041
      %v2096 = vadd.f32 %v1854, %v2046
      %v2097 = vadd.f32 %v1855, %v2049
      %v2098 = vadd.f32 %v1856, %v2054
      %v2099 = vadd.f32 %v1857, %v2057
      %v2100 = vadd.f32 %v1858, %v2062
      %v2101 = vadd.f32 %v1859, %v2065
      %v2102 = vadd.f32 %v1860, %v2070
      %v2103 = vadd.f32 %v1861, %v2073
      %v2104 = vadd.f32 %v1862, %v2078
      %v2105 = vadd.f32 %v1863, %v2081
      %v2106 = vadd.f32 %v1864, %v2086
      %v2107 = vadd.f32 %v1865, %v2089
      %v2108 = vld [vmem:[%s331 + $0x8] sm:$0xf]
      %v2109 = vld [vmem:[%s331 + $0xc] sm:$0xf]
      %v2110 = vld [vmem:[%s331 + $0x10] sm:$0xf]
      %v2111 = vld [vmem:[%s331 + $0x14] sm:$0xf]
      %v2112 = vld [vmem:[%s331 + $0x18] sm:$0xf]
      %v2113 = vld [vmem:[%s331 + $0x1c] sm:$0xf]
      %v2114 = vld [vmem:[%s331 + $0x20] sm:$0xf]
      %v2115 = vld [vmem:[%s331 + $0x24] sm:$0xf]
      %v2116 = vld [vmem:[%s331 + $0x28] sm:$0xf]
      %v2117 = vld [vmem:[%s331 + $0x2c] sm:$0xf]
      %v2118 = vld [vmem:[%s331 + $0x30] sm:$0xf]
      %v2119 = vld [vmem:[%s331 + $0x34] sm:$0xf]
      %v2120 = vld [vmem:[%s331 + $0x38] sm:$0xf]
      %v2121 = vld [vmem:[%s331 + $0x3c] sm:$0xf]
      %v2122 = vld [vmem:[%s331 + $0x40] sm:$0xf]
      %v2123 = vld [vmem:[%s331 + $0x44] sm:$0xf]
      %s2124 = scalar_lea.vmem %s2, 448
      %v2125 = vld [vmem:[%s2124] sm:$0xf]
      %v2126 = vld [vmem:[%s2124 + $0x4] sm:$0xf]
      %v2127 = vld [vmem:[%s2124 + $0x8] sm:$0xf]
      %v2128 = vld [vmem:[%s2124 + $0xc] sm:$0xf]
      %v2129 = vld [vmem:[%s2124 + $0x10] sm:$0xf]
      %v2130 = vld [vmem:[%s2124 + $0x14] sm:$0xf]
      %v2131 = vld [vmem:[%s2124 + $0x18] sm:$0xf]
      %v2132 = vld [vmem:[%s2124 + $0x1c] sm:$0xf]
      %v2133 = vld [vmem:[%s2124 + $0x20] sm:$0xf]
      %v2134 = vld [vmem:[%s2124 + $0x24] sm:$0xf]
      %v2135 = vld [vmem:[%s2124 + $0x28] sm:$0xf]
      %v2136 = vld [vmem:[%s2124 + $0x2c] sm:$0xf]
      %v2137 = vld [vmem:[%s2124 + $0x30] sm:$0xf]
      %v2138 = vld [vmem:[%s2124 + $0x34] sm:$0xf]
      %v2139 = vld [vmem:[%s2124 + $0x38] sm:$0xf]
      %v2140 = vld [vmem:[%s2124 + $0x3c] sm:$0xf]
      %v2157 = vunpack.c.l.b16 %v2108
      %v2158 = vunpack.c.l.b16 %v2109
      %v2159 = vunpack.c.l.b16 %v2110
      %v2160 = vunpack.c.l.b16 %v2111
      %v2161 = vunpack.c.l.b16 %v2112
      %v2162 = vunpack.c.l.b16 %v2113
      %v2163 = vunpack.c.l.b16 %v2114
      %v2164 = vunpack.c.l.b16 %v2115
      %v2165 = vunpack.c.l.b16 %v2116
      %v2166 = vunpack.c.l.b16 %v2117
      %v2167 = vunpack.c.l.b16 %v2118
      %v2168 = vunpack.c.l.b16 %v2119
      %v2169 = vunpack.c.l.b16 %v2120
      %v2170 = vunpack.c.l.b16 %v2121
      %v2171 = vunpack.c.l.b16 %v2122
      %v2172 = vunpack.c.l.b16 %v2123
      %v2173 = vpack.c.b16 %v2158, %v2157
      %v2174 = vpack.c.b16 %v2160, %v2159
      %v2175 = vpack.c.b16 %v2162, %v2161
      %v2176 = vpack.c.b16 %v2164, %v2163
      %v2177 = vpack.c.b16 %v2166, %v2165
      %v2178 = vpack.c.b16 %v2168, %v2167
      %v2179 = vpack.c.b16 %v2170, %v2169
      %v2180 = vpack.c.b16 %v2172, %v2171
      %v2205 = vunpack.c.l.b16 %v2125
      %v2206 = vunpack.c.l.b16 %v2126
      %v2207 = vunpack.c.l.b16 %v2127
      %v2208 = vunpack.c.l.b16 %v2128
      %v2209 = vunpack.c.l.b16 %v2129
      %v2210 = vunpack.c.l.b16 %v2130
      %v2211 = vunpack.c.l.b16 %v2131
      %v2212 = vunpack.c.l.b16 %v2132
      %v2213 = vunpack.c.l.b16 %v2133
      %v2214 = vunpack.c.l.b16 %v2134
      %v2215 = vunpack.c.l.b16 %v2135
      %v2216 = vunpack.c.l.b16 %v2136
      %v2217 = vunpack.c.l.b16 %v2137
      %v2218 = vunpack.c.l.b16 %v2138
      %v2219 = vunpack.c.l.b16 %v2139
      %v2220 = vunpack.c.l.b16 %v2140
      %v2221 = vpack.c.b16 %v2206, %v2205
      %v2222 = vpack.c.b16 %v2208, %v2207
      %v2223 = vpack.c.b16 %v2210, %v2209
      %v2224 = vpack.c.b16 %v2212, %v2211
      %v2225 = vpack.c.b16 %v2214, %v2213
      %v2226 = vpack.c.b16 %v2216, %v2215
      %v2227 = vpack.c.b16 %v2218, %v2217
      %v2228 = vpack.c.b16 %v2220, %v2219
      %2237 = vmatprep.subr.bf16.mxu0 0
      %2238 = vmatpush1.bf16.msra.mxu0 %v2221
      %2239 = vmatprep.subr.bf16.mxu0 0
      %2240 = vmatpush1.bf16.msra.mxu0 %v2222
      %2241 = vmatprep.subr.bf16.mxu0 0
      %2242 = vmatpush1.bf16.msra.mxu0 %v2223
      %2243 = vmatprep.subr.bf16.mxu0 0
      %2244 = vmatpush1.bf16.msra.mxu0 %v2224
      %2245 = vmatprep.subr.bf16.mxu0 0
      %2246 = vmatpush1.bf16.msra.mxu0 %v2225
      %2247 = vmatprep.subr.bf16.mxu0 0
      %2248 = vmatpush1.bf16.msra.mxu0 %v2226
      %2249 = vmatprep.subr.bf16.mxu0 0
      %2250 = vmatpush1.bf16.msra.mxu0 %v2227
      %2251 = vmatprep.subr.bf16.mxu0 0
      %2252 = vmatpush1.bf16.msra.mxu0 %v2228
      %2253 = vmatprep.subr.bf16.mxu0 0
      %2254 = vmatpush1.bf16.msra.mxu0 0
      %2255 = vmatprep.subr.bf16.mxu0 0
      %2256 = vmatpush1.bf16.msra.mxu0 0
      %2257 = vmatprep.subr.bf16.mxu0 0
      %2258 = vmatpush1.bf16.msra.mxu0 0
      %2259 = vmatprep.subr.bf16.mxu0 0
      %2260 = vmatpush1.bf16.msra.mxu0 0
      %2261 = vmatprep.subr.bf16.mxu0 0
      %2262 = vmatpush1.bf16.msra.mxu0 0
      %2263 = vmatprep.subr.bf16.mxu0 0
      %2264 = vmatpush1.bf16.msra.mxu0 0
      %2265 = vmatprep.subr.bf16.mxu0 0
      %2266 = vmatpush1.bf16.msra.mxu0 0
      %2267 = vmatprep.subr.bf16.mxu0 0
      %2268 = vmatpush1.bf16.msra.mxu0 0
      %2269 = vmatprep.mubr.bf16.mxu0 0
      %2270 = vmatmul.mubr.bf16.gmra.mrb[0].mxu0 %v2173
      %v2271 = vpop.f32.mrb[0].mxu0
      %v2272 = vadd.f32 0.0, %v2271
      %v2273 = vpop.f32.mrb[0].mxu0
      %v2274 = vpop.f32.mrb[0].mxu0
      %v2275 = vadd.f32 0.0, %v2274
      %v2276 = vpop.f32.mrb[0].mxu0
      %2277 = vmatprep.mubr.bf16.mxu0 0
      %2278 = vmatmul.mubr.bf16.gmra.mrb[0].mxu0 %v2174
      %v2279 = vpop.f32.mrb[0].mxu0
      %v2280 = vadd.f32 0.0, %v2279
      %v2281 = vpop.f32.mrb[0].mxu0
      %v2282 = vpop.f32.mrb[0].mxu0
      %v2283 = vadd.f32 0.0, %v2282
      %v2284 = vpop.f32.mrb[0].mxu0
      %2285 = vmatprep.mubr.bf16.mxu0 0
      %2286 = vmatmul.mubr.bf16.gmra.mrb[0].mxu0 %v2175
      %v2287 = vpop.f32.mrb[0].mxu0
      %v2288 = vadd.f32 0.0, %v2287
      %v2289 = vpop.f32.mrb[0].mxu0
      %v2290 = vpop.f32.mrb[0].mxu0
      %v2291 = vadd.f32 0.0, %v2290
      %v2292 = vpop.f32.mrb[0].mxu0
      %2293 = vmatprep.mubr.bf16.mxu0 0
      %2294 = vmatmul.mubr.bf16.gmra.mrb[0].mxu0 %v2176
      %v2295 = vpop.f32.mrb[0].mxu0
      %v2296 = vadd.f32 0.0, %v2295
      %v2297 = vpop.f32.mrb[0].mxu0
      %v2298 = vpop.f32.mrb[0].mxu0
      %v2299 = vadd.f32 0.0, %v2298
      %v2300 = vpop.f32.mrb[0].mxu0
      %2301 = vmatprep.mubr.bf16.mxu0 0
      %2302 = vmatmul.mubr.bf16.gmra.mrb[0].mxu0 %v2177
      %v2303 = vpop.f32.mrb[0].mxu0
      %v2304 = vadd.f32 0.0, %v2303
      %v2305 = vpop.f32.mrb[0].mxu0
      %v2306 = vpop.f32.mrb[0].mxu0
      %v2307 = vadd.f32 0.0, %v2306
      %v2308 = vpop.f32.mrb[0].mxu0
      %2309 = vmatprep.mubr.bf16.mxu0 0
      %2310 = vmatmul.mubr.bf16.gmra.mrb[0].mxu0 %v2178
      %v2311 = vpop.f32.mrb[0].mxu0
      %v2312 = vadd.f32 0.0, %v2311
      %v2313 = vpop.f32.mrb[0].mxu0
      %v2314 = vpop.f32.mrb[0].mxu0
      %v2315 = vadd.f32 0.0, %v2314
      %v2316 = vpop.f32.mrb[0].mxu0
      %2317 = vmatprep.mubr.bf16.mxu0 0
      %2318 = vmatmul.mubr.bf16.gmra.mrb[0].mxu0 %v2179
      %v2319 = vpop.f32.mrb[0].mxu0
      %v2320 = vadd.f32 0.0, %v2319
      %v2321 = vpop.f32.mrb[0].mxu0
      %v2322 = vpop.f32.mrb[0].mxu0
      %v2323 = vadd.f32 0.0, %v2322
      %v2324 = vpop.f32.mrb[0].mxu0
      %2325 = vmatprep.mubr.bf16.mxu0 0
      %2326 = vmatmul.mubr.bf16.gmra.mrb[0].mxu0 %v2180
      %v2327 = vpop.f32.mrb[0].mxu0
      %v2328 = vadd.f32 0.0, %v2327
      %v2329 = vpop.f32.mrb[0].mxu0
      %v2330 = vpop.f32.mrb[0].mxu0
      %v2331 = vadd.f32 0.0, %v2330
      %v2332 = vpop.f32.mrb[0].mxu0
      %2333 = vdwg.mxu0
      %v2334 = vadd.f32 %v2092, %v2272
      %v2335 = vadd.f32 %v2093, %v2275
      %v2336 = vadd.f32 %v2094, %v2280
      %v2337 = vadd.f32 %v2095, %v2283
      %v2338 = vadd.f32 %v2096, %v2288
      %v2339 = vadd.f32 %v2097, %v2291
      %v2340 = vadd.f32 %v2098, %v2296
      %v2341 = vadd.f32 %v2099, %v2299
      %v2342 = vadd.f32 %v2100, %v2304
      %v2343 = vadd.f32 %v2101, %v2307
      %v2344 = vadd.f32 %v2102, %v2312
      %v2345 = vadd.f32 %v2103, %v2315
      %v2346 = vadd.f32 %v2104, %v2320
      %v2347 = vadd.f32 %v2105, %v2323
      %v2348 = vadd.f32 %v2106, %v2328
      %v2349 = vadd.f32 %v2107, %v2331
      %v2350 = vld [vmem:[%s281 + $0x8] sm:$0xf]
      %v2351 = vld [vmem:[%s281 + $0xc] sm:$0xf]
      %v2352 = vld [vmem:[%s281 + $0x10] sm:$0xf]
      %v2353 = vld [vmem:[%s281 + $0x14] sm:$0xf]
      %v2354 = vld [vmem:[%s281 + $0x18] sm:$0xf]
      %v2355 = vld [vmem:[%s281 + $0x1c] sm:$0xf]
      %v2356 = vld [vmem:[%s281 + $0x20] sm:$0xf]
      %v2357 = vld [vmem:[%s281 + $0x24] sm:$0xf]
      %v2358 = vld [vmem:[%s281 + $0x28] sm:$0xf]
      %v2359 = vld [vmem:[%s281 + $0x2c] sm:$0xf]
      %v2360 = vld [vmem:[%s281 + $0x30] sm:$0xf]
      %v2361 = vld [vmem:[%s281 + $0x34] sm:$0xf]
      %v2362 = vld [vmem:[%s281 + $0x38] sm:$0xf]
      %v2363 = vld [vmem:[%s281 + $0x3c] sm:$0xf]
      %v2364 = vld [vmem:[%s281 + $0x40] sm:$0xf]
      %v2365 = vld [vmem:[%s281 + $0x44] sm:$0xf]
      %v2366 = vld [vmem:[%s281 + $0x48] sm:$0x1]
      %s2367 = scalar_lea.vmem %s2, 512
      %v2368 = vld [vmem:[%s2367] sm:$0xf]
      %v2369 = vld [vmem:[%s2367 + $0x4] sm:$0xf]
      %v2370 = vld [vmem:[%s2367 + $0x8] sm:$0xf]
      %v2371 = vld [vmem:[%s2367 + $0xc] sm:$0xf]
      %v2372 = vld [vmem:[%s2367 + $0x10] sm:$0xf]
      %v2373 = vld [vmem:[%s2367 + $0x14] sm:$0xf]
      %v2374 = vld [vmem:[%s2367 + $0x18] sm:$0xf]
      %v2375 = vld [vmem:[%s2367 + $0x1c] sm:$0xf]
      %v2376 = vld [vmem:[%s2367 + $0x20] sm:$0xf]
      %v2377 = vld [vmem:[%s2367 + $0x24] sm:$0xf]
      %v2378 = vld [vmem:[%s2367 + $0x28] sm:$0xf]
      %v2379 = vld [vmem:[%s2367 + $0x2c] sm:$0xf]
      %v2380 = vld [vmem:[%s2367 + $0x30] sm:$0xf]
      %v2381 = vld [vmem:[%s2367 + $0x34] sm:$0xf]
      %v2382 = vld [vmem:[%s2367 + $0x38] sm:$0xf]
      %v2383 = vld [vmem:[%s2367 + $0x3c] sm:$0xf]
      %v2401 = vunpack.c.l.b16 %v2350
      %v2402 = vunpack.c.l.b16 %v2351
      %v2403 = vunpack.c.l.b16 %v2352
      %v2404 = vunpack.c.l.b16 %v2353
      %v2405 = vunpack.c.l.b16 %v2354
      %v2406 = vunpack.c.l.b16 %v2355
      %v2407 = vunpack.c.l.b16 %v2356
      %v2408 = vunpack.c.l.b16 %v2357
      %v2409 = vunpack.c.l.b16 %v2358
      %v2410 = vunpack.c.l.b16 %v2359
      %v2411 = vunpack.c.l.b16 %v2360
      %v2412 = vunpack.c.l.b16 %v2361
      %v2413 = vunpack.c.l.b16 %v2362
      %v2414 = vunpack.c.l.b16 %v2363
      %v2415 = vunpack.c.l.b16 %v2364
      %v2416 = vunpack.c.l.b16 %v2365
      %v2417 = vunpack.c.l.b16 %v2366
      %v2418 = vpack.c.b16 %v2402, %v2401
      %v2419 = vpack.c.b16 %v2404, %v2403
      %v2420 = vpack.c.b16 %v2406, %v2405
      %v2421 = vpack.c.b16 %v2408, %v2407
      %v2422 = vpack.c.b16 %v2410, %v2409
      %v2423 = vpack.c.b16 %v2412, %v2411
      %v2424 = vpack.c.b16 %v2414, %v2413
      %v2425 = vpack.c.b16 %v2416, %v2415
      %v2426 = vpack.c.b16 %v2417, %v2417
      %v2428 = vshrl.u32 %v2418, 16
      %v2430 = vshll.u32 %v2418, 16
      %v2432 = vrot.slane %v2430, 1
      %v2433 = vor.u32 %v2428, %v2432
      %v2435 = vshll.u32 %v2419, 16
      %v2437 = vrot.slane %v2435, 1
      %v2438 = vsel %vm828, %v2433, %v2437
      %v2439 = vshrl.u32 %v2419, 16
      %v2441 = vor.u32 %v2439, %v2437
      %v2443 = vshll.u32 %v2420, 16
      %v2445 = vrot.slane %v2443, 1
      %v2446 = vsel %vm828, %v2441, %v2445
      %v2447 = vshrl.u32 %v2420, 16
      %v2449 = vor.u32 %v2447, %v2445
      %v2451 = vshll.u32 %v2421, 16
      %v2453 = vrot.slane %v2451, 1
      %v2454 = vsel %vm828, %v2449, %v2453
      %v2455 = vshrl.u32 %v2421, 16
      %v2457 = vor.u32 %v2455, %v2453
      %v2459 = vshll.u32 %v2422, 16
      %v2461 = vrot.slane %v2459, 1
      %v2462 = vsel %vm828, %v2457, %v2461
      %v2463 = vshrl.u32 %v2422, 16
      %v2465 = vor.u32 %v2463, %v2461
      %v2467 = vshll.u32 %v2423, 16
      %v2469 = vrot.slane %v2467, 1
      %v2470 = vsel %vm828, %v2465, %v2469
      %v2471 = vshrl.u32 %v2423, 16
      %v2473 = vor.u32 %v2471, %v2469
      %v2475 = vshll.u32 %v2424, 16
      %v2477 = vrot.slane %v2475, 1
      %v2478 = vsel %vm828, %v2473, %v2477
      %v2479 = vshrl.u32 %v2424, 16
      %v2481 = vor.u32 %v2479, %v2477
      %v2483 = vshll.u32 %v2425, 16
      %v2485 = vrot.slane %v2483, 1
      %v2486 = vsel %vm828, %v2481, %v2485
      %v2487 = vshrl.u32 %v2425, 16
      %v2489 = vor.u32 %v2487, %v2485
      %v2491 = vshll.u32 %v2426, 16
      %v2493 = vrot.slane %v2491, 1
      %v2494 = vsel %vm828, %v2489, %v2493
      %v2519 = vunpack.c.l.b16 %v2368
      %v2520 = vunpack.c.l.b16 %v2369
      %v2521 = vunpack.c.l.b16 %v2370
      %v2522 = vunpack.c.l.b16 %v2371
      %v2523 = vunpack.c.l.b16 %v2372
      %v2524 = vunpack.c.l.b16 %v2373
      %v2525 = vunpack.c.l.b16 %v2374
      %v2526 = vunpack.c.l.b16 %v2375
      %v2527 = vunpack.c.l.b16 %v2376
      %v2528 = vunpack.c.l.b16 %v2377
      %v2529 = vunpack.c.l.b16 %v2378
      %v2530 = vunpack.c.l.b16 %v2379
      %v2531 = vunpack.c.l.b16 %v2380
      %v2532 = vunpack.c.l.b16 %v2381
      %v2533 = vunpack.c.l.b16 %v2382
      %v2534 = vunpack.c.l.b16 %v2383
      %v2535 = vpack.c.b16 %v2520, %v2519
      %v2536 = vpack.c.b16 %v2522, %v2521
      %v2537 = vpack.c.b16 %v2524, %v2523
      %v2538 = vpack.c.b16 %v2526, %v2525
      %v2539 = vpack.c.b16 %v2528, %v2527
      %v2540 = vpack.c.b16 %v2530, %v2529
      %v2541 = vpack.c.b16 %v2532, %v2531
      %v2542 = vpack.c.b16 %v2534, %v2533
      %2551 = vmatprep.subr.bf16.mxu0 0
      %2552 = vmatpush1.bf16.msra.mxu0 %v2535
      %2553 = vmatprep.subr.bf16.mxu0 0
      %2554 = vmatpush1.bf16.msra.mxu0 %v2536
      %2555 = vmatprep.subr.bf16.mxu0 0
      %2556 = vmatpush1.bf16.msra.mxu0 %v2537
      %2557 = vmatprep.subr.bf16.mxu0 0
      %2558 = vmatpush1.bf16.msra.mxu0 %v2538
      %2559 = vmatprep.subr.bf16.mxu0 0
      %2560 = vmatpush1.bf16.msra.mxu0 %v2539
      %2561 = vmatprep.subr.bf16.mxu0 0
      %2562 = vmatpush1.bf16.msra.mxu0 %v2540
      %2563 = vmatprep.subr.bf16.mxu0 0
      %2564 = vmatpush1.bf16.msra.mxu0 %v2541
      %2565 = vmatprep.subr.bf16.mxu0 0
      %2566 = vmatpush1.bf16.msra.mxu0 %v2542
      %2567 = vmatprep.subr.bf16.mxu0 0
      %2568 = vmatpush1.bf16.msra.mxu0 0
      %2569 = vmatprep.subr.bf16.mxu0 0
      %2570 = vmatpush1.bf16.msra.mxu0 0
      %2571 = vmatprep.subr.bf16.mxu0 0
      %2572 = vmatpush1.bf16.msra.mxu0 0
      %2573 = vmatprep.subr.bf16.mxu0 0
      %2574 = vmatpush1.bf16.msra.mxu0 0
      %2575 = vmatprep.subr.bf16.mxu0 0
      %2576 = vmatpush1.bf16.msra.mxu0 0
      %2577 = vmatprep.subr.bf16.mxu0 0
      %2578 = vmatpush1.bf16.msra.mxu0 0
      %2579 = vmatprep.subr.bf16.mxu0 0
      %2580 = vmatpush1.bf16.msra.mxu0 0
      %2581 = vmatprep.subr.bf16.mxu0 0
      %2582 = vmatpush1.bf16.msra.mxu0 0
      %2583 = vmatprep.mubr.bf16.mxu0 0
      %2584 = vmatmul.mubr.bf16.gmra.mrb[0].mxu0 %v2438
      %v2585 = vpop.f32.mrb[0].mxu0
      %v2586 = vadd.f32 0.0, %v2585
      %v2587 = vpop.f32.mrb[0].mxu0
      %v2588 = vpop.f32.mrb[0].mxu0
      %v2589 = vadd.f32 0.0, %v2588
      %v2590 = vpop.f32.mrb[0].mxu0
      %2591 = vmatprep.mubr.bf16.mxu0 0
      %2592 = vmatmul.mubr.bf16.gmra.mrb[0].mxu0 %v2446
      %v2593 = vpop.f32.mrb[0].mxu0
      %v2594 = vadd.f32 0.0, %v2593
      %v2595 = vpop.f32.mrb[0].mxu0
      %v2596 = vpop.f32.mrb[0].mxu0
      %v2597 = vadd.f32 0.0, %v2596
      %v2598 = vpop.f32.mrb[0].mxu0
      %2599 = vmatprep.mubr.bf16.mxu0 0
      %2600 = vmatmul.mubr.bf16.gmra.mrb[0].mxu0 %v2454
      %v2601 = vpop.f32.mrb[0].mxu0
      %v2602 = vadd.f32 0.0, %v2601
      %v2603 = vpop.f32.mrb[0].mxu0
      %v2604 = vpop.f32.mrb[0].mxu0
      %v2605 = vadd.f32 0.0, %v2604
      %v2606 = vpop.f32.mrb[0].mxu0
      %2607 = vmatprep.mubr.bf16.mxu0 0
      %2608 = vmatmul.mubr.bf16.gmra.mrb[0].mxu0 %v2462
      %v2609 = vpop.f32.mrb[0].mxu0
      %v2610 = vadd.f32 0.0, %v2609
      %v2611 = vpop.f32.mrb[0].mxu0
      %v2612 = vpop.f32.mrb[0].mxu0
      %v2613 = vadd.f32 0.0, %v2612
      %v2614 = vpop.f32.mrb[0].mxu0
      %2615 = vmatprep.mubr.bf16.mxu0 0
      %2616 = vmatmul.mubr.bf16.gmra.mrb[0].mxu0 %v2470
      %v2617 = vpop.f32.mrb[0].mxu0
      %v2618 = vadd.f32 0.0, %v2617
      %v2619 = vpop.f32.mrb[0].mxu0
      %v2620 = vpop.f32.mrb[0].mxu0
      %v2621 = vadd.f32 0.0, %v2620
      %v2622 = vpop.f32.mrb[0].mxu0
      %2623 = vmatprep.mubr.bf16.mxu0 0
      %2624 = vmatmul.mubr.bf16.gmra.mrb[0].mxu0 %v2478
      %v2625 = vpop.f32.mrb[0].mxu0
      %v2626 = vadd.f32 0.0, %v2625
      %v2627 = vpop.f32.mrb[0].mxu0
      %v2628 = vpop.f32.mrb[0].mxu0
      %v2629 = vadd.f32 0.0, %v2628
      %v2630 = vpop.f32.mrb[0].mxu0
      %2631 = vmatprep.mubr.bf16.mxu0 0
      %2632 = vmatmul.mubr.bf16.gmra.mrb[0].mxu0 %v2486
      %v2633 = vpop.f32.mrb[0].mxu0
      %v2634 = vadd.f32 0.0, %v2633
      %v2635 = vpop.f32.mrb[0].mxu0
      %v2636 = vpop.f32.mrb[0].mxu0
      %v2637 = vadd.f32 0.0, %v2636
      %v2638 = vpop.f32.mrb[0].mxu0
      %2639 = vmatprep.mubr.bf16.mxu0 0
      %2640 = vmatmul.mubr.bf16.gmra.mrb[0].mxu0 %v2494
      %v2641 = vpop.f32.mrb[0].mxu0
      %v2642 = vadd.f32 0.0, %v2641
      %v2643 = vpop.f32.mrb[0].mxu0
      %v2644 = vpop.f32.mrb[0].mxu0
      %v2645 = vadd.f32 0.0, %v2644
      %v2646 = vpop.f32.mrb[0].mxu0
      %2647 = vdwg.mxu0
      %v2648 = vadd.f32 %v2334, %v2586
      %v2649 = vadd.f32 %v2335, %v2589
      %v2650 = vadd.f32 %v2336, %v2594
      %v2651 = vadd.f32 %v2337, %v2597
      %v2652 = vadd.f32 %v2338, %v2602
      %v2653 = vadd.f32 %v2339, %v2605
      %v2654 = vadd.f32 %v2340, %v2610
      %v2655 = vadd.f32 %v2341, %v2613
      %v2656 = vadd.f32 %v2342, %v2618
      %v2657 = vadd.f32 %v2343, %v2621
      %v2658 = vadd.f32 %v2344, %v2626
      %v2659 = vadd.f32 %v2345, %v2629
      %v2660 = vadd.f32 %v2346, %v2634
      %v2661 = vadd.f32 %v2347, %v2637
      %v2662 = vadd.f32 %v2348, %v2642
      %v2663 = vadd.f32 %v2349, %v2645
      %v2664 = vld [vmem:[%s3] sm:$0x1]
      %v2666 = vlaneseq
      %v2667 = vshrl.u32 %v2666, 7
      %v2668 = vsub.s32 0, %v2667
      %v2669 = vrot.slane %v2664, %v2668
      %v2671 = vadd.f32 %v2648, %v2669
      %v2672 = vadd.f32 %v2649, %v2669
      %v2673 = vadd.f32 %v2650, %v2669
      %v2674 = vadd.f32 %v2651, %v2669
      %v2675 = vadd.f32 %v2652, %v2669
      %v2676 = vadd.f32 %v2653, %v2669
      %v2677 = vadd.f32 %v2654, %v2669
      %v2678 = vadd.f32 %v2655, %v2669
      %v2679 = vadd.f32 %v2656, %v2669
      %v2680 = vadd.f32 %v2657, %v2669
      %v2681 = vadd.f32 %v2658, %v2669
      %v2682 = vadd.f32 %v2659, %v2669
      %v2683 = vadd.f32 %v2660, %v2669
      %v2684 = vadd.f32 %v2661, %v2669
      %v2685 = vadd.f32 %v2662, %v2669
      %v2686 = vadd.f32 %v2663, %v2669
      %2687 = vst [vmem:[%s286] sm:$0xff] %v2671
      %2688 = vst [vmem:[%s286 + $0x8] sm:$0xff] %v2672
      %2689 = vst [vmem:[%s286 + $0x10] sm:$0xff] %v2673
      %2690 = vst [vmem:[%s286 + $0x18] sm:$0xff] %v2674
      %2691 = vst [vmem:[%s286 + $0x20] sm:$0xff] %v2675
      %2692 = vst [vmem:[%s286 + $0x28] sm:$0xff] %v2676
      %2693 = vst [vmem:[%s286 + $0x30] sm:$0xff] %v2677
      %2694 = vst [vmem:[%s286 + $0x38] sm:$0xff] %v2678
      %2695 = vst [vmem:[%s286 + $0x40] sm:$0xff] %v2679
      %2696 = vst [vmem:[%s286 + $0x48] sm:$0xff] %v2680
      %2697 = vst [vmem:[%s286 + $0x50] sm:$0xff] %v2681
      %2698 = vst [vmem:[%s286 + $0x58] sm:$0xff] %v2682
      %2699 = vst [vmem:[%s286 + $0x60] sm:$0xff] %v2683
      %2700 = vst [vmem:[%s286 + $0x68] sm:$0xff] %v2684
      %2701 = vst [vmem:[%s286 + $0x70] sm:$0xff] %v2685
      %2702 = vst [vmem:[%s286 + $0x78] sm:$0xff] %v2686
      %v2703 = vld [vmem:[%s1] sm:$0xff]
      %v2704 = vld [vmem:[%s1 + $0x8] sm:$0xff]
      %v2705 = vld [vmem:[%s1 + $0x10] sm:$0xff]
      %v2706 = vld [vmem:[%s1 + $0x18] sm:$0xff]
      %v2707 = vld [vmem:[%s1 + $0x20] sm:$0xff]
      %v2708 = vld [vmem:[%s1 + $0x28] sm:$0xff]
      %v2709 = vld [vmem:[%s1 + $0x30] sm:$0xff]
      %v2710 = vld [vmem:[%s1 + $0x38] sm:$0xff]
      %v2711 = vld [vmem:[%s1 + $0x40] sm:$0xff]
      %v2712 = vld [vmem:[%s1 + $0x48] sm:$0xff]
      %v2713 = vld [vmem:[%s1 + $0x50] sm:$0xff]
      %v2714 = vld [vmem:[%s1 + $0x58] sm:$0xff]
      %v2715 = vld [vmem:[%s1 + $0x60] sm:$0xff]
      %v2716 = vld [vmem:[%s1 + $0x68] sm:$0xff]
      %v2717 = vld [vmem:[%s1 + $0x70] sm:$0xff]
      %v2718 = vld [vmem:[%s1 + $0x78] sm:$0xff]
      %2720 = vset.pattern.permute.xlu0 0
      %2721 = vperm.xlu0 %2720, %v2703
      %v2722 = vpop.permute.xlu0 %2721
      %2725 = vset.pattern.permute.xlu0 0
      %2726 = vperm.xlu0 %2725, %v2704
      %v2727 = vpop.permute.xlu0 %2726
      %2730 = vset.pattern.permute.xlu0 0
      %2731 = vperm.xlu0 %2730, %v2705
      %v2732 = vpop.permute.xlu0 %2731
      %2735 = vset.pattern.permute.xlu0 0
      %2736 = vperm.xlu0 %2735, %v2706
      %v2737 = vpop.permute.xlu0 %2736
      %2740 = vset.pattern.permute.xlu0 0
      %2741 = vperm.xlu0 %2740, %v2707
      %v2742 = vpop.permute.xlu0 %2741
      %2745 = vset.pattern.permute.xlu0 0
      %2746 = vperm.xlu0 %2745, %v2708
      %v2747 = vpop.permute.xlu0 %2746
      %2750 = vset.pattern.permute.xlu0 0
      %2751 = vperm.xlu0 %2750, %v2709
      %v2752 = vpop.permute.xlu0 %2751
      %2755 = vset.pattern.permute.xlu0 0
      %2756 = vperm.xlu0 %2755, %v2710
      %v2757 = vpop.permute.xlu0 %2756
      %2760 = vset.pattern.permute.xlu0 0
      %2761 = vperm.xlu0 %2760, %v2711
      %v2762 = vpop.permute.xlu0 %2761
      %2765 = vset.pattern.permute.xlu0 0
      %2766 = vperm.xlu0 %2765, %v2712
      %v2767 = vpop.permute.xlu0 %2766
      %2770 = vset.pattern.permute.xlu0 0
      %2771 = vperm.xlu0 %2770, %v2713
      %v2772 = vpop.permute.xlu0 %2771
      %2775 = vset.pattern.permute.xlu0 0
      %2776 = vperm.xlu0 %2775, %v2714
      %v2777 = vpop.permute.xlu0 %2776
      %2780 = vset.pattern.permute.xlu0 0
      %2781 = vperm.xlu0 %2780, %v2715
      %v2782 = vpop.permute.xlu0 %2781
      %2785 = vset.pattern.permute.xlu0 0
      %2786 = vperm.xlu0 %2785, %v2716
      %v2787 = vpop.permute.xlu0 %2786
      %2790 = vset.pattern.permute.xlu0 0
      %2791 = vperm.xlu0 %2790, %v2717
      %v2792 = vpop.permute.xlu0 %2791
      %2795 = vset.pattern.permute.xlu0 0
      %2796 = vperm.xlu0 %2795, %v2718
      %v2797 = vpop.permute.xlu0 %2796
      %v2799 = vmul.f32 %v2671, %v2722
      %v2800 = vmul.f32 %v2672, %v2727
      %v2801 = vmul.f32 %v2673, %v2732
      %v2802 = vmul.f32 %v2674, %v2737
      %v2803 = vmul.f32 %v2675, %v2742
      %v2804 = vmul.f32 %v2676, %v2747
      %v2805 = vmul.f32 %v2677, %v2752
      %v2806 = vmul.f32 %v2678, %v2757
      %v2807 = vmul.f32 %v2679, %v2762
      %v2808 = vmul.f32 %v2680, %v2767
      %v2809 = vmul.f32 %v2681, %v2772
      %v2810 = vmul.f32 %v2682, %v2777
      %v2811 = vmul.f32 %v2683, %v2782
      %v2812 = vmul.f32 %v2684, %v2787
      %v2813 = vmul.f32 %v2685, %v2792
      %v2814 = vmul.f32 %v2686, %v2797
      %2815 = vst [vmem:[#allocation2 + $0x18] sm:$0xff] %v2799
      %2816 = vst [vmem:[#allocation2 + $0x20] sm:$0xff] %v2800
      %2817 = vst [vmem:[#allocation2 + $0x28] sm:$0xff] %v2801
      %2818 = vst [vmem:[#allocation2 + $0x30] sm:$0xff] %v2802
      %2819 = vst [vmem:[#allocation2 + $0x38] sm:$0xff] %v2803
      %2820 = vst [vmem:[#allocation2 + $0x40] sm:$0xff] %v2804
      %2821 = vst [vmem:[#allocation2 + $0x48] sm:$0xff] %v2805
      %2822 = vst [vmem:[#allocation2 + $0x50] sm:$0xff] %v2806
      %2823 = vst [vmem:[#allocation2 + $0x58] sm:$0xff] %v2807
      %2824 = vst [vmem:[#allocation2 + $0x60] sm:$0xff] %v2808
      %2825 = vst [vmem:[#allocation2 + $0x68] sm:$0xff] %v2809
      %2826 = vst [vmem:[#allocation2 + $0x70] sm:$0xff] %v2810
      %2827 = vst [vmem:[#allocation2 + $0x78] sm:$0xff] %v2811
      %2828 = vst [vmem:[#allocation2 + $0x80] sm:$0xff] %v2812
      %2829 = vst [vmem:[#allocation2 + $0x88] sm:$0xff] %v2813
      %2830 = vst [vmem:[#allocation2 + $0x90] sm:$0xff] %v2814
      %v2831 = vld [vmem:[#allocation2] ss:$2 sm:$0xff]
      %s2832 = scalar_lea.vmem [#allocation2], 16
      %v2833 = vld [vmem:[%s2832] ss:$2 sm:$0xff]
      %s2834 = scalar_lea.vmem [#allocation2], 32
      %v2835 = vld [vmem:[%s2834] ss:$2 sm:$0xff]
      %s2836 = scalar_lea.vmem [#allocation2], 48
      %v2837 = vld [vmem:[%s2836] ss:$2 sm:$0xff]
      %s2838 = scalar_lea.vmem [#allocation2], 64
      %v2839 = vld [vmem:[%s2838] ss:$2 sm:$0xff]
      %s2840 = scalar_lea.vmem [#allocation2], 80
      %v2841 = vld [vmem:[%s2840] ss:$2 sm:$0xff]
      %s2842 = scalar_lea.vmem [#allocation2], 96
      %v2843 = vld [vmem:[%s2842] ss:$2 sm:$0xff]
      %s2844 = scalar_lea.vmem [#allocation2], 112
      %v2845 = vld [vmem:[%s2844] ss:$2 sm:$0xff]
      %s2846 = scalar_lea.vmem [#allocation2], 128
      %v2847 = vld [vmem:[%s2846] ss:$2 sm:$0xff]
      %s2848 = scalar_lea.vmem [#allocation2], 144
      %v2849 = vld [vmem:[%s2848] ss:$2 sm:$0xff]
      %s2850 = scalar_lea.vmem [#allocation2], 160
      %v2851 = vld [vmem:[%s2850] ss:$2 sm:$0xff]
      %v2852 = vpack.c.bf16 %v2833, %v2831
      %v2853 = vpack.c.bf16 %v2837, %v2835
      %v2854 = vpack.c.bf16 %v2841, %v2839
      %v2855 = vpack.c.bf16 %v2845, %v2843
      %v2856 = vpack.c.bf16 %v2849, %v2847
      %v2857 = vpack.c.bf16 %v2851, %v2851
      %v2864 = vunpack.c.l.b16 %v2852
      %v2865 = vunpack.c.h.b16 %v2852
      %v2866 = vunpack.c.l.b16 %v2853
      %v2867 = vunpack.c.h.b16 %v2853
      %v2868 = vunpack.c.l.b16 %v2854
      %v2869 = vunpack.c.h.b16 %v2854
      %v2870 = vunpack.c.l.b16 %v2855
      %v2871 = vunpack.c.h.b16 %v2855
      %v2872 = vunpack.c.l.b16 %v2856
      %v2873 = vunpack.c.h.b16 %v2856
      %v2874 = vunpack.c.l.b16 %v2857
      %v2875 = vpack.c.b16 %v2864, %v2864
      %v2876 = vpack.c.b16 %v2865, %v2865
      %v2877 = vpack.c.b16 %v2866, %v2866
      %v2878 = vpack.c.b16 %v2867, %v2867
      %v2879 = vpack.c.b16 %v2868, %v2868
      %v2880 = vpack.c.b16 %v2869, %v2869
      %v2881 = vpack.c.b16 %v2870, %v2870
      %v2882 = vpack.c.b16 %v2871, %v2871
      %v2883 = vpack.c.b16 %v2872, %v2872
      %v2884 = vpack.c.b16 %v2873, %v2873
      %v2885 = vpack.c.b16 %v2874, %v2874
      %2897 = vst [vmem:[#allocation3] sm:$0xf] %v2875
      %2898 = vst [vmem:[#allocation3 + $0x4] sm:$0xf] %v2876
      %2899 = vst [vmem:[#allocation3 + $0x8] sm:$0xf] %v2877
      %2900 = vst [vmem:[#allocation3 + $0xc] sm:$0xf] %v2878
      %2901 = vst [vmem:[#allocation3 + $0x10] sm:$0xf] %v2879
      %2902 = vst [vmem:[#allocation3 + $0x14] sm:$0xf] %v2880
      %2903 = vst [vmem:[#allocation3 + $0x18] sm:$0xf] %v2881
      %2904 = vst [vmem:[#allocation3 + $0x1c] sm:$0xf] %v2882
      %2905 = vst [vmem:[#allocation3 + $0x20] sm:$0xf] %v2883
      %2906 = vst [vmem:[#allocation3 + $0x24] sm:$0xf] %v2884
      %2907 = vst [vmem:[#allocation3 + $0x28] sm:$0xf] %v2885
      %s2908 = scalar_lea.vmem [#allocation2], 1
      %v2909 = vld [vmem:[%s2908] ss:$2 sm:$0xff]
      %s2910 = scalar_lea.vmem [#allocation2], 17
      %v2911 = vld [vmem:[%s2910] ss:$2 sm:$0xff]
      %s2912 = scalar_lea.vmem [#allocation2], 33
      %v2913 = vld [vmem:[%s2912] ss:$2 sm:$0xff]
      %s2914 = scalar_lea.vmem [#allocation2], 49
      %v2915 = vld [vmem:[%s2914] ss:$2 sm:$0xff]
      %s2916 = scalar_lea.vmem [#allocation2], 65
      %v2917 = vld [vmem:[%s2916] ss:$2 sm:$0xff]
      %s2918 = scalar_lea.vmem [#allocation2], 81
      %v2919 = vld [vmem:[%s2918] ss:$2 sm:$0xff]
      %s2920 = scalar_lea.vmem [#allocation2], 97
      %v2921 = vld [vmem:[%s2920] ss:$2 sm:$0xff]
      %s2922 = scalar_lea.vmem [#allocation2], 113
      %v2923 = vld [vmem:[%s2922] ss:$2 sm:$0xff]
      %s2924 = scalar_lea.vmem [#allocation2], 129
      %v2925 = vld [vmem:[%s2924] ss:$2 sm:$0xff]
      %s2926 = scalar_lea.vmem [#allocation2], 145
      %v2927 = vld [vmem:[%s2926] ss:$2 sm:$0xff]
      %s2928 = scalar_lea.vmem [#allocation2], 161
      %v2929 = vld [vmem:[%s2928] ss:$2 sm:$0xff]
      %v2930 = vpack.c.bf16 %v2911, %v2909
      %v2931 = vpack.c.bf16 %v2915, %v2913
      %v2932 = vpack.c.bf16 %v2919, %v2917
      %v2933 = vpack.c.bf16 %v2923, %v2921
      %v2934 = vpack.c.bf16 %v2927, %v2925
      %v2935 = vpack.c.bf16 %v2929, %v2929
      %v2942 = vunpack.c.l.b16 %v2930
      %v2943 = vunpack.c.h.b16 %v2930
      %v2944 = vunpack.c.l.b16 %v2931
      %v2945 = vunpack.c.h.b16 %v2931
      %v2946 = vunpack.c.l.b16 %v2932
      %v2947 = vunpack.c.h.b16 %v2932
      %v2948 = vunpack.c.l.b16 %v2933
      %v2949 = vunpack.c.h.b16 %v2933
      %v2950 = vunpack.c.l.b16 %v2934
      %v2951 = vunpack.c.h.b16 %v2934
      %v2952 = vunpack.c.l.b16 %v2935
      %v2953 = vpack.c.b16 %v2942, %v2942
      %v2954 = vpack.c.b16 %v2943, %v2943
      %v2955 = vpack.c.b16 %v2944, %v2944
      %v2956 = vpack.c.b16 %v2945, %v2945
      %v2957 = vpack.c.b16 %v2946, %v2946
      %v2958 = vpack.c.b16 %v2947, %v2947
      %v2959 = vpack.c.b16 %v2948, %v2948
      %v2960 = vpack.c.b16 %v2949, %v2949
      %v2961 = vpack.c.b16 %v2950, %v2950
      %v2962 = vpack.c.b16 %v2951, %v2951
      %v2963 = vpack.c.b16 %v2952, %v2952
      %s2975 = scalar_lea.vmem [#allocation3], 44
      %2976 = vst [vmem:[%s2975] sm:$0xf] %v2953
      %2977 = vst [vmem:[%s2975 + $0x4] sm:$0xf] %v2954
      %2978 = vst [vmem:[%s2975 + $0x8] sm:$0xf] %v2955
      %2979 = vst [vmem:[%s2975 + $0xc] sm:$0xf] %v2956
      %2980 = vst [vmem:[%s2975 + $0x10] sm:$0xf] %v2957
      %2981 = vst [vmem:[%s2975 + $0x14] sm:$0xf] %v2958
      %2982 = vst [vmem:[%s2975 + $0x18] sm:$0xf] %v2959
      %2983 = vst [vmem:[%s2975 + $0x1c] sm:$0xf] %v2960
      %2984 = vst [vmem:[%s2975 + $0x20] sm:$0xf] %v2961
      %2985 = vst [vmem:[%s2975 + $0x24] sm:$0xf] %v2962
      %2986 = vst [vmem:[%s2975 + $0x28] sm:$0xf] %v2963
      %v2987 = vld [vmem:[%s2975] sm:$0xe]
      %v2988 = vld [vmem:[%s2975 + $0x4] sm:$0xf]
      %v2989 = vld [vmem:[%s2975 + $0x8] sm:$0xf]
      %v2990 = vld [vmem:[%s2975 + $0xc] sm:$0xf]
      %v2991 = vld [vmem:[%s2975 + $0x10] sm:$0xf]
      %v2992 = vld [vmem:[%s2975 + $0x14] sm:$0xf]
      %v2993 = vld [vmem:[%s2975 + $0x18] sm:$0xf]
      %v2994 = vld [vmem:[%s2975 + $0x1c] sm:$0xf]
      %v2995 = vld [vmem:[%s2975 + $0x20] sm:$0x3]
      %v2996 = vld [vmem:[%s4] sm:$0xf]
      %v2997 = vld [vmem:[%s4 + $0x4] sm:$0xf]
      %v2998 = vld [vmem:[%s4 + $0x8] sm:$0xf]
      %v2999 = vld [vmem:[%s4 + $0xc] sm:$0xf]
      %v3000 = vld [vmem:[%s4 + $0x10] sm:$0xf]
      %v3001 = vld [vmem:[%s4 + $0x14] sm:$0xf]
      %v3002 = vld [vmem:[%s4 + $0x18] sm:$0xf]
      %v3003 = vld [vmem:[%s4 + $0x1c] sm:$0xf]
      %v3004 = vld [vmem:[%s4 + $0x20] sm:$0xf]
      %v3005 = vld [vmem:[%s4 + $0x24] sm:$0xf]
      %v3006 = vld [vmem:[%s4 + $0x28] sm:$0xf]
      %v3007 = vld [vmem:[%s4 + $0x2c] sm:$0xf]
      %v3008 = vld [vmem:[%s4 + $0x30] sm:$0xf]
      %v3009 = vld [vmem:[%s4 + $0x34] sm:$0xf]
      %v3010 = vld [vmem:[%s4 + $0x38] sm:$0xf]
      %v3011 = vld [vmem:[%s4 + $0x3c] sm:$0xf]
      %v3012 = vld [vmem:[#allocation3] sm:$0xc]
      %v3013 = vld [vmem:[#allocation3 + $0x4] sm:$0xf]
      %v3014 = vld [vmem:[#allocation3 + $0x8] sm:$0xf]
      %v3015 = vld [vmem:[#allocation3 + $0xc] sm:$0xf]
      %v3016 = vld [vmem:[#allocation3 + $0x10] sm:$0xf]
      %v3017 = vld [vmem:[#allocation3 + $0x14] sm:$0xf]
      %v3018 = vld [vmem:[#allocation3 + $0x18] sm:$0xf]
      %v3019 = vld [vmem:[#allocation3 + $0x1c] sm:$0xf]
      %v3020 = vld [vmem:[#allocation3 + $0x20] sm:$0x3]
      %s3021 = scalar_lea.vmem %s4, 64
      %v3022 = vld [vmem:[%s3021] sm:$0xf]
      %v3023 = vld [vmem:[%s3021 + $0x4] sm:$0xf]
      %v3024 = vld [vmem:[%s3021 + $0x8] sm:$0xf]
      %v3025 = vld [vmem:[%s3021 + $0xc] sm:$0xf]
      %v3026 = vld [vmem:[%s3021 + $0x10] sm:$0xf]
      %v3027 = vld [vmem:[%s3021 + $0x14] sm:$0xf]
      %v3028 = vld [vmem:[%s3021 + $0x18] sm:$0xf]
      %v3029 = vld [vmem:[%s3021 + $0x1c] sm:$0xf]
      %v3030 = vld [vmem:[%s3021 + $0x20] sm:$0xf]
      %v3031 = vld [vmem:[%s3021 + $0x24] sm:$0xf]
      %v3032 = vld [vmem:[%s3021 + $0x28] sm:$0xf]
      %v3033 = vld [vmem:[%s3021 + $0x2c] sm:$0xf]
      %v3034 = vld [vmem:[%s3021 + $0x30] sm:$0xf]
      %v3035 = vld [vmem:[%s3021 + $0x34] sm:$0xf]
      %v3036 = vld [vmem:[%s3021 + $0x38] sm:$0xf]
      %v3037 = vld [vmem:[%s3021 + $0x3c] sm:$0xf]
      %v3047 = vunpack.c.l.b16 %v3012
      %v3048 = vunpack.c.l.b16 %v3013
      %v3049 = vunpack.c.l.b16 %v3014
      %v3050 = vunpack.c.l.b16 %v3015
      %v3051 = vunpack.c.l.b16 %v3016
      %v3052 = vunpack.c.l.b16 %v3017
      %v3053 = vunpack.c.l.b16 %v3018
      %v3054 = vunpack.c.l.b16 %v3019
      %v3055 = vunpack.c.l.b16 %v3020
      %v3056 = vpack.c.b16 %v3048, %v3047
      %v3057 = vpack.c.b16 %v3050, %v3049
      %v3058 = vpack.c.b16 %v3052, %v3051
      %v3059 = vpack.c.b16 %v3054, %v3053
      %v3060 = vpack.c.b16 %v3055, %v3055
      %vm3061 = vcmask 1045504
      %v3062 = vrot.slane %v3056, 2
      %v3063 = vrot.slane %v3057, 2
      %v3064 = vsel %vm3061, %v3062, %v3063
      %v3065 = vrot.slane %v3058, 2
      %v3066 = vsel %vm3061, %v3063, %v3065
      %v3067 = vrot.slane %v3059, 2
      %v3068 = vsel %vm3061, %v3065, %v3067
      %v3069 = vrot.slane %v3060, 2
      %v3070 = vsel %vm3061, %v3067, %v3069
      %v3091 = vunpack.c.l.b16 %v3022
      %v3092 = vunpack.c.l.b16 %v3023
      %v3093 = vunpack.c.l.b16 %v3024
      %v3094 = vunpack.c.l.b16 %v3025
      %v3095 = vunpack.c.l.b16 %v3026
      %v3096 = vunpack.c.l.b16 %v3027
      %v3097 = vunpack.c.l.b16 %v3028
      %v3098 = vunpack.c.l.b16 %v3029
      %v3099 = vunpack.c.l.b16 %v3030
      %v3100 = vunpack.c.l.b16 %v3031
      %v3101 = vunpack.c.l.b16 %v3032
      %v3102 = vunpack.c.l.b16 %v3033
      %v3103 = vunpack.c.l.b16 %v3034
      %v3104 = vunpack.c.l.b16 %v3035
      %v3105 = vunpack.c.l.b16 %v3036
      %v3106 = vunpack.c.l.b16 %v3037
      %v3107 = vpack.c.b16 %v3092, %v3091
      %v3108 = vpack.c.b16 %v3094, %v3093
      %v3109 = vpack.c.b16 %v3096, %v3095
      %v3110 = vpack.c.b16 %v3098, %v3097
      %v3111 = vpack.c.b16 %v3100, %v3099
      %v3112 = vpack.c.b16 %v3102, %v3101
      %v3113 = vpack.c.b16 %v3104, %v3103
      %v3114 = vpack.c.b16 %v3106, %v3105
      %3123 = vmatprep.subr.bf16.mxu0 0
      %3124 = vmatpush1.bf16.msra.mxu0 %v3107
      %3125 = vmatprep.subr.bf16.mxu0 0
      %3126 = vmatpush1.bf16.msra.mxu0 %v3108
      %3127 = vmatprep.subr.bf16.mxu0 0
      %3128 = vmatpush1.bf16.msra.mxu0 %v3109
      %3129 = vmatprep.subr.bf16.mxu0 0
      %3130 = vmatpush1.bf16.msra.mxu0 %v3110
      %3131 = vmatprep.subr.bf16.mxu0 0
      %3132 = vmatpush1.bf16.msra.mxu0 %v3111
      %3133 = vmatprep.subr.bf16.mxu0 0
      %3134 = vmatpush1.bf16.msra.mxu0 %v3112
      %3135 = vmatprep.subr.bf16.mxu0 0
      %3136 = vmatpush1.bf16.msra.mxu0 %v3113
      %3137 = vmatprep.subr.bf16.mxu0 0
      %3138 = vmatpush1.bf16.msra.mxu0 %v3114
      %3139 = vmatprep.subr.bf16.mxu0 0
      %3140 = vmatpush1.bf16.msra.mxu0 0
      %3141 = vmatprep.subr.bf16.mxu0 0
      %3142 = vmatpush1.bf16.msra.mxu0 0
      %3143 = vmatprep.subr.bf16.mxu0 0
      %3144 = vmatpush1.bf16.msra.mxu0 0
      %3145 = vmatprep.subr.bf16.mxu0 0
      %3146 = vmatpush1.bf16.msra.mxu0 0
      %3147 = vmatprep.subr.bf16.mxu0 0
      %3148 = vmatpush1.bf16.msra.mxu0 0
      %3149 = vmatprep.subr.bf16.mxu0 0
      %3150 = vmatpush1.bf16.msra.mxu0 0
      %3151 = vmatprep.subr.bf16.mxu0 0
      %3152 = vmatpush1.bf16.msra.mxu0 0
      %3153 = vmatprep.subr.bf16.mxu0 0
      %3154 = vmatpush1.bf16.msra.mxu0 0
      %3155 = vmatprep.mubr.bf16.mxu0 0
      %3156 = vmatmul.mubr.bf16.gmra.mrb[0].mxu0 %v3064
      %v3157 = vpop.f32.mrb[0].mxu0
      %v3158 = vadd.f32 0.0, %v3157
      %v3159 = vpop.f32.mrb[0].mxu0
      %v3160 = vpop.f32.mrb[0].mxu0
      %v3161 = vadd.f32 0.0, %v3160
      %v3162 = vpop.f32.mrb[0].mxu0
      %3163 = vmatprep.mubr.bf16.mxu0 0
      %3164 = vmatmul.mubr.bf16.gmra.mrb[0].mxu0 %v3066
      %v3165 = vpop.f32.mrb[0].mxu0
      %v3166 = vadd.f32 0.0, %v3165
      %v3167 = vpop.f32.mrb[0].mxu0
      %v3168 = vpop.f32.mrb[0].mxu0
      %v3169 = vadd.f32 0.0, %v3168
      %v3170 = vpop.f32.mrb[0].mxu0
      %3171 = vmatprep.mubr.bf16.mxu0 0
      %3172 = vmatmul.mubr.bf16.gmra.mrb[0].mxu0 %v3068
      %v3173 = vpop.f32.mrb[0].mxu0
      %v3174 = vadd.f32 0.0, %v3173
      %v3175 = vpop.f32.mrb[0].mxu0
      %v3176 = vpop.f32.mrb[0].mxu0
      %v3177 = vadd.f32 0.0, %v3176
      %v3178 = vpop.f32.mrb[0].mxu0
      %3179 = vmatprep.mubr.bf16.mxu0 0
      %3180 = vmatmul.mubr.bf16.gmra.mrb[0].mxu0 %v3070
      %v3181 = vpop.f32.mrb[0].mxu0
      %v3182 = vadd.f32 0.0, %v3181
      %v3183 = vpop.f32.mrb[0].mxu0
      %v3184 = vpop.f32.mrb[0].mxu0
      %v3185 = vadd.f32 0.0, %v3184
      %v3186 = vpop.f32.mrb[0].mxu0
      %3187 = vdwg.mxu0
      %v3197 = vunpack.c.l.b16 %v2987
      %v3198 = vunpack.c.l.b16 %v2988
      %v3199 = vunpack.c.l.b16 %v2989
      %v3200 = vunpack.c.l.b16 %v2990
      %v3201 = vunpack.c.l.b16 %v2991
      %v3202 = vunpack.c.l.b16 %v2992
      %v3203 = vunpack.c.l.b16 %v2993
      %v3204 = vunpack.c.l.b16 %v2994
      %v3205 = vunpack.c.l.b16 %v2995
      %v3206 = vpack.c.b16 %v3198, %v3197
      %v3207 = vpack.c.b16 %v3200, %v3199
      %v3208 = vpack.c.b16 %v3202, %v3201
      %v3209 = vpack.c.b16 %v3204, %v3203
      %v3210 = vpack.c.b16 %v3205, %v3205
      %vm3211 = vsmask.f32 6400
      %v3213 = vshrl.u32 %v3206, 16
      %v3215 = vrot.slane %v3213, 1
      %v3216 = vshll.u32 %v3206, 16
      %v3218 = vrot.slane %v3216, 2
      %v3219 = vor.u32 %v3215, %v3218
      %v3221 = vshrl.u32 %v3207, 16
      %v3223 = vrot.slane %v3221, 1
      %v3224 = vshll.u32 %v3207, 16
      %v3226 = vrot.slane %v3224, 2
      %v3227 = vor.u32 %v3223, %v3226
      %v3228 = vsel %vm3211, %v3219, %v3227
      %v3230 = vshrl.u32 %v3208, 16
      %v3232 = vrot.slane %v3230, 1
      %v3233 = vshll.u32 %v3208, 16
      %v3235 = vrot.slane %v3233, 2
      %v3236 = vor.u32 %v3232, %v3235
      %v3237 = vsel %vm3211, %v3227, %v3236
      %v3239 = vshrl.u32 %v3209, 16
      %v3241 = vrot.slane %v3239, 1
      %v3242 = vshll.u32 %v3209, 16
      %v3244 = vrot.slane %v3242, 2
      %v3245 = vor.u32 %v3241, %v3244
      %v3246 = vsel %vm3211, %v3236, %v3245
      %v3248 = vshrl.u32 %v3210, 16
      %v3250 = vrot.slane %v3248, 1
      %v3251 = vshll.u32 %v3210, 16
      %v3253 = vrot.slane %v3251, 2
      %v3254 = vor.u32 %v3250, %v3253
      %v3255 = vsel %vm3211, %v3245, %v3254
      %v3276 = vunpack.c.l.b16 %v2996
      %v3277 = vunpack.c.l.b16 %v2997
      %v3278 = vunpack.c.l.b16 %v2998
      %v3279 = vunpack.c.l.b16 %v2999
      %v3280 = vunpack.c.l.b16 %v3000
      %v3281 = vunpack.c.l.b16 %v3001
      %v3282 = vunpack.c.l.b16 %v3002
      %v3283 = vunpack.c.l.b16 %v3003
      %v3284 = vunpack.c.l.b16 %v3004
      %v3285 = vunpack.c.l.b16 %v3005
      %v3286 = vunpack.c.l.b16 %v3006
      %v3287 = vunpack.c.l.b16 %v3007
      %v3288 = vunpack.c.l.b16 %v3008
      %v3289 = vunpack.c.l.b16 %v3009
      %v3290 = vunpack.c.l.b16 %v3010
      %v3291 = vunpack.c.l.b16 %v3011
      %v3292 = vpack.c.b16 %v3277, %v3276
      %v3293 = vpack.c.b16 %v3279, %v3278
      %v3294 = vpack.c.b16 %v3281, %v3280
      %v3295 = vpack.c.b16 %v3283, %v3282
      %v3296 = vpack.c.b16 %v3285, %v3284
      %v3297 = vpack.c.b16 %v3287, %v3286
      %v3298 = vpack.c.b16 %v3289, %v3288
      %v3299 = vpack.c.b16 %v3291, %v3290
      %3308 = vmatprep.subr.bf16.mxu0 0
      %3309 = vmatpush1.bf16.msra.mxu0 %v3292
      %3310 = vmatprep.subr.bf16.mxu0 0
      %3311 = vmatpush1.bf16.msra.mxu0 %v3293
      %3312 = vmatprep.subr.bf16.mxu0 0
      %3313 = vmatpush1.bf16.msra.mxu0 %v3294
      %3314 = vmatprep.subr.bf16.mxu0 0
      %3315 = vmatpush1.bf16.msra.mxu0 %v3295
      %3316 = vmatprep.subr.bf16.mxu0 0
      %3317 = vmatpush1.bf16.msra.mxu0 %v3296
      %3318 = vmatprep.subr.bf16.mxu0 0
      %3319 = vmatpush1.bf16.msra.mxu0 %v3297
      %3320 = vmatprep.subr.bf16.mxu0 0
      %3321 = vmatpush1.bf16.msra.mxu0 %v3298
      %3322 = vmatprep.subr.bf16.mxu0 0
      %3323 = vmatpush1.bf16.msra.mxu0 %v3299
      %3324 = vmatprep.subr.bf16.mxu0 0
      %3325 = vmatpush1.bf16.msra.mxu0 0
      %3326 = vmatprep.subr.bf16.mxu0 0
      %3327 = vmatpush1.bf16.msra.mxu0 0
      %3328 = vmatprep.subr.bf16.mxu0 0
      %3329 = vmatpush1.bf16.msra.mxu0 0
      %3330 = vmatprep.subr.bf16.mxu0 0
      %3331 = vmatpush1.bf16.msra.mxu0 0
      %3332 = vmatprep.subr.bf16.mxu0 0
      %3333 = vmatpush1.bf16.msra.mxu0 0
      %3334 = vmatprep.subr.bf16.mxu0 0
      %3335 = vmatpush1.bf16.msra.mxu0 0
      %3336 = vmatprep.subr.bf16.mxu0 0
      %3337 = vmatpush1.bf16.msra.mxu0 0
      %3338 = vmatprep.subr.bf16.mxu0 0
      %3339 = vmatpush1.bf16.msra.mxu0 0
      %3340 = vmatprep.mubr.bf16.mxu0 0
      %3341 = vmatmul.mubr.bf16.gmra.mrb[0].mxu0 %v3228
      %v3342 = vpop.f32.mrb[0].mxu0
      %v3343 = vadd.f32 %v3158, %v3342
      %v3344 = vpop.f32.mrb[0].mxu0
      %v3345 = vpop.f32.mrb[0].mxu0
      %v3346 = vadd.f32 %v3161, %v3345
      %v3347 = vpop.f32.mrb[0].mxu0
      %3348 = vmatprep.mubr.bf16.mxu0 0
      %3349 = vmatmul.mubr.bf16.gmra.mrb[0].mxu0 %v3237
      %v3350 = vpop.f32.mrb[0].mxu0
      %v3351 = vadd.f32 %v3166, %v3350
      %v3352 = vpop.f32.mrb[0].mxu0
      %v3353 = vpop.f32.mrb[0].mxu0
      %v3354 = vadd.f32 %v3169, %v3353
      %v3355 = vpop.f32.mrb[0].mxu0
      %3356 = vmatprep.mubr.bf16.mxu0 0
      %3357 = vmatmul.mubr.bf16.gmra.mrb[0].mxu0 %v3246
      %v3358 = vpop.f32.mrb[0].mxu0
      %v3359 = vadd.f32 %v3174, %v3358
      %v3360 = vpop.f32.mrb[0].mxu0
      %v3361 = vpop.f32.mrb[0].mxu0
      %v3362 = vadd.f32 %v3177, %v3361
      %v3363 = vpop.f32.mrb[0].mxu0
      %3364 = vmatprep.mubr.bf16.mxu0 0
      %3365 = vmatmul.mubr.bf16.gmra.mrb[0].mxu0 %v3255
      %v3366 = vpop.f32.mrb[0].mxu0
      %v3367 = vadd.f32 %v3182, %v3366
      %v3368 = vpop.f32.mrb[0].mxu0
      %v3369 = vpop.f32.mrb[0].mxu0
      %v3370 = vadd.f32 %v3185, %v3369
      %v3371 = vpop.f32.mrb[0].mxu0
      %3372 = vdwg.mxu0
      %v3373 = vld [vmem:[%s2975] sm:$0xc]
      %s3374 = scalar_lea.vmem %s4, 128
      %v3375 = vld [vmem:[%s3374] sm:$0xf]
      %v3376 = vld [vmem:[%s3374 + $0x4] sm:$0xf]
      %v3377 = vld [vmem:[%s3374 + $0x8] sm:$0xf]
      %v3378 = vld [vmem:[%s3374 + $0xc] sm:$0xf]
      %v3379 = vld [vmem:[%s3374 + $0x10] sm:$0xf]
      %v3380 = vld [vmem:[%s3374 + $0x14] sm:$0xf]
      %v3381 = vld [vmem:[%s3374 + $0x18] sm:$0xf]
      %v3382 = vld [vmem:[%s3374 + $0x1c] sm:$0xf]
      %v3383 = vld [vmem:[%s3374 + $0x20] sm:$0xf]
      %v3384 = vld [vmem:[%s3374 + $0x24] sm:$0xf]
      %v3385 = vld [vmem:[%s3374 + $0x28] sm:$0xf]
      %v3386 = vld [vmem:[%s3374 + $0x2c] sm:$0xf]
      %v3387 = vld [vmem:[%s3374 + $0x30] sm:$0xf]
      %v3388 = vld [vmem:[%s3374 + $0x34] sm:$0xf]
      %v3389 = vld [vmem:[%s3374 + $0x38] sm:$0xf]
      %v3390 = vld [vmem:[%s3374 + $0x3c] sm:$0xf]
      %v3392 = vunpack.c.l.b16 %v3373
      %v3393 = vpack.c.b16 %v3198, %v3392
      %v3394 = vrot.slane %v3393, 2
      %v3395 = vrot.slane %v3207, 2
      %v3396 = vsel %vm3061, %v3394, %v3395
      %v3397 = vrot.slane %v3208, 2
      %v3398 = vsel %vm3061, %v3395, %v3397
      %v3399 = vrot.slane %v3209, 2
      %v3400 = vsel %vm3061, %v3397, %v3399
      %v3401 = vrot.slane %v3210, 2
      %v3402 = vsel %vm3061, %v3399, %v3401
      %v3423 = vunpack.c.l.b16 %v3375
      %v3424 = vunpack.c.l.b16 %v3376
      %v3425 = vunpack.c.l.b16 %v3377
      %v3426 = vunpack.c.l.b16 %v3378
      %v3427 = vunpack.c.l.b16 %v3379
      %v3428 = vunpack.c.l.b16 %v3380
      %v3429 = vunpack.c.l.b16 %v3381
      %v3430 = vunpack.c.l.b16 %v3382
      %v3431 = vunpack.c.l.b16 %v3383
      %v3432 = vunpack.c.l.b16 %v3384
      %v3433 = vunpack.c.l.b16 %v3385
      %v3434 = vunpack.c.l.b16 %v3386
      %v3435 = vunpack.c.l.b16 %v3387
      %v3436 = vunpack.c.l.b16 %v3388
      %v3437 = vunpack.c.l.b16 %v3389
      %v3438 = vunpack.c.l.b16 %v3390
      %v3439 = vpack.c.b16 %v3424, %v3423
      %v3440 = vpack.c.b16 %v3426, %v3425
      %v3441 = vpack.c.b16 %v3428, %v3427
      %v3442 = vpack.c.b16 %v3430, %v3429
      %v3443 = vpack.c.b16 %v3432, %v3431
      %v3444 = vpack.c.b16 %v3434, %v3433
      %v3445 = vpack.c.b16 %v3436, %v3435
      %v3446 = vpack.c.b16 %v3438, %v3437
      %3455 = vmatprep.subr.bf16.mxu0 0
      %3456 = vmatpush1.bf16.msra.mxu0 %v3439
      %3457 = vmatprep.subr.bf16.mxu0 0
      %3458 = vmatpush1.bf16.msra.mxu0 %v3440
      %3459 = vmatprep.subr.bf16.mxu0 0
      %3460 = vmatpush1.bf16.msra.mxu0 %v3441
      %3461 = vmatprep.subr.bf16.mxu0 0
      %3462 = vmatpush1.bf16.msra.mxu0 %v3442
      %3463 = vmatprep.subr.bf16.mxu0 0
      %3464 = vmatpush1.bf16.msra.mxu0 %v3443
      %3465 = vmatprep.subr.bf16.mxu0 0
      %3466 = vmatpush1.bf16.msra.mxu0 %v3444
      %3467 = vmatprep.subr.bf16.mxu0 0
      %3468 = vmatpush1.bf16.msra.mxu0 %v3445
      %3469 = vmatprep.subr.bf16.mxu0 0
      %3470 = vmatpush1.bf16.msra.mxu0 %v3446
      %3471 = vmatprep.subr.bf16.mxu0 0
      %3472 = vmatpush1.bf16.msra.mxu0 0
      %3473 = vmatprep.subr.bf16.mxu0 0
      %3474 = vmatpush1.bf16.msra.mxu0 0
      %3475 = vmatprep.subr.bf16.mxu0 0
      %3476 = vmatpush1.bf16.msra.mxu0 0
      %3477 = vmatprep.subr.bf16.mxu0 0
      %3478 = vmatpush1.bf16.msra.mxu0 0
      %3479 = vmatprep.subr.bf16.mxu0 0
      %3480 = vmatpush1.bf16.msra.mxu0 0
      %3481 = vmatprep.subr.bf16.mxu0 0
      %3482 = vmatpush1.bf16.msra.mxu0 0
      %3483 = vmatprep.subr.bf16.mxu0 0
      %3484 = vmatpush1.bf16.msra.mxu0 0
      %3485 = vmatprep.subr.bf16.mxu0 0
      %3486 = vmatpush1.bf16.msra.mxu0 0
      %3487 = vmatprep.mubr.bf16.mxu0 0
      %3488 = vmatmul.mubr.bf16.gmra.mrb[0].mxu0 %v3396
      %v3489 = vpop.f32.mrb[0].mxu0
      %v3490 = vadd.f32 0.0, %v3489
      %v3491 = vpop.f32.mrb[0].mxu0
      %v3492 = vpop.f32.mrb[0].mxu0
      %v3493 = vadd.f32 0.0, %v3492
      %v3494 = vpop.f32.mrb[0].mxu0
      %3495 = vmatprep.mubr.bf16.mxu0 0
      %3496 = vmatmul.mubr.bf16.gmra.mrb[0].mxu0 %v3398
      %v3497 = vpop.f32.mrb[0].mxu0
      %v3498 = vadd.f32 0.0, %v3497
      %v3499 = vpop.f32.mrb[0].mxu0
      %v3500 = vpop.f32.mrb[0].mxu0
      %v3501 = vadd.f32 0.0, %v3500
      %v3502 = vpop.f32.mrb[0].mxu0
      %3503 = vmatprep.mubr.bf16.mxu0 0
      %3504 = vmatmul.mubr.bf16.gmra.mrb[0].mxu0 %v3400
      %v3505 = vpop.f32.mrb[0].mxu0
      %v3506 = vadd.f32 0.0, %v3505
      %v3507 = vpop.f32.mrb[0].mxu0
      %v3508 = vpop.f32.mrb[0].mxu0
      %v3509 = vadd.f32 0.0, %v3508
      %v3510 = vpop.f32.mrb[0].mxu0
      %3511 = vmatprep.mubr.bf16.mxu0 0
      %3512 = vmatmul.mubr.bf16.gmra.mrb[0].mxu0 %v3402
      %v3513 = vpop.f32.mrb[0].mxu0
      %v3514 = vadd.f32 0.0, %v3513
      %v3515 = vpop.f32.mrb[0].mxu0
      %v3516 = vpop.f32.mrb[0].mxu0
      %v3517 = vadd.f32 0.0, %v3516
      %v3518 = vpop.f32.mrb[0].mxu0
      %3519 = vdwg.mxu0
      %v3520 = vadd.f32 %v3343, %v3490
      %v3521 = vadd.f32 %v3346, %v3493
      %v3522 = vadd.f32 %v3351, %v3498
      %v3523 = vadd.f32 %v3354, %v3501
      %v3524 = vadd.f32 %v3359, %v3506
      %v3525 = vadd.f32 %v3362, %v3509
      %v3526 = vadd.f32 %v3367, %v3514
      %v3527 = vadd.f32 %v3370, %v3517
      %v3528 = vld [vmem:[%s2975 + $0x4] sm:$0xe]
      %v3529 = vld [vmem:[%s2975 + $0x8] sm:$0xf]
      %v3530 = vld [vmem:[%s2975 + $0xc] sm:$0xf]
      %v3531 = vld [vmem:[%s2975 + $0x10] sm:$0xf]
      %v3532 = vld [vmem:[%s2975 + $0x14] sm:$0xf]
      %v3533 = vld [vmem:[%s2975 + $0x18] sm:$0xf]
      %v3534 = vld [vmem:[%s2975 + $0x1c] sm:$0xf]
      %v3535 = vld [vmem:[%s2975 + $0x20] sm:$0xf]
      %v3536 = vld [vmem:[%s2975 + $0x24] sm:$0x3]
      %s3537 = scalar_lea.vmem %s4, 192
      %v3538 = vld [vmem:[%s3537] sm:$0xf]
      %v3539 = vld [vmem:[%s3537 + $0x4] sm:$0xf]
      %v3540 = vld [vmem:[%s3537 + $0x8] sm:$0xf]
      %v3541 = vld [vmem:[%s3537 + $0xc] sm:$0xf]
      %v3542 = vld [vmem:[%s3537 + $0x10] sm:$0xf]
      %v3543 = vld [vmem:[%s3537 + $0x14] sm:$0xf]
      %v3544 = vld [vmem:[%s3537 + $0x18] sm:$0xf]
      %v3545 = vld [vmem:[%s3537 + $0x1c] sm:$0xf]
      %v3546 = vld [vmem:[%s3537 + $0x20] sm:$0xf]
      %v3547 = vld [vmem:[%s3537 + $0x24] sm:$0xf]
      %v3548 = vld [vmem:[%s3537 + $0x28] sm:$0xf]
      %v3549 = vld [vmem:[%s3537 + $0x2c] sm:$0xf]
      %v3550 = vld [vmem:[%s3537 + $0x30] sm:$0xf]
      %v3551 = vld [vmem:[%s3537 + $0x34] sm:$0xf]
      %v3552 = vld [vmem:[%s3537 + $0x38] sm:$0xf]
      %v3553 = vld [vmem:[%s3537 + $0x3c] sm:$0xf]
      %v3563 = vunpack.c.l.b16 %v3528
      %v3564 = vunpack.c.l.b16 %v3529
      %v3565 = vunpack.c.l.b16 %v3530
      %v3566 = vunpack.c.l.b16 %v3531
      %v3567 = vunpack.c.l.b16 %v3532
      %v3568 = vunpack.c.l.b16 %v3533
      %v3569 = vunpack.c.l.b16 %v3534
      %v3570 = vunpack.c.l.b16 %v3535
      %v3571 = vunpack.c.l.b16 %v3536
      %v3572 = vpack.c.b16 %v3564, %v3563
      %v3573 = vpack.c.b16 %v3566, %v3565
      %v3574 = vpack.c.b16 %v3568, %v3567
      %v3575 = vpack.c.b16 %v3570, %v3569
      %v3576 = vpack.c.b16 %v3571, %v3571
      %v3578 = vshrl.u32 %v3572, 16
      %v3580 = vrot.slane %v3578, 1
      %v3581 = vshll.u32 %v3572, 16
      %v3583 = vrot.slane %v3581, 2
      %v3584 = vor.u32 %v3580, %v3583
      %v3586 = vshrl.u32 %v3573, 16
      %v3588 = vrot.slane %v3586, 1
      %v3589 = vshll.u32 %v3573, 16
      %v3591 = vrot.slane %v3589, 2
      %v3592 = vor.u32 %v3588, %v3591
      %v3593 = vsel %vm3211, %v3584, %v3592
      %v3595 = vshrl.u32 %v3574, 16
      %v3597 = vrot.slane %v3595, 1
      %v3598 = vshll.u32 %v3574, 16
      %v3600 = vrot.slane %v3598, 2
      %v3601 = vor.u32 %v3597, %v3600
      %v3602 = vsel %vm3211, %v3592, %v3601
      %v3604 = vshrl.u32 %v3575, 16
      %v3606 = vrot.slane %v3604, 1
      %v3607 = vshll.u32 %v3575, 16
      %v3609 = vrot.slane %v3607, 2
      %v3610 = vor.u32 %v3606, %v3609
      %v3611 = vsel %vm3211, %v3601, %v3610
      %v3613 = vshrl.u32 %v3576, 16
      %v3615 = vrot.slane %v3613, 1
      %v3616 = vshll.u32 %v3576, 16
      %v3618 = vrot.slane %v3616, 2
      %v3619 = vor.u32 %v3615, %v3618
      %v3620 = vsel %vm3211, %v3610, %v3619
      %v3641 = vunpack.c.l.b16 %v3538
      %v3642 = vunpack.c.l.b16 %v3539
      %v3643 = vunpack.c.l.b16 %v3540
      %v3644 = vunpack.c.l.b16 %v3541
      %v3645 = vunpack.c.l.b16 %v3542
      %v3646 = vunpack.c.l.b16 %v3543
      %v3647 = vunpack.c.l.b16 %v3544
      %v3648 = vunpack.c.l.b16 %v3545
      %v3649 = vunpack.c.l.b16 %v3546
      %v3650 = vunpack.c.l.b16 %v3547
      %v3651 = vunpack.c.l.b16 %v3548
      %v3652 = vunpack.c.l.b16 %v3549
      %v3653 = vunpack.c.l.b16 %v3550
      %v3654 = vunpack.c.l.b16 %v3551
      %v3655 = vunpack.c.l.b16 %v3552
      %v3656 = vunpack.c.l.b16 %v3553
      %v3657 = vpack.c.b16 %v3642, %v3641
      %v3658 = vpack.c.b16 %v3644, %v3643
      %v3659 = vpack.c.b16 %v3646, %v3645
      %v3660 = vpack.c.b16 %v3648, %v3647
      %v3661 = vpack.c.b16 %v3650, %v3649
      %v3662 = vpack.c.b16 %v3652, %v3651
      %v3663 = vpack.c.b16 %v3654, %v3653
      %v3664 = vpack.c.b16 %v3656, %v3655
      %3673 = vmatprep.subr.bf16.mxu0 0
      %3674 = vmatpush1.bf16.msra.mxu0 %v3657
      %3675 = vmatprep.subr.bf16.mxu0 0
      %3676 = vmatpush1.bf16.msra.mxu0 %v3658
      %3677 = vmatprep.subr.bf16.mxu0 0
      %3678 = vmatpush1.bf16.msra.mxu0 %v3659
      %3679 = vmatprep.subr.bf16.mxu0 0
      %3680 = vmatpush1.bf16.msra.mxu0 %v3660
      %3681 = vmatprep.subr.bf16.mxu0 0
      %3682 = vmatpush1.bf16.msra.mxu0 %v3661
      %3683 = vmatprep.subr.bf16.mxu0 0
      %3684 = vmatpush1.bf16.msra.mxu0 %v3662
      %3685 = vmatprep.subr.bf16.mxu0 0
      %3686 = vmatpush1.bf16.msra.mxu0 %v3663
      %3687 = vmatprep.subr.bf16.mxu0 0
      %3688 = vmatpush1.bf16.msra.mxu0 %v3664
      %3689 = vmatprep.subr.bf16.mxu0 0
      %3690 = vmatpush1.bf16.msra.mxu0 0
      %3691 = vmatprep.subr.bf16.mxu0 0
      %3692 = vmatpush1.bf16.msra.mxu0 0
      %3693 = vmatprep.subr.bf16.mxu0 0
      %3694 = vmatpush1.bf16.msra.mxu0 0
      %3695 = vmatprep.subr.bf16.mxu0 0
      %3696 = vmatpush1.bf16.msra.mxu0 0
      %3697 = vmatprep.subr.bf16.mxu0 0
      %3698 = vmatpush1.bf16.msra.mxu0 0
      %3699 = vmatprep.subr.bf16.mxu0 0
      %3700 = vmatpush1.bf16.msra.mxu0 0
      %3701 = vmatprep.subr.bf16.mxu0 0
      %3702 = vmatpush1.bf16.msra.mxu0 0
      %3703 = vmatprep.subr.bf16.mxu0 0
      %3704 = vmatpush1.bf16.msra.mxu0 0
      %3705 = vmatprep.mubr.bf16.mxu0 0
      %3706 = vmatmul.mubr.bf16.gmra.mrb[0].mxu0 %v3593
      %v3707 = vpop.f32.mrb[0].mxu0
      %v3708 = vadd.f32 0.0, %v3707
      %v3709 = vpop.f32.mrb[0].mxu0
      %v3710 = vpop.f32.mrb[0].mxu0
      %v3711 = vadd.f32 0.0, %v3710
      %v3712 = vpop.f32.mrb[0].mxu0
      %3713 = vmatprep.mubr.bf16.mxu0 0
      %3714 = vmatmul.mubr.bf16.gmra.mrb[0].mxu0 %v3602
      %v3715 = vpop.f32.mrb[0].mxu0
      %v3716 = vadd.f32 0.0, %v3715
      %v3717 = vpop.f32.mrb[0].mxu0
      %v3718 = vpop.f32.mrb[0].mxu0
      %v3719 = vadd.f32 0.0, %v3718
      %v3720 = vpop.f32.mrb[0].mxu0
      %3721 = vmatprep.mubr.bf16.mxu0 0
      %3722 = vmatmul.mubr.bf16.gmra.mrb[0].mxu0 %v3611
      %v3723 = vpop.f32.mrb[0].mxu0
      %v3724 = vadd.f32 0.0, %v3723
      %v3725 = vpop.f32.mrb[0].mxu0
      %v3726 = vpop.f32.mrb[0].mxu0
      %v3727 = vadd.f32 0.0, %v3726
      %v3728 = vpop.f32.mrb[0].mxu0
      %3729 = vmatprep.mubr.bf16.mxu0 0
      %3730 = vmatmul.mubr.bf16.gmra.mrb[0].mxu0 %v3620
      %v3731 = vpop.f32.mrb[0].mxu0
      %v3732 = vadd.f32 0.0, %v3731
      %v3733 = vpop.f32.mrb[0].mxu0
      %v3734 = vpop.f32.mrb[0].mxu0
      %v3735 = vadd.f32 0.0, %v3734
      %v3736 = vpop.f32.mrb[0].mxu0
      %3737 = vdwg.mxu0
      %v3738 = vadd.f32 %v3520, %v3708
      %v3739 = vadd.f32 %v3521, %v3711
      %v3740 = vadd.f32 %v3522, %v3716
      %v3741 = vadd.f32 %v3523, %v3719
      %v3742 = vadd.f32 %v3524, %v3724
      %v3743 = vadd.f32 %v3525, %v3727
      %v3744 = vadd.f32 %v3526, %v3732
      %v3745 = vadd.f32 %v3527, %v3735
      %v3746 = vld [vmem:[#allocation3 + $0x4] sm:$0xc]
      %v3747 = vld [vmem:[#allocation3 + $0x8] sm:$0xf]
      %v3748 = vld [vmem:[#allocation3 + $0xc] sm:$0xf]
      %v3749 = vld [vmem:[#allocation3 + $0x10] sm:$0xf]
      %v3750 = vld [vmem:[#allocation3 + $0x14] sm:$0xf]
      %v3751 = vld [vmem:[#allocation3 + $0x18] sm:$0xf]
      %v3752 = vld [vmem:[#allocation3 + $0x1c] sm:$0xf]
      %v3753 = vld [vmem:[#allocation3 + $0x20] sm:$0xf]
      %v3754 = vld [vmem:[#allocation3 + $0x24] sm:$0x3]
      %s3755 = scalar_lea.vmem %s4, 256
      %v3756 = vld [vmem:[%s3755] sm:$0xf]
      %v3757 = vld [vmem:[%s3755 + $0x4] sm:$0xf]
      %v3758 = vld [vmem:[%s3755 + $0x8] sm:$0xf]
      %v3759 = vld [vmem:[%s3755 + $0xc] sm:$0xf]
      %v3760 = vld [vmem:[%s3755 + $0x10] sm:$0xf]
      %v3761 = vld [vmem:[%s3755 + $0x14] sm:$0xf]
      %v3762 = vld [vmem:[%s3755 + $0x18] sm:$0xf]
      %v3763 = vld [vmem:[%s3755 + $0x1c] sm:$0xf]
      %v3764 = vld [vmem:[%s3755 + $0x20] sm:$0xf]
      %v3765 = vld [vmem:[%s3755 + $0x24] sm:$0xf]
      %v3766 = vld [vmem:[%s3755 + $0x28] sm:$0xf]
      %v3767 = vld [vmem:[%s3755 + $0x2c] sm:$0xf]
      %v3768 = vld [vmem:[%s3755 + $0x30] sm:$0xf]
      %v3769 = vld [vmem:[%s3755 + $0x34] sm:$0xf]
      %v3770 = vld [vmem:[%s3755 + $0x38] sm:$0xf]
      %v3771 = vld [vmem:[%s3755 + $0x3c] sm:$0xf]
      %v3781 = vunpack.c.l.b16 %v3746
      %v3782 = vunpack.c.l.b16 %v3747
      %v3783 = vunpack.c.l.b16 %v3748
      %v3784 = vunpack.c.l.b16 %v3749
      %v3785 = vunpack.c.l.b16 %v3750
      %v3786 = vunpack.c.l.b16 %v3751
      %v3787 = vunpack.c.l.b16 %v3752
      %v3788 = vunpack.c.l.b16 %v3753
      %v3789 = vunpack.c.l.b16 %v3754
      %v3790 = vpack.c.b16 %v3782, %v3781
      %v3791 = vpack.c.b16 %v3784, %v3783
      %v3792 = vpack.c.b16 %v3786, %v3785
      %v3793 = vpack.c.b16 %v3788, %v3787
      %v3794 = vpack.c.b16 %v3789, %v3789
      %v3795 = vrot.slane %v3790, 2
      %v3796 = vrot.slane %v3791, 2
      %v3797 = vsel %vm3061, %v3795, %v3796
      %v3798 = vrot.slane %v3792, 2
      %v3799 = vsel %vm3061, %v3796, %v3798
      %v3800 = vrot.slane %v3793, 2
      %v3801 = vsel %vm3061, %v3798, %v3800
      %v3802 = vrot.slane %v3794, 2
      %v3803 = vsel %vm3061, %v3800, %v3802
      %v3824 = vunpack.c.l.b16 %v3756
      %v3825 = vunpack.c.l.b16 %v3757
      %v3826 = vunpack.c.l.b16 %v3758
      %v3827 = vunpack.c.l.b16 %v3759
      %v3828 = vunpack.c.l.b16 %v3760
      %v3829 = vunpack.c.l.b16 %v3761
      %v3830 = vunpack.c.l.b16 %v3762
      %v3831 = vunpack.c.l.b16 %v3763
      %v3832 = vunpack.c.l.b16 %v3764
      %v3833 = vunpack.c.l.b16 %v3765
      %v3834 = vunpack.c.l.b16 %v3766
      %v3835 = vunpack.c.l.b16 %v3767
      %v3836 = vunpack.c.l.b16 %v3768
      %v3837 = vunpack.c.l.b16 %v3769
      %v3838 = vunpack.c.l.b16 %v3770
      %v3839 = vunpack.c.l.b16 %v3771
      %v3840 = vpack.c.b16 %v3825, %v3824
      %v3841 = vpack.c.b16 %v3827, %v3826
      %v3842 = vpack.c.b16 %v3829, %v3828
      %v3843 = vpack.c.b16 %v3831, %v3830
      %v3844 = vpack.c.b16 %v3833, %v3832
      %v3845 = vpack.c.b16 %v3835, %v3834
      %v3846 = vpack.c.b16 %v3837, %v3836
      %v3847 = vpack.c.b16 %v3839, %v3838
      %3856 = vmatprep.subr.bf16.mxu0 0
      %3857 = vmatpush1.bf16.msra.mxu0 %v3840
      %3858 = vmatprep.subr.bf16.mxu0 0
      %3859 = vmatpush1.bf16.msra.mxu0 %v3841
      %3860 = vmatprep.subr.bf16.mxu0 0
      %3861 = vmatpush1.bf16.msra.mxu0 %v3842
      %3862 = vmatprep.subr.bf16.mxu0 0
      %3863 = vmatpush1.bf16.msra.mxu0 %v3843
      %3864 = vmatprep.subr.bf16.mxu0 0
      %3865 = vmatpush1.bf16.msra.mxu0 %v3844
      %3866 = vmatprep.subr.bf16.mxu0 0
      %3867 = vmatpush1.bf16.msra.mxu0 %v3845
      %3868 = vmatprep.subr.bf16.mxu0 0
      %3869 = vmatpush1.bf16.msra.mxu0 %v3846
      %3870 = vmatprep.subr.bf16.mxu0 0
      %3871 = vmatpush1.bf16.msra.mxu0 %v3847
      %3872 = vmatprep.subr.bf16.mxu0 0
      %3873 = vmatpush1.bf16.msra.mxu0 0
      %3874 = vmatprep.subr.bf16.mxu0 0
      %3875 = vmatpush1.bf16.msra.mxu0 0
      %3876 = vmatprep.subr.bf16.mxu0 0
      %3877 = vmatpush1.bf16.msra.mxu0 0
      %3878 = vmatprep.subr.bf16.mxu0 0
      %3879 = vmatpush1.bf16.msra.mxu0 0
      %3880 = vmatprep.subr.bf16.mxu0 0
      %3881 = vmatpush1.bf16.msra.mxu0 0
      %3882 = vmatprep.subr.bf16.mxu0 0
      %3883 = vmatpush1.bf16.msra.mxu0 0
      %3884 = vmatprep.subr.bf16.mxu0 0
      %3885 = vmatpush1.bf16.msra.mxu0 0
      %3886 = vmatprep.subr.bf16.mxu0 0
      %3887 = vmatpush1.bf16.msra.mxu0 0
      %3888 = vmatprep.mubr.bf16.mxu0 0
      %3889 = vmatmul.mubr.bf16.gmra.mrb[0].mxu0 %v3797
      %v3890 = vpop.f32.mrb[0].mxu0
      %v3891 = vadd.f32 0.0, %v3890
      %v3892 = vpop.f32.mrb[0].mxu0
      %v3893 = vpop.f32.mrb[0].mxu0
      %v3894 = vadd.f32 0.0, %v3893
      %v3895 = vpop.f32.mrb[0].mxu0
      %3896 = vmatprep.mubr.bf16.mxu0 0
      %3897 = vmatmul.mubr.bf16.gmra.mrb[0].mxu0 %v3799
      %v3898 = vpop.f32.mrb[0].mxu0
      %v3899 = vadd.f32 0.0, %v3898
      %v3900 = vpop.f32.mrb[0].mxu0
      %v3901 = vpop.f32.mrb[0].mxu0
      %v3902 = vadd.f32 0.0, %v3901
      %v3903 = vpop.f32.mrb[0].mxu0
      %3904 = vmatprep.mubr.bf16.mxu0 0
      %3905 = vmatmul.mubr.bf16.gmra.mrb[0].mxu0 %v3801
      %v3906 = vpop.f32.mrb[0].mxu0
      %v3907 = vadd.f32 0.0, %v3906
      %v3908 = vpop.f32.mrb[0].mxu0
      %v3909 = vpop.f32.mrb[0].mxu0
      %v3910 = vadd.f32 0.0, %v3909
      %v3911 = vpop.f32.mrb[0].mxu0
      %3912 = vmatprep.mubr.bf16.mxu0 0
      %3913 = vmatmul.mubr.bf16.gmra.mrb[0].mxu0 %v3803
      %v3914 = vpop.f32.mrb[0].mxu0
      %v3915 = vadd.f32 0.0, %v3914
      %v3916 = vpop.f32.mrb[0].mxu0
      %v3917 = vpop.f32.mrb[0].mxu0
      %v3918 = vadd.f32 0.0, %v3917
      %v3919 = vpop.f32.mrb[0].mxu0
      %3920 = vdwg.mxu0
      %v3921 = vadd.f32 %v3738, %v3891
      %v3922 = vadd.f32 %v3739, %v3894
      %v3923 = vadd.f32 %v3740, %v3899
      %v3924 = vadd.f32 %v3741, %v3902
      %v3925 = vadd.f32 %v3742, %v3907
      %v3926 = vadd.f32 %v3743, %v3910
      %v3927 = vadd.f32 %v3744, %v3915
      %v3928 = vadd.f32 %v3745, %v3918
      %v3929 = vld [vmem:[%s2975 + $0x4] sm:$0xc]
      %s3930 = scalar_lea.vmem %s4, 320
      %v3931 = vld [vmem:[%s3930] sm:$0xf]
      %v3932 = vld [vmem:[%s3930 + $0x4] sm:$0xf]
      %v3933 = vld [vmem:[%s3930 + $0x8] sm:$0xf]
      %v3934 = vld [vmem:[%s3930 + $0xc] sm:$0xf]
      %v3935 = vld [vmem:[%s3930 + $0x10] sm:$0xf]
      %v3936 = vld [vmem:[%s3930 + $0x14] sm:$0xf]
      %v3937 = vld [vmem:[%s3930 + $0x18] sm:$0xf]
      %v3938 = vld [vmem:[%s3930 + $0x1c] sm:$0xf]
      %v3939 = vld [vmem:[%s3930 + $0x20] sm:$0xf]
      %v3940 = vld [vmem:[%s3930 + $0x24] sm:$0xf]
      %v3941 = vld [vmem:[%s3930 + $0x28] sm:$0xf]
      %v3942 = vld [vmem:[%s3930 + $0x2c] sm:$0xf]
      %v3943 = vld [vmem:[%s3930 + $0x30] sm:$0xf]
      %v3944 = vld [vmem:[%s3930 + $0x34] sm:$0xf]
      %v3945 = vld [vmem:[%s3930 + $0x38] sm:$0xf]
      %v3946 = vld [vmem:[%s3930 + $0x3c] sm:$0xf]
      %v3948 = vunpack.c.l.b16 %v3929
      %v3949 = vpack.c.b16 %v3564, %v3948
      %v3950 = vrot.slane %v3949, 2
      %v3951 = vrot.slane %v3573, 2
      %v3952 = vsel %vm3061, %v3950, %v3951
      %v3953 = vrot.slane %v3574, 2
      %v3954 = vsel %vm3061, %v3951, %v3953
      %v3955 = vrot.slane %v3575, 2
      %v3956 = vsel %vm3061, %v3953, %v3955
      %v3957 = vrot.slane %v3576, 2
      %v3958 = vsel %vm3061, %v3955, %v3957
      %v3979 = vunpack.c.l.b16 %v3931
      %v3980 = vunpack.c.l.b16 %v3932
      %v3981 = vunpack.c.l.b16 %v3933
      %v3982 = vunpack.c.l.b16 %v3934
      %v3983 = vunpack.c.l.b16 %v3935
      %v3984 = vunpack.c.l.b16 %v3936
      %v3985 = vunpack.c.l.b16 %v3937
      %v3986 = vunpack.c.l.b16 %v3938
      %v3987 = vunpack.c.l.b16 %v3939
      %v3988 = vunpack.c.l.b16 %v3940
      %v3989 = vunpack.c.l.b16 %v3941
      %v3990 = vunpack.c.l.b16 %v3942
      %v3991 = vunpack.c.l.b16 %v3943
      %v3992 = vunpack.c.l.b16 %v3944
      %v3993 = vunpack.c.l.b16 %v3945
      %v3994 = vunpack.c.l.b16 %v3946
      %v3995 = vpack.c.b16 %v3980, %v3979
      %v3996 = vpack.c.b16 %v3982, %v3981
      %v3997 = vpack.c.b16 %v3984, %v3983
      %v3998 = vpack.c.b16 %v3986, %v3985
      %v3999 = vpack.c.b16 %v3988, %v3987
      %v4000 = vpack.c.b16 %v3990, %v3989
      %v4001 = vpack.c.b16 %v3992, %v3991
      %v4002 = vpack.c.b16 %v3994, %v3993
      %4011 = vmatprep.subr.bf16.mxu0 0
      %4012 = vmatpush1.bf16.msra.mxu0 %v3995
      %4013 = vmatprep.subr.bf16.mxu0 0
      %4014 = vmatpush1.bf16.msra.mxu0 %v3996
      %4015 = vmatprep.subr.bf16.mxu0 0
      %4016 = vmatpush1.bf16.msra.mxu0 %v3997
      %4017 = vmatprep.subr.bf16.mxu0 0
      %4018 = vmatpush1.bf16.msra.mxu0 %v3998
      %4019 = vmatprep.subr.bf16.mxu0 0
      %4020 = vmatpush1.bf16.msra.mxu0 %v3999
      %4021 = vmatprep.subr.bf16.mxu0 0
      %4022 = vmatpush1.bf16.msra.mxu0 %v4000
      %4023 = vmatprep.subr.bf16.mxu0 0
      %4024 = vmatpush1.bf16.msra.mxu0 %v4001
      %4025 = vmatprep.subr.bf16.mxu0 0
      %4026 = vmatpush1.bf16.msra.mxu0 %v4002
      %4027 = vmatprep.subr.bf16.mxu0 0
      %4028 = vmatpush1.bf16.msra.mxu0 0
      %4029 = vmatprep.subr.bf16.mxu0 0
      %4030 = vmatpush1.bf16.msra.mxu0 0
      %4031 = vmatprep.subr.bf16.mxu0 0
      %4032 = vmatpush1.bf16.msra.mxu0 0
      %4033 = vmatprep.subr.bf16.mxu0 0
      %4034 = vmatpush1.bf16.msra.mxu0 0
      %4035 = vmatprep.subr.bf16.mxu0 0
      %4036 = vmatpush1.bf16.msra.mxu0 0
      %4037 = vmatprep.subr.bf16.mxu0 0
      %4038 = vmatpush1.bf16.msra.mxu0 0
      %4039 = vmatprep.subr.bf16.mxu0 0
      %4040 = vmatpush1.bf16.msra.mxu0 0
      %4041 = vmatprep.subr.bf16.mxu0 0
      %4042 = vmatpush1.bf16.msra.mxu0 0
      %4043 = vmatprep.mubr.bf16.mxu0 0
      %4044 = vmatmul.mubr.bf16.gmra.mrb[0].mxu0 %v3952
      %v4045 = vpop.f32.mrb[0].mxu0
      %v4046 = vadd.f32 0.0, %v4045
      %v4047 = vpop.f32.mrb[0].mxu0
      %v4048 = vpop.f32.mrb[0].mxu0
      %v4049 = vadd.f32 0.0, %v4048
      %v4050 = vpop.f32.mrb[0].mxu0
      %4051 = vmatprep.mubr.bf16.mxu0 0
      %4052 = vmatmul.mubr.bf16.gmra.mrb[0].mxu0 %v3954
      %v4053 = vpop.f32.mrb[0].mxu0
      %v4054 = vadd.f32 0.0, %v4053
      %v4055 = vpop.f32.mrb[0].mxu0
      %v4056 = vpop.f32.mrb[0].mxu0
      %v4057 = vadd.f32 0.0, %v4056
      %v4058 = vpop.f32.mrb[0].mxu0
      %4059 = vmatprep.mubr.bf16.mxu0 0
      %4060 = vmatmul.mubr.bf16.gmra.mrb[0].mxu0 %v3956
      %v4061 = vpop.f32.mrb[0].mxu0
      %v4062 = vadd.f32 0.0, %v4061
      %v4063 = vpop.f32.mrb[0].mxu0
      %v4064 = vpop.f32.mrb[0].mxu0
      %v4065 = vadd.f32 0.0, %v4064
      %v4066 = vpop.f32.mrb[0].mxu0
      %4067 = vmatprep.mubr.bf16.mxu0 0
      %4068 = vmatmul.mubr.bf16.gmra.mrb[0].mxu0 %v3958
      %v4069 = vpop.f32.mrb[0].mxu0
      %v4070 = vadd.f32 0.0, %v4069
      %v4071 = vpop.f32.mrb[0].mxu0
      %v4072 = vpop.f32.mrb[0].mxu0
      %v4073 = vadd.f32 0.0, %v4072
      %v4074 = vpop.f32.mrb[0].mxu0
      %4075 = vdwg.mxu0
      %v4076 = vadd.f32 %v3921, %v4046
      %v4077 = vadd.f32 %v3922, %v4049
      %v4078 = vadd.f32 %v3923, %v4054
      %v4079 = vadd.f32 %v3924, %v4057
      %v4080 = vadd.f32 %v3925, %v4062
      %v4081 = vadd.f32 %v3926, %v4065
      %v4082 = vadd.f32 %v3927, %v4070
      %v4083 = vadd.f32 %v3928, %v4073
      %v4084 = vld [vmem:[%s2975 + $0x8] sm:$0xe]
      %v4085 = vld [vmem:[%s2975 + $0xc] sm:$0xf]
      %v4086 = vld [vmem:[%s2975 + $0x10] sm:$0xf]
      %v4087 = vld [vmem:[%s2975 + $0x14] sm:$0xf]
      %v4088 = vld [vmem:[%s2975 + $0x18] sm:$0xf]
      %v4089 = vld [vmem:[%s2975 + $0x1c] sm:$0xf]
      %v4090 = vld [vmem:[%s2975 + $0x20] sm:$0xf]
      %v4091 = vld [vmem:[%s2975 + $0x24] sm:$0xf]
      %v4092 = vld [vmem:[%s2975 + $0x28] sm:$0x3]
      %s4093 = scalar_lea.vmem %s4, 384
      %v4094 = vld [vmem:[%s4093] sm:$0xf]
      %v4095 = vld [vmem:[%s4093 + $0x4] sm:$0xf]
      %v4096 = vld [vmem:[%s4093 + $0x8] sm:$0xf]
      %v4097 = vld [vmem:[%s4093 + $0xc] sm:$0xf]
      %v4098 = vld [vmem:[%s4093 + $0x10] sm:$0xf]
      %v4099 = vld [vmem:[%s4093 + $0x14] sm:$0xf]
      %v4100 = vld [vmem:[%s4093 + $0x18] sm:$0xf]
      %v4101 = vld [vmem:[%s4093 + $0x1c] sm:$0xf]
      %v4102 = vld [vmem:[%s4093 + $0x20] sm:$0xf]
      %v4103 = vld [vmem:[%s4093 + $0x24] sm:$0xf]
      %v4104 = vld [vmem:[%s4093 + $0x28] sm:$0xf]
      %v4105 = vld [vmem:[%s4093 + $0x2c] sm:$0xf]
      %v4106 = vld [vmem:[%s4093 + $0x30] sm:$0xf]
      %v4107 = vld [vmem:[%s4093 + $0x34] sm:$0xf]
      %v4108 = vld [vmem:[%s4093 + $0x38] sm:$0xf]
      %v4109 = vld [vmem:[%s4093 + $0x3c] sm:$0xf]
      %v4119 = vunpack.c.l.b16 %v4084
      %v4120 = vunpack.c.l.b16 %v4085
      %v4121 = vunpack.c.l.b16 %v4086
      %v4122 = vunpack.c.l.b16 %v4087
      %v4123 = vunpack.c.l.b16 %v4088
      %v4124 = vunpack.c.l.b16 %v4089
      %v4125 = vunpack.c.l.b16 %v4090
      %v4126 = vunpack.c.l.b16 %v4091
      %v4127 = vunpack.c.l.b16 %v4092
      %v4128 = vpack.c.b16 %v4120, %v4119
      %v4129 = vpack.c.b16 %v4122, %v4121
      %v4130 = vpack.c.b16 %v4124, %v4123
      %v4131 = vpack.c.b16 %v4126, %v4125
      %v4132 = vpack.c.b16 %v4127, %v4127
      %v4134 = vshrl.u32 %v4128, 16
      %v4136 = vrot.slane %v4134, 1
      %v4137 = vshll.u32 %v4128, 16
      %v4139 = vrot.slane %v4137, 2
      %v4140 = vor.u32 %v4136, %v4139
      %v4142 = vshrl.u32 %v4129, 16
      %v4144 = vrot.slane %v4142, 1
      %v4145 = vshll.u32 %v4129, 16
      %v4147 = vrot.slane %v4145, 2
      %v4148 = vor.u32 %v4144, %v4147
      %v4149 = vsel %vm3211, %v4140, %v4148
      %v4151 = vshrl.u32 %v4130, 16
      %v4153 = vrot.slane %v4151, 1
      %v4154 = vshll.u32 %v4130, 16
      %v4156 = vrot.slane %v4154, 2
      %v4157 = vor.u32 %v4153, %v4156
      %v4158 = vsel %vm3211, %v4148, %v4157
      %v4160 = vshrl.u32 %v4131, 16
      %v4162 = vrot.slane %v4160, 1
      %v4163 = vshll.u32 %v4131, 16
      %v4165 = vrot.slane %v4163, 2
      %v4166 = vor.u32 %v4162, %v4165
      %v4167 = vsel %vm3211, %v4157, %v4166
      %v4169 = vshrl.u32 %v4132, 16
      %v4171 = vrot.slane %v4169, 1
      %v4172 = vshll.u32 %v4132, 16
      %v4174 = vrot.slane %v4172, 2
      %v4175 = vor.u32 %v4171, %v4174
      %v4176 = vsel %vm3211, %v4166, %v4175
      %v4197 = vunpack.c.l.b16 %v4094
      %v4198 = vunpack.c.l.b16 %v4095
      %v4199 = vunpack.c.l.b16 %v4096
      %v4200 = vunpack.c.l.b16 %v4097
      %v4201 = vunpack.c.l.b16 %v4098
      %v4202 = vunpack.c.l.b16 %v4099
      %v4203 = vunpack.c.l.b16 %v4100
      %v4204 = vunpack.c.l.b16 %v4101
      %v4205 = vunpack.c.l.b16 %v4102
      %v4206 = vunpack.c.l.b16 %v4103
      %v4207 = vunpack.c.l.b16 %v4104
      %v4208 = vunpack.c.l.b16 %v4105
      %v4209 = vunpack.c.l.b16 %v4106
      %v4210 = vunpack.c.l.b16 %v4107
      %v4211 = vunpack.c.l.b16 %v4108
      %v4212 = vunpack.c.l.b16 %v4109
      %v4213 = vpack.c.b16 %v4198, %v4197
      %v4214 = vpack.c.b16 %v4200, %v4199
      %v4215 = vpack.c.b16 %v4202, %v4201
      %v4216 = vpack.c.b16 %v4204, %v4203
      %v4217 = vpack.c.b16 %v4206, %v4205
      %v4218 = vpack.c.b16 %v4208, %v4207
      %v4219 = vpack.c.b16 %v4210, %v4209
      %v4220 = vpack.c.b16 %v4212, %v4211
      %4229 = vmatprep.subr.bf16.mxu0 0
      %4230 = vmatpush1.bf16.msra.mxu0 %v4213
      %4231 = vmatprep.subr.bf16.mxu0 0
      %4232 = vmatpush1.bf16.msra.mxu0 %v4214
      %4233 = vmatprep.subr.bf16.mxu0 0
      %4234 = vmatpush1.bf16.msra.mxu0 %v4215
      %4235 = vmatprep.subr.bf16.mxu0 0
      %4236 = vmatpush1.bf16.msra.mxu0 %v4216
      %4237 = vmatprep.subr.bf16.mxu0 0
      %4238 = vmatpush1.bf16.msra.mxu0 %v4217
      %4239 = vmatprep.subr.bf16.mxu0 0
      %4240 = vmatpush1.bf16.msra.mxu0 %v4218
      %4241 = vmatprep.subr.bf16.mxu0 0
      %4242 = vmatpush1.bf16.msra.mxu0 %v4219
      %4243 = vmatprep.subr.bf16.mxu0 0
      %4244 = vmatpush1.bf16.msra.mxu0 %v4220
      %4245 = vmatprep.subr.bf16.mxu0 0
      %4246 = vmatpush1.bf16.msra.mxu0 0
      %4247 = vmatprep.subr.bf16.mxu0 0
      %4248 = vmatpush1.bf16.msra.mxu0 0
      %4249 = vmatprep.subr.bf16.mxu0 0
      %4250 = vmatpush1.bf16.msra.mxu0 0
      %4251 = vmatprep.subr.bf16.mxu0 0
      %4252 = vmatpush1.bf16.msra.mxu0 0
      %4253 = vmatprep.subr.bf16.mxu0 0
      %4254 = vmatpush1.bf16.msra.mxu0 0
      %4255 = vmatprep.subr.bf16.mxu0 0
      %4256 = vmatpush1.bf16.msra.mxu0 0
      %4257 = vmatprep.subr.bf16.mxu0 0
      %4258 = vmatpush1.bf16.msra.mxu0 0
      %4259 = vmatprep.subr.bf16.mxu0 0
      %4260 = vmatpush1.bf16.msra.mxu0 0
      %4261 = vmatprep.mubr.bf16.mxu0 0
      %4262 = vmatmul.mubr.bf16.gmra.mrb[0].mxu0 %v4149
      %v4263 = vpop.f32.mrb[0].mxu0
      %v4264 = vadd.f32 0.0, %v4263
      %v4265 = vpop.f32.mrb[0].mxu0
      %v4266 = vpop.f32.mrb[0].mxu0
      %v4267 = vadd.f32 0.0, %v4266
      %v4268 = vpop.f32.mrb[0].mxu0
      %4269 = vmatprep.mubr.bf16.mxu0 0
      %4270 = vmatmul.mubr.bf16.gmra.mrb[0].mxu0 %v4158
      %v4271 = vpop.f32.mrb[0].mxu0
      %v4272 = vadd.f32 0.0, %v4271
      %v4273 = vpop.f32.mrb[0].mxu0
      %v4274 = vpop.f32.mrb[0].mxu0
      %v4275 = vadd.f32 0.0, %v4274
      %v4276 = vpop.f32.mrb[0].mxu0
      %4277 = vmatprep.mubr.bf16.mxu0 0
      %4278 = vmatmul.mubr.bf16.gmra.mrb[0].mxu0 %v4167
      %v4279 = vpop.f32.mrb[0].mxu0
      %v4280 = vadd.f32 0.0, %v4279
      %v4281 = vpop.f32.mrb[0].mxu0
      %v4282 = vpop.f32.mrb[0].mxu0
      %v4283 = vadd.f32 0.0, %v4282
      %v4284 = vpop.f32.mrb[0].mxu0
      %4285 = vmatprep.mubr.bf16.mxu0 0
      %4286 = vmatmul.mubr.bf16.gmra.mrb[0].mxu0 %v4176
      %v4287 = vpop.f32.mrb[0].mxu0
      %v4288 = vadd.f32 0.0, %v4287
      %v4289 = vpop.f32.mrb[0].mxu0
      %v4290 = vpop.f32.mrb[0].mxu0
      %v4291 = vadd.f32 0.0, %v4290
      %v4292 = vpop.f32.mrb[0].mxu0
      %4293 = vdwg.mxu0
      %v4294 = vadd.f32 %v4076, %v4264
      %v4295 = vadd.f32 %v4077, %v4267
      %v4296 = vadd.f32 %v4078, %v4272
      %v4297 = vadd.f32 %v4079, %v4275
      %v4298 = vadd.f32 %v4080, %v4280
      %v4299 = vadd.f32 %v4081, %v4283
      %v4300 = vadd.f32 %v4082, %v4288
      %v4301 = vadd.f32 %v4083, %v4291
      %v4302 = vld [vmem:[#allocation3 + $0x8] sm:$0xc]
      %v4303 = vld [vmem:[#allocation3 + $0xc] sm:$0xf]
      %v4304 = vld [vmem:[#allocation3 + $0x10] sm:$0xf]
      %v4305 = vld [vmem:[#allocation3 + $0x14] sm:$0xf]
      %v4306 = vld [vmem:[#allocation3 + $0x18] sm:$0xf]
      %v4307 = vld [vmem:[#allocation3 + $0x1c] sm:$0xf]
      %v4308 = vld [vmem:[#allocation3 + $0x20] sm:$0xf]
      %v4309 = vld [vmem:[#allocation3 + $0x24] sm:$0xf]
      %v4310 = vld [vmem:[#allocation3 + $0x28] sm:$0x3]
      %s4311 = scalar_lea.vmem %s4, 448
      %v4312 = vld [vmem:[%s4311] sm:$0xf]
      %v4313 = vld [vmem:[%s4311 + $0x4] sm:$0xf]
      %v4314 = vld [vmem:[%s4311 + $0x8] sm:$0xf]
      %v4315 = vld [vmem:[%s4311 + $0xc] sm:$0xf]
      %v4316 = vld [vmem:[%s4311 + $0x10] sm:$0xf]
      %v4317 = vld [vmem:[%s4311 + $0x14] sm:$0xf]
      %v4318 = vld [vmem:[%s4311 + $0x18] sm:$0xf]
      %v4319 = vld [vmem:[%s4311 + $0x1c] sm:$0xf]
      %v4320 = vld [vmem:[%s4311 + $0x20] sm:$0xf]
      %v4321 = vld [vmem:[%s4311 + $0x24] sm:$0xf]
      %v4322 = vld [vmem:[%s4311 + $0x28] sm:$0xf]
      %v4323 = vld [vmem:[%s4311 + $0x2c] sm:$0xf]
      %v4324 = vld [vmem:[%s4311 + $0x30] sm:$0xf]
      %v4325 = vld [vmem:[%s4311 + $0x34] sm:$0xf]
      %v4326 = vld [vmem:[%s4311 + $0x38] sm:$0xf]
      %v4327 = vld [vmem:[%s4311 + $0x3c] sm:$0xf]
      %v4337 = vunpack.c.l.b16 %v4302
      %v4338 = vunpack.c.l.b16 %v4303
      %v4339 = vunpack.c.l.b16 %v4304
      %v4340 = vunpack.c.l.b16 %v4305
      %v4341 = vunpack.c.l.b16 %v4306
      %v4342 = vunpack.c.l.b16 %v4307
      %v4343 = vunpack.c.l.b16 %v4308
      %v4344 = vunpack.c.l.b16 %v4309
      %v4345 = vunpack.c.l.b16 %v4310
      %v4346 = vpack.c.b16 %v4338, %v4337
      %v4347 = vpack.c.b16 %v4340, %v4339
      %v4348 = vpack.c.b16 %v4342, %v4341
      %v4349 = vpack.c.b16 %v4344, %v4343
      %v4350 = vpack.c.b16 %v4345, %v4345
      %v4351 = vrot.slane %v4346, 2
      %v4352 = vrot.slane %v4347, 2
      %v4353 = vsel %vm3061, %v4351, %v4352
      %v4354 = vrot.slane %v4348, 2
      %v4355 = vsel %vm3061, %v4352, %v4354
      %v4356 = vrot.slane %v4349, 2
      %v4357 = vsel %vm3061, %v4354, %v4356
      %v4358 = vrot.slane %v4350, 2
      %v4359 = vsel %vm3061, %v4356, %v4358
      %v4380 = vunpack.c.l.b16 %v4312
      %v4381 = vunpack.c.l.b16 %v4313
      %v4382 = vunpack.c.l.b16 %v4314
      %v4383 = vunpack.c.l.b16 %v4315
      %v4384 = vunpack.c.l.b16 %v4316
      %v4385 = vunpack.c.l.b16 %v4317
      %v4386 = vunpack.c.l.b16 %v4318
      %v4387 = vunpack.c.l.b16 %v4319
      %v4388 = vunpack.c.l.b16 %v4320
      %v4389 = vunpack.c.l.b16 %v4321
      %v4390 = vunpack.c.l.b16 %v4322
      %v4391 = vunpack.c.l.b16 %v4323
      %v4392 = vunpack.c.l.b16 %v4324
      %v4393 = vunpack.c.l.b16 %v4325
      %v4394 = vunpack.c.l.b16 %v4326
      %v4395 = vunpack.c.l.b16 %v4327
      %v4396 = vpack.c.b16 %v4381, %v4380
      %v4397 = vpack.c.b16 %v4383, %v4382
      %v4398 = vpack.c.b16 %v4385, %v4384
      %v4399 = vpack.c.b16 %v4387, %v4386
      %v4400 = vpack.c.b16 %v4389, %v4388
      %v4401 = vpack.c.b16 %v4391, %v4390
      %v4402 = vpack.c.b16 %v4393, %v4392
      %v4403 = vpack.c.b16 %v4395, %v4394
      %4412 = vmatprep.subr.bf16.mxu0 0
      %4413 = vmatpush1.bf16.msra.mxu0 %v4396
      %4414 = vmatprep.subr.bf16.mxu0 0
      %4415 = vmatpush1.bf16.msra.mxu0 %v4397
      %4416 = vmatprep.subr.bf16.mxu0 0
      %4417 = vmatpush1.bf16.msra.mxu0 %v4398
      %4418 = vmatprep.subr.bf16.mxu0 0
      %4419 = vmatpush1.bf16.msra.mxu0 %v4399
      %4420 = vmatprep.subr.bf16.mxu0 0
      %4421 = vmatpush1.bf16.msra.mxu0 %v4400
      %4422 = vmatprep.subr.bf16.mxu0 0
      %4423 = vmatpush1.bf16.msra.mxu0 %v4401
      %4424 = vmatprep.subr.bf16.mxu0 0
      %4425 = vmatpush1.bf16.msra.mxu0 %v4402
      %4426 = vmatprep.subr.bf16.mxu0 0
      %4427 = vmatpush1.bf16.msra.mxu0 %v4403
      %4428 = vmatprep.subr.bf16.mxu0 0
      %4429 = vmatpush1.bf16.msra.mxu0 0
      %4430 = vmatprep.subr.bf16.mxu0 0
      %4431 = vmatpush1.bf16.msra.mxu0 0
      %4432 = vmatprep.subr.bf16.mxu0 0
      %4433 = vmatpush1.bf16.msra.mxu0 0
      %4434 = vmatprep.subr.bf16.mxu0 0
      %4435 = vmatpush1.bf16.msra.mxu0 0
      %4436 = vmatprep.subr.bf16.mxu0 0
      %4437 = vmatpush1.bf16.msra.mxu0 0
      %4438 = vmatprep.subr.bf16.mxu0 0
      %4439 = vmatpush1.bf16.msra.mxu0 0
      %4440 = vmatprep.subr.bf16.mxu0 0
      %4441 = vmatpush1.bf16.msra.mxu0 0
      %4442 = vmatprep.subr.bf16.mxu0 0
      %4443 = vmatpush1.bf16.msra.mxu0 0
      %4444 = vmatprep.mubr.bf16.mxu0 0
      %4445 = vmatmul.mubr.bf16.gmra.mrb[0].mxu0 %v4353
      %v4446 = vpop.f32.mrb[0].mxu0
      %v4447 = vadd.f32 0.0, %v4446
      %v4448 = vpop.f32.mrb[0].mxu0
      %v4449 = vpop.f32.mrb[0].mxu0
      %v4450 = vadd.f32 0.0, %v4449
      %v4451 = vpop.f32.mrb[0].mxu0
      %4452 = vmatprep.mubr.bf16.mxu0 0
      %4453 = vmatmul.mubr.bf16.gmra.mrb[0].mxu0 %v4355
      %v4454 = vpop.f32.mrb[0].mxu0
      %v4455 = vadd.f32 0.0, %v4454
      %v4456 = vpop.f32.mrb[0].mxu0
      %v4457 = vpop.f32.mrb[0].mxu0
      %v4458 = vadd.f32 0.0, %v4457
      %v4459 = vpop.f32.mrb[0].mxu0
      %4460 = vmatprep.mubr.bf16.mxu0 0
      %4461 = vmatmul.mubr.bf16.gmra.mrb[0].mxu0 %v4357
      %v4462 = vpop.f32.mrb[0].mxu0
      %v4463 = vadd.f32 0.0, %v4462
      %v4464 = vpop.f32.mrb[0].mxu0
      %v4465 = vpop.f32.mrb[0].mxu0
      %v4466 = vadd.f32 0.0, %v4465
      %v4467 = vpop.f32.mrb[0].mxu0
      %4468 = vmatprep.mubr.bf16.mxu0 0
      %4469 = vmatmul.mubr.bf16.gmra.mrb[0].mxu0 %v4359
      %v4470 = vpop.f32.mrb[0].mxu0
      %v4471 = vadd.f32 0.0, %v4470
      %v4472 = vpop.f32.mrb[0].mxu0
      %v4473 = vpop.f32.mrb[0].mxu0
      %v4474 = vadd.f32 0.0, %v4473
      %v4475 = vpop.f32.mrb[0].mxu0
      %4476 = vdwg.mxu0
      %v4477 = vadd.f32 %v4294, %v4447
      %v4478 = vadd.f32 %v4295, %v4450
      %v4479 = vadd.f32 %v4296, %v4455
      %v4480 = vadd.f32 %v4297, %v4458
      %v4481 = vadd.f32 %v4298, %v4463
      %v4482 = vadd.f32 %v4299, %v4466
      %v4483 = vadd.f32 %v4300, %v4471
      %v4484 = vadd.f32 %v4301, %v4474
      %v4485 = vld [vmem:[%s2975 + $0x8] sm:$0xc]
      %s4486 = scalar_lea.vmem %s4, 512
      %v4487 = vld [vmem:[%s4486] sm:$0xf]
      %v4488 = vld [vmem:[%s4486 + $0x4] sm:$0xf]
      %v4489 = vld [vmem:[%s4486 + $0x8] sm:$0xf]
      %v4490 = vld [vmem:[%s4486 + $0xc] sm:$0xf]
      %v4491 = vld [vmem:[%s4486 + $0x10] sm:$0xf]
      %v4492 = vld [vmem:[%s4486 + $0x14] sm:$0xf]
      %v4493 = vld [vmem:[%s4486 + $0x18] sm:$0xf]
      %v4494 = vld [vmem:[%s4486 + $0x1c] sm:$0xf]
      %v4495 = vld [vmem:[%s4486 + $0x20] sm:$0xf]
      %v4496 = vld [vmem:[%s4486 + $0x24] sm:$0xf]
      %v4497 = vld [vmem:[%s4486 + $0x28] sm:$0xf]
      %v4498 = vld [vmem:[%s4486 + $0x2c] sm:$0xf]
      %v4499 = vld [vmem:[%s4486 + $0x30] sm:$0xf]
      %v4500 = vld [vmem:[%s4486 + $0x34] sm:$0xf]
      %v4501 = vld [vmem:[%s4486 + $0x38] sm:$0xf]
      %v4502 = vld [vmem:[%s4486 + $0x3c] sm:$0xf]
      %v4504 = vunpack.c.l.b16 %v4485
      %v4505 = vpack.c.b16 %v4120, %v4504
      %v4506 = vrot.slane %v4505, 2
      %v4507 = vrot.slane %v4129, 2
      %v4508 = vsel %vm3061, %v4506, %v4507
      %v4509 = vrot.slane %v4130, 2
      %v4510 = vsel %vm3061, %v4507, %v4509
      %v4511 = vrot.slane %v4131, 2
      %v4512 = vsel %vm3061, %v4509, %v4511
      %v4513 = vrot.slane %v4132, 2
      %v4514 = vsel %vm3061, %v4511, %v4513
      %v4535 = vunpack.c.l.b16 %v4487
      %v4536 = vunpack.c.l.b16 %v4488
      %v4537 = vunpack.c.l.b16 %v4489
      %v4538 = vunpack.c.l.b16 %v4490
      %v4539 = vunpack.c.l.b16 %v4491
      %v4540 = vunpack.c.l.b16 %v4492
      %v4541 = vunpack.c.l.b16 %v4493
      %v4542 = vunpack.c.l.b16 %v4494
      %v4543 = vunpack.c.l.b16 %v4495
      %v4544 = vunpack.c.l.b16 %v4496
      %v4545 = vunpack.c.l.b16 %v4497
      %v4546 = vunpack.c.l.b16 %v4498
      %v4547 = vunpack.c.l.b16 %v4499
      %v4548 = vunpack.c.l.b16 %v4500
      %v4549 = vunpack.c.l.b16 %v4501
      %v4550 = vunpack.c.l.b16 %v4502
      %v4551 = vpack.c.b16 %v4536, %v4535
      %v4552 = vpack.c.b16 %v4538, %v4537
      %v4553 = vpack.c.b16 %v4540, %v4539
      %v4554 = vpack.c.b16 %v4542, %v4541
      %v4555 = vpack.c.b16 %v4544, %v4543
      %v4556 = vpack.c.b16 %v4546, %v4545
      %v4557 = vpack.c.b16 %v4548, %v4547
      %v4558 = vpack.c.b16 %v4550, %v4549
      %4567 = vmatprep.subr.bf16.mxu0 0
      %4568 = vmatpush1.bf16.msra.mxu0 %v4551
      %4569 = vmatprep.subr.bf16.mxu0 0
      %4570 = vmatpush1.bf16.msra.mxu0 %v4552
      %4571 = vmatprep.subr.bf16.mxu0 0
      %4572 = vmatpush1.bf16.msra.mxu0 %v4553
      %4573 = vmatprep.subr.bf16.mxu0 0
      %4574 = vmatpush1.bf16.msra.mxu0 %v4554
      %4575 = vmatprep.subr.bf16.mxu0 0
      %4576 = vmatpush1.bf16.msra.mxu0 %v4555
      %4577 = vmatprep.subr.bf16.mxu0 0
      %4578 = vmatpush1.bf16.msra.mxu0 %v4556
      %4579 = vmatprep.subr.bf16.mxu0 0
      %4580 = vmatpush1.bf16.msra.mxu0 %v4557
      %4581 = vmatprep.subr.bf16.mxu0 0
      %4582 = vmatpush1.bf16.msra.mxu0 %v4558
      %4583 = vmatprep.subr.bf16.mxu0 0
      %4584 = vmatpush1.bf16.msra.mxu0 0
      %4585 = vmatprep.subr.bf16.mxu0 0
      %4586 = vmatpush1.bf16.msra.mxu0 0
      %4587 = vmatprep.subr.bf16.mxu0 0
      %4588 = vmatpush1.bf16.msra.mxu0 0
      %4589 = vmatprep.subr.bf16.mxu0 0
      %4590 = vmatpush1.bf16.msra.mxu0 0
      %4591 = vmatprep.subr.bf16.mxu0 0
      %4592 = vmatpush1.bf16.msra.mxu0 0
      %4593 = vmatprep.subr.bf16.mxu0 0
      %4594 = vmatpush1.bf16.msra.mxu0 0
      %4595 = vmatprep.subr.bf16.mxu0 0
      %4596 = vmatpush1.bf16.msra.mxu0 0
      %4597 = vmatprep.subr.bf16.mxu0 0
      %4598 = vmatpush1.bf16.msra.mxu0 0
      %4599 = vmatprep.mubr.bf16.mxu0 0
      %4600 = vmatmul.mubr.bf16.gmra.mrb[0].mxu0 %v4508
      %v4601 = vpop.f32.mrb[0].mxu0
      %v4602 = vadd.f32 0.0, %v4601
      %v4603 = vpop.f32.mrb[0].mxu0
      %v4604 = vpop.f32.mrb[0].mxu0
      %v4605 = vadd.f32 0.0, %v4604
      %v4606 = vpop.f32.mrb[0].mxu0
      %4607 = vmatprep.mubr.bf16.mxu0 0
      %4608 = vmatmul.mubr.bf16.gmra.mrb[0].mxu0 %v4510
      %v4609 = vpop.f32.mrb[0].mxu0
      %v4610 = vadd.f32 0.0, %v4609
      %v4611 = vpop.f32.mrb[0].mxu0
      %v4612 = vpop.f32.mrb[0].mxu0
      %v4613 = vadd.f32 0.0, %v4612
      %v4614 = vpop.f32.mrb[0].mxu0
      %4615 = vmatprep.mubr.bf16.mxu0 0
      %4616 = vmatmul.mubr.bf16.gmra.mrb[0].mxu0 %v4512
      %v4617 = vpop.f32.mrb[0].mxu0
      %v4618 = vadd.f32 0.0, %v4617
      %v4619 = vpop.f32.mrb[0].mxu0
      %v4620 = vpop.f32.mrb[0].mxu0
      %v4621 = vadd.f32 0.0, %v4620
      %v4622 = vpop.f32.mrb[0].mxu0
      %4623 = vmatprep.mubr.bf16.mxu0 0
      %4624 = vmatmul.mubr.bf16.gmra.mrb[0].mxu0 %v4514
      %v4625 = vpop.f32.mrb[0].mxu0
      %v4626 = vadd.f32 0.0, %v4625
      %v4627 = vpop.f32.mrb[0].mxu0
      %v4628 = vpop.f32.mrb[0].mxu0
      %v4629 = vadd.f32 0.0, %v4628
      %v4630 = vpop.f32.mrb[0].mxu0
      %4631 = vdwg.mxu0
      %v4632 = vadd.f32 %v4477, %v4602
      %v4633 = vadd.f32 %v4478, %v4605
      %v4634 = vadd.f32 %v4479, %v4610
      %v4635 = vadd.f32 %v4480, %v4613
      %v4636 = vadd.f32 %v4481, %v4618
      %v4637 = vadd.f32 %v4482, %v4621
      %v4638 = vadd.f32 %v4483, %v4626
      %v4639 = vadd.f32 %v4484, %v4629
      %v4640 = vld [vmem:[%s5] sm:$0x1]
      %v4642 = vlaneseq
      %v4643 = vshrl.u32 %v4642, 7
      %v4644 = vsub.s32 0, %v4643
      %v4645 = vrot.slane %v4640, %v4644
      %v4647 = vadd.f32 %v4632, %v4645
      %v4648 = vadd.f32 %v4633, %v4645
      %v4649 = vadd.f32 %v4634, %v4645
      %v4650 = vadd.f32 %v4635, %v4645
      %v4651 = vadd.f32 %v4636, %v4645
      %v4652 = vadd.f32 %v4637, %v4645
      %v4653 = vadd.f32 %v4638, %v4645
      %v4654 = vadd.f32 %v4639, %v4645
      %4655 = vst [vmem:[%s291] sm:$0xff] %v4647
      %4656 = vst [vmem:[%s291 + $0x8] sm:$0xff] %v4648
      %4657 = vst [vmem:[%s291 + $0x10] sm:$0xff] %v4649
      %4658 = vst [vmem:[%s291 + $0x18] sm:$0xff] %v4650
      %4659 = vst [vmem:[%s291 + $0x20] sm:$0xff] %v4651
      %4660 = vst [vmem:[%s291 + $0x28] sm:$0xff] %v4652
      %4661 = vst [vmem:[%s291 + $0x30] sm:$0xff] %v4653
      %4662 = vst [vmem:[%s291 + $0x38] sm:$0xff] %v4654
      %p4663 = scmp.lt.s32.totalorder %s19, 1
      %s4664 = scalar_select %p4663, %s19, 1
      %s4665 = smul.addr %s4664, 16
      %s4666 = smul.addr %s4665, 8
      %s4667 = scalar_lea.vmem %s6, %s4666
      %p4668 = scmp.lt.s32.totalorder %s19, 1
      %s4669 = scalar_select %p4668, %s19, 1
      %s4670 = smul.addr %s4669, 8
      %s4671 = smul.addr %s4670, 8
      %s4672 = scalar_lea.vmem %s7, %s4671
      // Predicated region
      $region45: #{_lambda_.1} parent=43 // pred_check
        %p4673 = pneg %p168
      $region46: #{_lambda_.1} parent=43 // pred_check_branch
        %4675 = sbr.rel (%p4673) target = $region48
      $region47: #{_lambda_.1} parent=43 // pred_region
        _
      $region48: #{_lambda_.1} parent=43 // pred_fallthru
        _
      // Predicated region
      $region49: #{_lambda_.1} parent=43 // pred_check
        %p4676 = pneg %p194
      $region50: #{_lambda_.1} parent=43 // pred_check_branch
        %4678 = sbr.rel (%p4676) target = $region52
      $region51: #{_lambda_.1} parent=43 // pred_region
        _
      $region52: #{_lambda_.1} parent=43 // pred_fallthru
        _
    $region44: #{_lambda_.1} parent=5 // pred_fallthru
      _
    %p4679 = scmp.le.s32.totalorder 2, %s14
    // Predicated region
    $region53: #{_lambda_.1} parent=5 // pred_check
      %p4680 = pneg %p4679
    $region54: #{_lambda_.1} parent=5 // pred_check_branch
      %4682 = sbr.rel (%p4680) target = $region56
    $region55: #{_lambda_.1} parent=5 // pred_region
      %s4683 = ssub.s32 %s14, 2
      // Predicated region
      $region57: #{_lambda_.1} parent=55 // pred_check
        %p4684 = pneg %p174
      $region58: #{_lambda_.1} parent=55 // pred_check_branch
        %4686 = sbr.rel (%p4684) target = $region60
      $region59: #{_lambda_.1} parent=55 // pred_region
        %p4687 = scmp.lt.s32.totalorder %s20, 1
        %s4688 = scalar_select %p4687, %s20, 1
        %s4689 = smul.addr %s4688, 16
        %s4690 = smul.addr %s4689, 8
        %s4691 = scalar_lea.vmem %s6, %s4690
      $region60: #{_lambda_.1} parent=55 // pred_fallthru
        _
      // Predicated region
      $region61: #{_lambda_.1} parent=55 // pred_check
        %p4692 = pneg %p200
      $region62: #{_lambda_.1} parent=55 // pred_check_branch
        %4694 = sbr.rel (%p4692) target = $region64
      $region63: #{_lambda_.1} parent=55 // pred_region
        %p4695 = scmp.lt.s32.totalorder %s20, 1
        %s4696 = scalar_select %p4695, %s20, 1
        %s4697 = smul.addr %s4696, 8
        %s4698 = smul.addr %s4697, 8
        %s4699 = scalar_lea.vmem %s7, %s4698
      $region64: #{_lambda_.1} parent=55 // pred_fallthru
        _
    $region56: #{_lambda_.1} parent=5 // pred_fallthru
      _
  $region6: #{_lambda_.1} parent=0 // loop_footer
    %s18 = sadd.s32 1, %s14
  $region7: #{_lambda_.1} parent=0 // loop_footer_branch
    %13 = sbr.rel target = $region3
  $region8: #{_lambda_.1} parent=0 // loop_exit
    _

</llo_original>
